<compile_context>
chip_gen: v7x
topology: tpu7x:2x2x1
jax: 0.10.0
libtpu: 0.0.40
codegen_flags: <defaults>
</compile_context>

<pallas_src>
import functools

import jax
import jax.numpy as jnp
from jax.experimental import pallas as pl
from jax.experimental.pallas import tpu as pltpu

_VMEM_LIMIT = 32 * 1024 * 1024  # explicit scoped-VMEM limit (safe on v5e/v6e/v7x)


def _row_tile(M, target=512):
    """Largest row tile <= target that divides M, preferring >= 2 grid steps."""
    best = None
    for t in (target, 512, 256, 128, 64, 32, 16, 8):
        if t <= M and M % t == 0:
            if M // t >= 2:
                return t
            if best is None:
                best = t
    return best if best is not None else M


# ----------------------------------------------------------------------------
# Kernel A: fused dual 1x1 conv (cv1 || cv2) + folded-BN + SiLU, tiled over M.
#   x: [TM, Cin], w1: [Cin, C1], w2: [Cin, C2] -> o1: [TM, C1], o2: [TM, C2]
# ----------------------------------------------------------------------------
def _stem_kernel(x_ref, w1_ref, s1_ref, b1_ref, w2_ref, s2_ref, b2_ref,
                 o1_ref, o2_ref):
    x = x_ref[...]
    y1 = jnp.dot(x, w1_ref[...], preferred_element_type=jnp.float32)
    y1 = y1 * s1_ref[...] + b1_ref[...]
    o1_ref[...] = (y1 * jax.nn.sigmoid(y1)).astype(o1_ref.dtype)
    y2 = jnp.dot(x, w2_ref[...], preferred_element_type=jnp.float32)
    y2 = y2 * s2_ref[...] + b2_ref[...]
    o2_ref[...] = (y2 * jax.nn.sigmoid(y2)).astype(o2_ref.dtype)


def stem_dual_pw(x_nhwc, cv1, cv2, compute_dtype):
    N, H, W, Cin = x_nhwc.shape
    w1, s1, b1 = cv1
    w2, s2, b2 = cv2
    C1, C2 = w1.shape[1], w2.shape[1]
    M = N * H * W
    TM = _row_tile(M)
    x2 = x_nhwc.reshape(M, Cin).astype(compute_dtype)
    o1, o2 = pl.pallas_call(
        _stem_kernel,
        out_shape=(jax.ShapeDtypeStruct((M, C1), compute_dtype),
                   jax.ShapeDtypeStruct((M, C2), compute_dtype)),
        grid=(pl.cdiv(M, TM),),
        in_specs=[
            pl.BlockSpec((TM, Cin), lambda i: (i, 0)),
            pl.BlockSpec((Cin, C1), lambda i: (0, 0)),
            pl.BlockSpec((1, C1), lambda i: (0, 0)),
            pl.BlockSpec((1, C1), lambda i: (0, 0)),
            pl.BlockSpec((Cin, C2), lambda i: (0, 0)),
            pl.BlockSpec((1, C2), lambda i: (0, 0)),
            pl.BlockSpec((1, C2), lambda i: (0, 0)),
        ],
        out_specs=(pl.BlockSpec((TM, C1), lambda i: (i, 0)),
                   pl.BlockSpec((TM, C2), lambda i: (i, 0))),
        compiler_params=pltpu.CompilerParams(
            dimension_semantics=("parallel",),
            vmem_limit_bytes=_VMEM_LIMIT),
    )(x2,
      w1.astype(compute_dtype), s1.reshape(1, C1), b1.reshape(1, C1),
      w2.astype(compute_dtype), s2.reshape(1, C2), b2.reshape(1, C2))
    return o1.reshape(N, H, W, C1), o2.reshape(N, H, W, C2)


# ----------------------------------------------------------------------------
# Kernel B: fused BottleNeck = 1x1 conv+BN+SiLU -> 3x3 conv+BN+SiLU (+residual)
#   Grid over batch N; the 1x1 output stays in VMEM (zero HBM round trip).
#   The 3x3 is done as a single im2col matmul with K = 9*Cm (one MXU drain).
# ----------------------------------------------------------------------------
def _bottleneck_kernel(x_ref, w1_ref, s1_ref, b1_ref, w2_ref, s2_ref, b2_ref,
                       o_ref, pad_ref, *, H, W, Cin, Cm, Cout, shortcut,
                       compute_dtype):
    x = x_ref[0].reshape(H * W, Cin)

    # 1x1 conv + folded BN + SiLU (f32 epilogue).
    t = jnp.dot(x, w1_ref[...], preferred_element_type=jnp.float32)
    t = t * s1_ref[...] + b1_ref[...]
    t = (t * jax.nn.sigmoid(t)).astype(compute_dtype)

    # Spatial zero-pad (stride 1, pad 1) in a VMEM scratch — no HBM pass.
    pad_ref[...] = jnp.zeros_like(pad_ref)
    pad_ref[1:H + 1, 1:W + 1, :] = t.reshape(H, W, Cm)

    # im2col: (H*W, 9*Cm) patches, single matmul against w2 (9*Cm, Cout).
    taps = [pad_ref[dy:dy + H, dx:dx + W, :].reshape(H * W, Cm)
            for dy in range(3) for dx in range(3)]
    patches = jnp.concatenate(taps, axis=1)
    y = jnp.dot(patches, w2_ref[...], preferred_element_type=jnp.float32)
    y = y * s2_ref[...] + b2_ref[...]
    y = y * jax.nn.sigmoid(y)
    if shortcut:                        # requires Cin == Cout (asserted in wrapper)
        y = y + x.astype(jnp.float32)
    o_ref[0] = y.reshape(H, W, Cout).astype(o_ref.dtype)


def bottleneck_fused(y_nhwc, cv1, cv2, shortcut, compute_dtype):
    N, H, W, Cin = y_nhwc.shape
    w1, s1, b1 = cv1                    # (Cin, Cm)
    w2, s2, b2 = cv2                    # (3, 3, Cm, Cout)
    Cm = w1.shape[1]
    Cout = w2.shape[-1]
    if shortcut:
        assert Cin == Cout, "shortcut residual requires ch_in == ch_out"
    kernel = functools.partial(
        _bottleneck_kernel, H=H, W=W, Cin=Cin, Cm=Cm, Cout=Cout,
        shortcut=shortcut, compute_dtype=compute_dtype)
    out = pl.pallas_call(
        kernel,
        out_shape=jax.ShapeDtypeStruct((N, H, W, Cout), compute_dtype),
        grid=(N,),
        in_specs=[
            pl.BlockSpec((1, H, W, Cin), lambda n: (n, 0, 0, 0)),
            pl.BlockSpec((Cin, Cm), lambda n: (0, 0)),
            pl.BlockSpec((1, Cm), lambda n: (0, 0)),
            pl.BlockSpec((1, Cm), lambda n: (0, 0)),
            pl.BlockSpec((9 * Cm, Cout), lambda n: (0, 0)),
            pl.BlockSpec((1, Cout), lambda n: (0, 0)),
            pl.BlockSpec((1, Cout), lambda n: (0, 0)),
        ],
        out_specs=pl.BlockSpec((1, H, W, Cout), lambda n: (n, 0, 0, 0)),
        scratch_shapes=[pltpu.VMEM((H + 2, W + 2, Cm), compute_dtype)],
        compiler_params=pltpu.CompilerParams(
            dimension_semantics=("parallel",),
            vmem_limit_bytes=_VMEM_LIMIT),
    )(y_nhwc.astype(compute_dtype),
      w1.astype(compute_dtype), s1.reshape(1, Cm), b1.reshape(1, Cm),
      w2.reshape(9 * Cm, Cout).astype(compute_dtype),
      s2.reshape(1, Cout), b2.reshape(1, Cout))
    return out


# ----------------------------------------------------------------------------
# Kernel C: cv3 1x1 conv with the channel-concat folded away:
#   out = silu(bn( y_m @ W_top + y_cv2 @ W_bottom ))   — no (M, 2*ch_) tensor.
# ----------------------------------------------------------------------------
def _cv3_kernel(ya_ref, yb_ref, wa_ref, wb_ref, s_ref, b_ref, o_ref):
    acc = jnp.dot(ya_ref[...], wa_ref[...], preferred_element_type=jnp.float32)
    acc = acc + jnp.dot(yb_ref[...], wb_ref[...],
                        preferred_element_type=jnp.float32)
    acc = acc * s_ref[...] + b_ref[...]
    o_ref[...] = (acc * jax.nn.sigmoid(acc)).astype(o_ref.dtype)


def cv3_pw(ya_nhwc, yb_nhwc, cv3, compute_dtype):
    N, H, W, Ca = ya_nhwc.shape
    Cb = yb_nhwc.shape[-1]
    w, s, b = cv3                       # w: (Ca + Cb, Cout)
    Cout = w.shape[1]
    M = N * H * W
    TM = _row_tile(M)
    wa = w[:Ca].astype(compute_dtype)
    wb = w[Ca:].astype(compute_dtype)
    out = pl.pallas_call(
        _cv3_kernel,
        out_shape=jax.ShapeDtypeStruct((M, Cout), jnp.float32),
        grid=(pl.cdiv(M, TM),),
        in_specs=[
            pl.BlockSpec((TM, Ca), lambda i: (i, 0)),
            pl.BlockSpec((TM, Cb), lambda i: (i, 0)),
            pl.BlockSpec((Ca, Cout), lambda i: (0, 0)),
            pl.BlockSpec((Cb, Cout), lambda i: (0, 0)),
            pl.BlockSpec((1, Cout), lambda i: (0, 0)),
            pl.BlockSpec((1, Cout), lambda i: (0, 0)),
        ],
        out_specs=pl.BlockSpec((TM, Cout), lambda i: (i, 0)),
        compiler_params=pltpu.CompilerParams(
            dimension_semantics=("parallel",),
            vmem_limit_bytes=_VMEM_LIMIT),
    )(ya_nhwc.reshape(M, Ca).astype(compute_dtype),
      yb_nhwc.reshape(M, Cb).astype(compute_dtype),
      wa, wb, s.reshape(1, Cout), b.reshape(1, Cout))
    return out.reshape(N, H, W, Cout)


# ----------------------------------------------------------------------------
# C3 forward (Pallas) and a pure-JAX reference for verification
# ----------------------------------------------------------------------------
def c3_forward(x_nchw, params, shortcut=True, compute_dtype=jnp.float32):
    x = jnp.transpose(x_nchw, (0, 2, 3, 1))              # NCHW -> NHWC (glue)
    y, y2 = stem_dual_pw(x, params["cv1"], params["cv2"], compute_dtype)
    for bp in params["m"]:                                # BottleNeck stack
        y = bottleneck_fused(y, bp["cv1"], bp["cv2"], shortcut, compute_dtype)
    out = cv3_pw(y, y2, params["cv3"], compute_dtype)     # concat folded in
    return jnp.transpose(out, (0, 3, 1, 2))               # NHWC -> NCHW


def _ref_pw(x, w, scale, bias):
    y = jnp.einsum("nhwc,co->nhwo", x, w)
    y = y * scale + bias
    return y * jax.nn.sigmoid(y)


def _ref_3x3(x, w, scale, bias):
    y = jax.lax.conv_general_dilated(
        x, w, (1, 1), "SAME", dimension_numbers=("NHWC", "HWIO", "NHWC"))
    y = y * scale + bias
    return y * jax.nn.sigmoid(y)


def c3_reference(x_nchw, params, shortcut=True):
    x = jnp.transpose(x_nchw, (0, 2, 3, 1))
    y = _ref_pw(x, *params["cv1"])
    for bp in params["m"]:
        t = _ref_pw(y, *bp["cv1"])
        z = _ref_3x3(t, *bp["cv2"])
        y = y + z if shortcut else z
    y2 = _ref_pw(x, *params["cv2"])
    out = _ref_pw(jnp.concatenate([y, y2], axis=-1), *params["cv3"])
    return jnp.transpose(out, (0, 3, 1, 2))


# ----------------------------------------------------------------------------
# Deterministic parameter init (Conv weight + folded eval-mode BatchNorm)
# ----------------------------------------------------------------------------
def init_conv(key, cin, cout, k):
    k1, k2, k3, k4, k5 = jax.random.split(key, 5)
    if k == 1:
        w = jax.random.normal(k1, (cin, cout), jnp.float32) * 0.1
    else:
        w = jax.random.normal(k1, (k, k, cin, cout), jnp.float32) * 0.1
    gamma = jax.random.uniform(k2, (cout,), jnp.float32, 0.8, 1.2)
    beta = jax.random.normal(k3, (cout,), jnp.float32) * 0.05
    r_mean = jax.random.normal(k4, (cout,), jnp.float32) * 0.05
    r_var = jax.random.uniform(k5, (cout,), jnp.float32, 0.5, 1.5)
    eps = 1e-5
    scale = gamma / jnp.sqrt(r_var + eps)
    bias = beta - r_mean * scale
    return (w, scale, bias)


def init_c3_params(key, ch_in, ch_out, ch_, num):
    keys = jax.random.split(key, 3 + 2 * num)
    params = {
        "cv1": init_conv(keys[0], ch_in, ch_, 1),
        "cv2": init_conv(keys[1], ch_in, ch_, 1),
        "cv3": init_conv(keys[2], 2 * ch_, ch_out, 1),
        "m": [],
    }
    for i in range(num):
        params["m"].append({
            "cv1": init_conv(keys[3 + 2 * i], ch_, ch_, 1),
            "cv2": init_conv(keys[4 + 2 * i], ch_, ch_, 3),
        })
    return params


if __name__ == "__main__":
    key = jax.random.PRNGKey(0)
    kx, kp = jax.random.split(key)

    # C3(ch_in=4, ch_out=8, ch_=4, num=1, shortcut=True); x is NCHW.
    ch_in, ch_out, ch_, num = 4, 8, 4, 1
    x = jax.random.normal(kx, (2, ch_in, 16, 16), jnp.float32)
    params = init_c3_params(kp, ch_in, ch_out, ch_, num)

    ref = jax.block_until_ready(c3_reference(x, params, shortcut=True))

    # f32 compute path — strict numeric check against the pure-JAX reference.
    out = jax.jit(lambda a: c3_forward(a, params, shortcut=True,
                                       compute_dtype=jnp.float32))(x)
    out = jax.block_until_ready(out)
    assert out.shape == (2, ch_out, 16, 16), out.shape
    assert jnp.allclose(out, ref, rtol=1e-4, atol=1e-4), (
        float(jnp.max(jnp.abs(out - ref))))

    # shortcut=False branch — strict check.
    ref_ns = jax.block_until_ready(c3_reference(x, params, shortcut=False))
    out_ns = jax.jit(lambda a: c3_forward(a, params, shortcut=False,
                                          compute_dtype=jnp.float32))(x)
    out_ns = jax.block_until_ready(out_ns)
    assert jnp.allclose(out_ns, ref_ns, rtol=1e-4, atol=1e-4), (
        float(jnp.max(jnp.abs(out_ns - ref_ns))))

    # bf16 compute path (halved HBM/DMA bytes, native MXU mode) — loose check.
    out_bf16 = jax.jit(lambda a: c3_forward(a, params, shortcut=True,
                                            compute_dtype=jnp.bfloat16))(x)
    out_bf16 = jax.block_until_ready(out_bf16)
    assert jnp.all(jnp.isfinite(out_bf16))
    assert jnp.allclose(out_bf16, ref, rtol=0.15, atol=0.15), (
        float(jnp.max(jnp.abs(out_bf16 - ref))))

    print("KERNEL_OK")
</pallas_src>

<mosaic_0001>
module attributes {stable_mosaic.version = 11 : i64} {
  func.func @_bottleneck_kernel(%arg0: i32, %arg1: memref<1x16x16x4xf32, #tpu.memory_space<vmem>>, %arg2: memref<4x4xf32, #tpu.memory_space<vmem>>, %arg3: memref<1x4xf32, #tpu.memory_space<vmem>>, %arg4: memref<1x4xf32, #tpu.memory_space<vmem>>, %arg5: memref<36x4xf32, #tpu.memory_space<vmem>>, %arg6: memref<1x4xf32, #tpu.memory_space<vmem>>, %arg7: memref<1x4xf32, #tpu.memory_space<vmem>>, %arg8: memref<1x16x16x4xf32, #tpu.memory_space<vmem>>, %arg9: memref<18x18x4xf32, #tpu.memory_space<vmem>>) attributes {dimension_semantics = [#tpu.dimension_semantics<parallel>], iteration_bounds = array<i64: 2>, scalar_prefetch = 0 : i64, scratch_operands = 1 : i64, tpu.core_type = #tpu.core_type<tc>, window_params = [{transform_indices = @transform_0, window_bounds = array<i64: 1, 16, 16, 4>}, {pipeline_mode = #tpu.pipeline_mode<synchronous>, transform_indices = @transform_1, window_bounds = array<i64: 4, 4>}, {pipeline_mode = #tpu.pipeline_mode<synchronous>, transform_indices = @transform_2, window_bounds = array<i64: 1, 4>}, {pipeline_mode = #tpu.pipeline_mode<synchronous>, transform_indices = @transform_3, window_bounds = array<i64: 1, 4>}, {pipeline_mode = #tpu.pipeline_mode<synchronous>, transform_indices = @transform_4, window_bounds = array<i64: 36, 4>}, {pipeline_mode = #tpu.pipeline_mode<synchronous>, transform_indices = @transform_5, window_bounds = array<i64: 1, 4>}, {pipeline_mode = #tpu.pipeline_mode<synchronous>, transform_indices = @transform_6, window_bounds = array<i64: 1, 4>}, {transform_indices = @transform_7, window_bounds = array<i64: 1, 16, 16, 4>}]} {
    %c0 = arith.constant 0 : index
    %c0_0 = arith.constant 0 : index
    %c0_1 = arith.constant 0 : index
    %c0_2 = arith.constant 0 : index
    %0 = vector.load %arg1[%c0, %c0_0, %c0_1, %c0_2] : memref<1x16x16x4xf32, #tpu.memory_space<vmem>>, vector<1x16x16x4xf32>
    %1 = vector.shape_cast %0 : vector<1x16x16x4xf32> to vector<16x16x4xf32>
    %2 = vector.shape_cast %1 : vector<16x16x4xf32> to vector<256x4xf32>
    %c0_3 = arith.constant 0 : index
    %c0_4 = arith.constant 0 : index
    %3 = vector.load %arg2[%c0_3, %c0_4] : memref<4x4xf32, #tpu.memory_space<vmem>>, vector<4x4xf32>
    %cst = arith.constant dense<0.000000e+00> : vector<256x4xf32>
    %4 = tpu.matmul %2, %3, %cst {dimension_numbers = #tpu.dot_dimension_numbers<[1], [0], [0], [1], [0, 0, 1, 1], [], []>} : vector<256x4xf32>, vector<4x4xf32>, vector<256x4xf32> -> vector<256x4xf32>
    %c0_5 = arith.constant 0 : index
    %c0_6 = arith.constant 0 : index
    %5 = vector.load %arg3[%c0_5, %c0_6] : memref<1x4xf32, #tpu.memory_space<vmem>>, vector<1x4xf32>
    %6 = vector.broadcast %5 : vector<1x4xf32> to vector<256x4xf32>
    %7 = arith.mulf %4, %6 : vector<256x4xf32>
    %c0_7 = arith.constant 0 : index
    %c0_8 = arith.constant 0 : index
    %8 = vector.load %arg4[%c0_7, %c0_8] : memref<1x4xf32, #tpu.memory_space<vmem>>, vector<1x4xf32>
    %9 = vector.broadcast %8 : vector<1x4xf32> to vector<256x4xf32>
    %10 = arith.addf %7, %9 : vector<256x4xf32>
    %11 = arith.negf %10 : vector<256x4xf32>
    %12 = math.exp %11 : vector<256x4xf32>
    %cst_9 = arith.constant 1.000000e+00 : f32
    %13 = vector.broadcast %cst_9 : f32 to vector<256x4xf32>
    %14 = arith.addf %13, %12 : vector<256x4xf32>
    %15 = arith.divf %13, %14 : vector<256x4xf32>
    %16 = arith.mulf %10, %15 : vector<256x4xf32>
    %cst_10 = arith.constant 0.000000e+00 : f32
    %17 = vector.broadcast %cst_10 : f32 to vector<18x18x4xf32>
    %c0_11 = arith.constant 0 : index
    %c0_12 = arith.constant 0 : index
    %c0_13 = arith.constant 0 : index
    %18 = vector.load %arg9[%c0_11, %c0_12, %c0_13] : memref<18x18x4xf32, #tpu.memory_space<vmem>>, vector<18x18x4xf32>
    tpu.vector_store %arg9[%c0_11, %c0_12, %c0_13], %17 {strides = array<i32>} : memref<18x18x4xf32, #tpu.memory_space<vmem>>, vector<18x18x4xf32>,
    %19 = vector.shape_cast %16 : vector<256x4xf32> to vector<16x16x4xf32>
    %c1 = arith.constant 1 : index
    %c1_14 = arith.constant 1 : index
    %c0_15 = arith.constant 0 : index
    %20 = vector.load %arg9[%c1, %c1_14, %c0_15] : memref<18x18x4xf32, #tpu.memory_space<vmem>>, vector<16x16x4xf32>
    tpu.vector_store %arg9[%c1, %c1_14, %c0_15], %19 {strides = array<i32>} : memref<18x18x4xf32, #tpu.memory_space<vmem>>, vector<16x16x4xf32>,
    %c0_16 = arith.constant 0 : index
    %c0_17 = arith.constant 0 : index
    %c0_18 = arith.constant 0 : index
    %21 = vector.load %arg9[%c0_16, %c0_17, %c0_18] : memref<18x18x4xf32, #tpu.memory_space<vmem>>, vector<16x16x4xf32>
    %22 = vector.shape_cast %21 : vector<16x16x4xf32> to vector<256x4xf32>
    %c0_19 = arith.constant 0 : index
    %c1_20 = arith.constant 1 : index
    %c0_21 = arith.constant 0 : index
    %23 = vector.load %arg9[%c0_19, %c1_20, %c0_21] : memref<18x18x4xf32, #tpu.memory_space<vmem>>, vector<16x16x4xf32>
    %24 = vector.shape_cast %23 : vector<16x16x4xf32> to vector<256x4xf32>
    %c0_22 = arith.constant 0 : index
    %c2 = arith.constant 2 : index
    %c0_23 = arith.constant 0 : index
    %25 = vector.load %arg9[%c0_22, %c2, %c0_23] : memref<18x18x4xf32, #tpu.memory_space<vmem>>, vector<16x16x4xf32>
    %26 = vector.shape_cast %25 : vector<16x16x4xf32> to vector<256x4xf32>
    %c1_24 = arith.constant 1 : index
    %c0_25 = arith.constant 0 : index
    %c0_26 = arith.constant 0 : index
    %27 = vector.load %arg9[%c1_24, %c0_25, %c0_26] : memref<18x18x4xf32, #tpu.memory_space<vmem>>, vector<16x16x4xf32>
    %28 = vector.shape_cast %27 : vector<16x16x4xf32> to vector<256x4xf32>
    %c1_27 = arith.constant 1 : index
    %c1_28 = arith.constant 1 : index
    %c0_29 = arith.constant 0 : index
    %29 = vector.load %arg9[%c1_27, %c1_28, %c0_29] : memref<18x18x4xf32, #tpu.memory_space<vmem>>, vector<16x16x4xf32>
    %30 = vector.shape_cast %29 : vector<16x16x4xf32> to vector<256x4xf32>
    %c1_30 = arith.constant 1 : index
    %c2_31 = arith.constant 2 : index
    %c0_32 = arith.constant 0 : index
    %31 = vector.load %arg9[%c1_30, %c2_31, %c0_32] : memref<18x18x4xf32, #tpu.memory_space<vmem>>, vector<16x16x4xf32>
    %32 = vector.shape_cast %31 : vector<16x16x4xf32> to vector<256x4xf32>
    %c2_33 = arith.constant 2 : index
    %c0_34 = arith.constant 0 : index
    %c0_35 = arith.constant 0 : index
    %33 = vector.load %arg9[%c2_33, %c0_34, %c0_35] : memref<18x18x4xf32, #tpu.memory_space<vmem>>, vector<16x16x4xf32>
    %34 = vector.shape_cast %33 : vector<16x16x4xf32> to vector<256x4xf32>
    %c2_36 = arith.constant 2 : index
    %c1_37 = arith.constant 1 : index
    %c0_38 = arith.constant 0 : index
    %35 = vector.load %arg9[%c2_36, %c1_37, %c0_38] : memref<18x18x4xf32, #tpu.memory_space<vmem>>, vector<16x16x4xf32>
    %36 = vector.shape_cast %35 : vector<16x16x4xf32> to vector<256x4xf32>
    %c2_39 = arith.constant 2 : index
    %c2_40 = arith.constant 2 : index
    %c0_41 = arith.constant 0 : index
    %37 = vector.load %arg9[%c2_39, %c2_40, %c0_41] : memref<18x18x4xf32, #tpu.memory_space<vmem>>, vector<16x16x4xf32>
    %38 = vector.shape_cast %37 : vector<16x16x4xf32> to vector<256x4xf32>
    %39 = tpu.concatenate %22, %24, %26, %28, %30, %32, %34, %36, %38 in 1 : vector<256x4xf32>, vector<256x4xf32>, vector<256x4xf32>, vector<256x4xf32>, vector<256x4xf32>, vector<256x4xf32>, vector<256x4xf32>, vector<256x4xf32>, vector<256x4xf32> -> vector<256x36xf32>
    %c0_42 = arith.constant 0 : index
    %c0_43 = arith.constant 0 : index
    %40 = vector.load %arg5[%c0_42, %c0_43] : memref<36x4xf32, #tpu.memory_space<vmem>>, vector<36x4xf32>
    %cst_44 = arith.constant dense<0.000000e+00> : vector<256x4xf32>
    %41 = tpu.matmul %39, %40, %cst_44 {dimension_numbers = #tpu.dot_dimension_numbers<[1], [0], [0], [1], [0, 0, 1, 1], [], []>} : vector<256x36xf32>, vector<36x4xf32>, vector<256x4xf32> -> vector<256x4xf32>
    %c0_45 = arith.constant 0 : index
    %c0_46 = arith.constant 0 : index
    %42 = vector.load %arg6[%c0_45, %c0_46] : memref<1x4xf32, #tpu.memory_space<vmem>>, vector<1x4xf32>
    %43 = vector.broadcast %42 : vector<1x4xf32> to vector<256x4xf32>
    %44 = arith.mulf %41, %43 : vector<256x4xf32>
    %c0_47 = arith.constant 0 : index
    %c0_48 = arith.constant 0 : index
    %45 = vector.load %arg7[%c0_47, %c0_48] : memref<1x4xf32, #tpu.memory_space<vmem>>, vector<1x4xf32>
    %46 = vector.broadcast %45 : vector<1x4xf32> to vector<256x4xf32>
    %47 = arith.addf %44, %46 : vector<256x4xf32>
    %48 = arith.negf %47 : vector<256x4xf32>
    %49 = math.exp %48 : vector<256x4xf32>
    %cst_49 = arith.constant 1.000000e+00 : f32
    %50 = vector.broadcast %cst_49 : f32 to vector<256x4xf32>
    %51 = arith.addf %50, %49 : vector<256x4xf32>
    %52 = arith.divf %50, %51 : vector<256x4xf32>
    %53 = arith.mulf %47, %52 : vector<256x4xf32>
    %54 = arith.addf %53, %2 : vector<256x4xf32>
    %55 = vector.shape_cast %54 : vector<256x4xf32> to vector<16x16x4xf32>
    %c0_50 = arith.constant 0 : index
    %c0_51 = arith.constant 0 : index
    %c0_52 = arith.constant 0 : index
    %c0_53 = arith.constant 0 : index
    %56 = vector.load %arg8[%c0_50, %c0_51, %c0_52, %c0_53] : memref<1x16x16x4xf32, #tpu.memory_space<vmem>>, vector<1x16x16x4xf32>
    %57 = vector.shape_cast %56 : vector<1x16x16x4xf32> to vector<16x16x4xf32>
    %58 = vector.shape_cast %55 : vector<16x16x4xf32> to vector<1x16x16x4xf32>
    tpu.vector_store %arg8[%c0_50, %c0_51, %c0_52, %c0_53], %58 {strides = array<i32>} : memref<1x16x16x4xf32, #tpu.memory_space<vmem>>, vector<1x16x16x4xf32>,
    return
  }
  func.func @transform_0(%arg0: i32) -> (i32, i32, i32, i32) {
    %c0_i32 = arith.constant 0 : i32
    %c0_i32_0 = arith.constant 0 : i32
    %c0_i32_1 = arith.constant 0 : i32
    %c0_i32_2 = arith.constant 0 : i32
    return %arg0, %c0_i32, %c0_i32_0, %c0_i32_1 : i32, i32, i32, i32
  }
  func.func @transform_1(%arg0: i32) -> (i32, i32) {
    %c0_i32 = arith.constant 0 : i32
    %c0_i32_0 = arith.constant 0 : i32
    %c0_i32_1 = arith.constant 0 : i32
    return %c0_i32, %c0_i32_0 : i32, i32
  }
  func.func @transform_2(%arg0: i32) -> (i32, i32) {
    %c0_i32 = arith.constant 0 : i32
    %c0_i32_0 = arith.constant 0 : i32
    %c0_i32_1 = arith.constant 0 : i32
    return %c0_i32, %c0_i32_0 : i32, i32
  }
  func.func @transform_3(%arg0: i32) -> (i32, i32) {
    %c0_i32 = arith.constant 0 : i32
    %c0_i32_0 = arith.constant 0 : i32
    %c0_i32_1 = arith.constant 0 : i32
    return %c0_i32, %c0_i32_0 : i32, i32
  }
  func.func @transform_4(%arg0: i32) -> (i32, i32) {
    %c0_i32 = arith.constant 0 : i32
    %c0_i32_0 = arith.constant 0 : i32
    %c0_i32_1 = arith.constant 0 : i32
    return %c0_i32, %c0_i32_0 : i32, i32
  }
  func.func @transform_5(%arg0: i32) -> (i32, i32) {
    %c0_i32 = arith.constant 0 : i32
    %c0_i32_0 = arith.constant 0 : i32
    %c0_i32_1 = arith.constant 0 : i32
    return %c0_i32, %c0_i32_0 : i32, i32
  }
  func.func @transform_6(%arg0: i32) -> (i32, i32) {
    %c0_i32 = arith.constant 0 : i32
    %c0_i32_0 = arith.constant 0 : i32
    %c0_i32_1 = arith.constant 0 : i32
    return %c0_i32, %c0_i32_0 : i32, i32
  }
  func.func @transform_7(%arg0: i32) -> (i32, i32, i32, i32) {
    %c0_i32 = arith.constant 0 : i32
    %c0_i32_0 = arith.constant 0 : i32
    %c0_i32_1 = arith.constant 0 : i32
    %c0_i32_2 = arith.constant 0 : i32
    return %arg0, %c0_i32, %c0_i32_0, %c0_i32_1 : i32, i32, i32, i32
  }
}

module attributes {stable_mosaic.version = 11 : i64} {
  func.func @_cv3_kernel(%arg0: i32, %arg1: memref<256x4xf32, #tpu.memory_space<vmem>>, %arg2: memref<256x4xf32, #tpu.memory_space<vmem>>, %arg3: memref<4x8xf32, #tpu.memory_space<vmem>>, %arg4: memref<4x8xf32, #tpu.memory_space<vmem>>, %arg5: memref<1x8xf32, #tpu.memory_space<vmem>>, %arg6: memref<1x8xf32, #tpu.memory_space<vmem>>, %arg7: memref<256x8xf32, #tpu.memory_space<vmem>>) attributes {dimension_semantics = [#tpu.dimension_semantics<parallel>], iteration_bounds = array<i64: 2>, scalar_prefetch = 0 : i64, scratch_operands = 0 : i64, tpu.core_type = #tpu.core_type<tc>, window_params = [{transform_indices = @transform_0, window_bounds = array<i64: 256, 4>}, {transform_indices = @transform_1, window_bounds = array<i64: 256, 4>}, {pipeline_mode = #tpu.pipeline_mode<synchronous>, transform_indices = @transform_2, window_bounds = array<i64: 4, 8>}, {pipeline_mode = #tpu.pipeline_mode<synchronous>, transform_indices = @transform_3, window_bounds = array<i64: 4, 8>}, {pipeline_mode = #tpu.pipeline_mode<synchronous>, transform_indices = @transform_4, window_bounds = array<i64: 1, 8>}, {pipeline_mode = #tpu.pipeline_mode<synchronous>, transform_indices = @transform_5, window_bounds = array<i64: 1, 8>}, {transform_indices = @transform_6, window_bounds = array<i64: 256, 8>}]} {
    %c0 = arith.constant 0 : index
    %c0_0 = arith.constant 0 : index
    %0 = vector.load %arg1[%c0, %c0_0] : memref<256x4xf32, #tpu.memory_space<vmem>>, vector<256x4xf32>
    %c0_1 = arith.constant 0 : index
    %c0_2 = arith.constant 0 : index
    %1 = vector.load %arg3[%c0_1, %c0_2] : memref<4x8xf32, #tpu.memory_space<vmem>>, vector<4x8xf32>
    %cst = arith.constant dense<0.000000e+00> : vector<256x8xf32>
    %2 = tpu.matmul %0, %1, %cst {dimension_numbers = #tpu.dot_dimension_numbers<[1], [0], [0], [1], [0, 0, 1, 1], [], []>} : vector<256x4xf32>, vector<4x8xf32>, vector<256x8xf32> -> vector<256x8xf32>
    %c0_3 = arith.constant 0 : index
    %c0_4 = arith.constant 0 : index
    %3 = vector.load %arg2[%c0_3, %c0_4] : memref<256x4xf32, #tpu.memory_space<vmem>>, vector<256x4xf32>
    %c0_5 = arith.constant 0 : index
    %c0_6 = arith.constant 0 : index
    %4 = vector.load %arg4[%c0_5, %c0_6] : memref<4x8xf32, #tpu.memory_space<vmem>>, vector<4x8xf32>
    %cst_7 = arith.constant dense<0.000000e+00> : vector<256x8xf32>
    %5 = tpu.matmul %3, %4, %cst_7 {dimension_numbers = #tpu.dot_dimension_numbers<[1], [0], [0], [1], [0, 0, 1, 1], [], []>} : vector<256x4xf32>, vector<4x8xf32>, vector<256x8xf32> -> vector<256x8xf32>
    %6 = arith.addf %2, %5 : vector<256x8xf32>
    %c0_8 = arith.constant 0 : index
    %c0_9 = arith.constant 0 : index
    %7 = vector.load %arg5[%c0_8, %c0_9] : memref<1x8xf32, #tpu.memory_space<vmem>>, vector<1x8xf32>
    %8 = vector.broadcast %7 : vector<1x8xf32> to vector<256x8xf32>
    %9 = arith.mulf %6, %8 : vector<256x8xf32>
    %c0_10 = arith.constant 0 : index
    %c0_11 = arith.constant 0 : index
    %10 = vector.load %arg6[%c0_10, %c0_11] : memref<1x8xf32, #tpu.memory_space<vmem>>, vector<1x8xf32>
    %11 = vector.broadcast %10 : vector<1x8xf32> to vector<256x8xf32>
    %12 = arith.addf %9, %11 : vector<256x8xf32>
    %13 = arith.negf %12 : vector<256x8xf32>
    %14 = math.exp %13 : vector<256x8xf32>
    %cst_12 = arith.constant 1.000000e+00 : f32
    %15 = vector.broadcast %cst_12 : f32 to vector<256x8xf32>
    %16 = arith.addf %15, %14 : vector<256x8xf32>
    %17 = arith.divf %15, %16 : vector<256x8xf32>
    %18 = arith.mulf %12, %17 : vector<256x8xf32>
    %c0_13 = arith.constant 0 : index
    %c0_14 = arith.constant 0 : index
    %19 = vector.load %arg7[%c0_13, %c0_14] : memref<256x8xf32, #tpu.memory_space<vmem>>, vector<256x8xf32>
    tpu.vector_store %arg7[%c0_13, %c0_14], %18 {strides = array<i32>} : memref<256x8xf32, #tpu.memory_space<vmem>>, vector<256x8xf32>,
    return
  }
  func.func @transform_0(%arg0: i32) -> (i32, i32) {
    %c0_i32 = arith.constant 0 : i32
    %c0_i32_0 = arith.constant 0 : i32
    return %arg0, %c0_i32 : i32, i32
  }
  func.func @transform_1(%arg0: i32) -> (i32, i32) {
    %c0_i32 = arith.constant 0 : i32
    %c0_i32_0 = arith.constant 0 : i32
    return %arg0, %c0_i32 : i32, i32
  }
  func.func @transform_2(%arg0: i32) -> (i32, i32) {
    %c0_i32 = arith.constant 0 : i32
    %c0_i32_0 = arith.constant 0 : i32
    %c0_i32_1 = arith.constant 0 : i32
    return %c0_i32, %c0_i32_0 : i32, i32
  }
  func.func @transform_3(%arg0: i32) -> (i32, i32) {
    %c0_i32 = arith.constant 0 : i32
    %c0_i32_0 = arith.constant 0 : i32
    %c0_i32_1 = arith.constant 0 : i32
    return %c0_i32, %c0_i32_0 : i32, i32
  }
  func.func @transform_4(%arg0: i32) -> (i32, i32) {
    %c0_i32 = arith.constant 0 : i32
    %c0_i32_0 = arith.constant 0 : i32
    %c0_i32_1 = arith.constant 0 : i32
    return %c0_i32, %c0_i32_0 : i32, i32
  }
  func.func @transform_5(%arg0: i32) -> (i32, i32) {
    %c0_i32 = arith.constant 0 : i32
    %c0_i32_0 = arith.constant 0 : i32
    %c0_i32_1 = arith.constant 0 : i32
    return %c0_i32, %c0_i32_0 : i32, i32
  }
  func.func @transform_6(%arg0: i32) -> (i32, i32) {
    %c0_i32 = arith.constant 0 : i32
    %c0_i32_0 = arith.constant 0 : i32
    return %arg0, %c0_i32 : i32, i32
  }
}

module attributes {stable_mosaic.version = 11 : i64} {
  func.func @_stem_kernel(%arg0: i32, %arg1: memref<256x4xf32, #tpu.memory_space<vmem>>, %arg2: memref<4x4xf32, #tpu.memory_space<vmem>>, %arg3: memref<1x4xf32, #tpu.memory_space<vmem>>, %arg4: memref<1x4xf32, #tpu.memory_space<vmem>>, %arg5: memref<4x4xf32, #tpu.memory_space<vmem>>, %arg6: memref<1x4xf32, #tpu.memory_space<vmem>>, %arg7: memref<1x4xf32, #tpu.memory_space<vmem>>, %arg8: memref<256x4xf32, #tpu.memory_space<vmem>>, %arg9: memref<256x4xf32, #tpu.memory_space<vmem>>) attributes {dimension_semantics = [#tpu.dimension_semantics<parallel>], iteration_bounds = array<i64: 2>, scalar_prefetch = 0 : i64, scratch_operands = 0 : i64, tpu.core_type = #tpu.core_type<tc>, window_params = [{transform_indices = @transform_0, window_bounds = array<i64: 256, 4>}, {pipeline_mode = #tpu.pipeline_mode<synchronous>, transform_indices = @transform_1, window_bounds = array<i64: 4, 4>}, {pipeline_mode = #tpu.pipeline_mode<synchronous>, transform_indices = @transform_2, window_bounds = array<i64: 1, 4>}, {pipeline_mode = #tpu.pipeline_mode<synchronous>, transform_indices = @transform_3, window_bounds = array<i64: 1, 4>}, {pipeline_mode = #tpu.pipeline_mode<synchronous>, transform_indices = @transform_4, window_bounds = array<i64: 4, 4>}, {pipeline_mode = #tpu.pipeline_mode<synchronous>, transform_indices = @transform_5, window_bounds = array<i64: 1, 4>}, {pipeline_mode = #tpu.pipeline_mode<synchronous>, transform_indices = @transform_6, window_bounds = array<i64: 1, 4>}, {transform_indices = @transform_7, window_bounds = array<i64: 256, 4>}, {transform_indices = @transform_8, window_bounds = array<i64: 256, 4>}]} {
    %c0 = arith.constant 0 : index
    %c0_0 = arith.constant 0 : index
    %0 = vector.load %arg1[%c0, %c0_0] : memref<256x4xf32, #tpu.memory_space<vmem>>, vector<256x4xf32>
    %c0_1 = arith.constant 0 : index
    %c0_2 = arith.constant 0 : index
    %1 = vector.load %arg2[%c0_1, %c0_2] : memref<4x4xf32, #tpu.memory_space<vmem>>, vector<4x4xf32>
    %cst = arith.constant dense<0.000000e+00> : vector<256x4xf32>
    %2 = tpu.matmul %0, %1, %cst {dimension_numbers = #tpu.dot_dimension_numbers<[1], [0], [0], [1], [0, 0, 1, 1], [], []>} : vector<256x4xf32>, vector<4x4xf32>, vector<256x4xf32> -> vector<256x4xf32>
    %c0_3 = arith.constant 0 : index
    %c0_4 = arith.constant 0 : index
    %3 = vector.load %arg3[%c0_3, %c0_4] : memref<1x4xf32, #tpu.memory_space<vmem>>, vector<1x4xf32>
    %4 = vector.broadcast %3 : vector<1x4xf32> to vector<256x4xf32>
    %5 = arith.mulf %2, %4 : vector<256x4xf32>
    %c0_5 = arith.constant 0 : index
    %c0_6 = arith.constant 0 : index
    %6 = vector.load %arg4[%c0_5, %c0_6] : memref<1x4xf32, #tpu.memory_space<vmem>>, vector<1x4xf32>
    %7 = vector.broadcast %6 : vector<1x4xf32> to vector<256x4xf32>
    %8 = arith.addf %5, %7 : vector<256x4xf32>
    %9 = arith.negf %8 : vector<256x4xf32>
    %10 = math.exp %9 : vector<256x4xf32>
    %cst_7 = arith.constant 1.000000e+00 : f32
    %11 = vector.broadcast %cst_7 : f32 to vector<256x4xf32>
    %12 = arith.addf %11, %10 : vector<256x4xf32>
    %13 = arith.divf %11, %12 : vector<256x4xf32>
    %14 = arith.mulf %8, %13 : vector<256x4xf32>
    %c0_8 = arith.constant 0 : index
    %c0_9 = arith.constant 0 : index
    %15 = vector.load %arg8[%c0_8, %c0_9] : memref<256x4xf32, #tpu.memory_space<vmem>>, vector<256x4xf32>
    tpu.vector_store %arg8[%c0_8, %c0_9], %14 {strides = array<i32>} : memref<256x4xf32, #tpu.memory_space<vmem>>, vector<256x4xf32>,
    %c0_10 = arith.constant 0 : index
    %c0_11 = arith.constant 0 : index
    %16 = vector.load %arg5[%c0_10, %c0_11] : memref<4x4xf32, #tpu.memory_space<vmem>>, vector<4x4xf32>
    %cst_12 = arith.constant dense<0.000000e+00> : vector<256x4xf32>
    %17 = tpu.matmul %0, %16, %cst_12 {dimension_numbers = #tpu.dot_dimension_numbers<[1], [0], [0], [1], [0, 0, 1, 1], [], []>} : vector<256x4xf32>, vector<4x4xf32>, vector<256x4xf32> -> vector<256x4xf32>
    %c0_13 = arith.constant 0 : index
    %c0_14 = arith.constant 0 : index
    %18 = vector.load %arg6[%c0_13, %c0_14] : memref<1x4xf32, #tpu.memory_space<vmem>>, vector<1x4xf32>
    %19 = vector.broadcast %18 : vector<1x4xf32> to vector<256x4xf32>
    %20 = arith.mulf %17, %19 : vector<256x4xf32>
    %c0_15 = arith.constant 0 : index
    %c0_16 = arith.constant 0 : index
    %21 = vector.load %arg7[%c0_15, %c0_16] : memref<1x4xf32, #tpu.memory_space<vmem>>, vector<1x4xf32>
    %22 = vector.broadcast %21 : vector<1x4xf32> to vector<256x4xf32>
    %23 = arith.addf %20, %22 : vector<256x4xf32>
    %24 = arith.negf %23 : vector<256x4xf32>
    %25 = math.exp %24 : vector<256x4xf32>
    %cst_17 = arith.constant 1.000000e+00 : f32
    %26 = vector.broadcast %cst_17 : f32 to vector<256x4xf32>
    %27 = arith.addf %26, %25 : vector<256x4xf32>
    %28 = arith.divf %26, %27 : vector<256x4xf32>
    %29 = arith.mulf %23, %28 : vector<256x4xf32>
    %c0_18 = arith.constant 0 : index
    %c0_19 = arith.constant 0 : index
    %30 = vector.load %arg9[%c0_18, %c0_19] : memref<256x4xf32, #tpu.memory_space<vmem>>, vector<256x4xf32>
    tpu.vector_store %arg9[%c0_18, %c0_19], %29 {strides = array<i32>} : memref<256x4xf32, #tpu.memory_space<vmem>>, vector<256x4xf32>,
    return
  }
  func.func @transform_0(%arg0: i32) -> (i32, i32) {
    %c0_i32 = arith.constant 0 : i32
    %c0_i32_0 = arith.constant 0 : i32
    return %arg0, %c0_i32 : i32, i32
  }
  func.func @transform_1(%arg0: i32) -> (i32, i32) {
    %c0_i32 = arith.constant 0 : i32
    %c0_i32_0 = arith.constant 0 : i32
    %c0_i32_1 = arith.constant 0 : i32
    return %c0_i32, %c0_i32_0 : i32, i32
  }
  func.func @transform_2(%arg0: i32) -> (i32, i32) {
    %c0_i32 = arith.constant 0 : i32
    %c0_i32_0 = arith.constant 0 : i32
    %c0_i32_1 = arith.constant 0 : i32
    return %c0_i32, %c0_i32_0 : i32, i32
  }
  func.func @transform_3(%arg0: i32) -> (i32, i32) {
    %c0_i32 = arith.constant 0 : i32
    %c0_i32_0 = arith.constant 0 : i32
    %c0_i32_1 = arith.constant 0 : i32
    return %c0_i32, %c0_i32_0 : i32, i32
  }
  func.func @transform_4(%arg0: i32) -> (i32, i32) {
    %c0_i32 = arith.constant 0 : i32
    %c0_i32_0 = arith.constant 0 : i32
    %c0_i32_1 = arith.constant 0 : i32
    return %c0_i32, %c0_i32_0 : i32, i32
  }
  func.func @transform_5(%arg0: i32) -> (i32, i32) {
    %c0_i32 = arith.constant 0 : i32
    %c0_i32_0 = arith.constant 0 : i32
    %c0_i32_1 = arith.constant 0 : i32
    return %c0_i32, %c0_i32_0 : i32, i32
  }
  func.func @transform_6(%arg0: i32) -> (i32, i32) {
    %c0_i32 = arith.constant 0 : i32
    %c0_i32_0 = arith.constant 0 : i32
    %c0_i32_1 = arith.constant 0 : i32
    return %c0_i32, %c0_i32_0 : i32, i32
  }
  func.func @transform_7(%arg0: i32) -> (i32, i32) {
    %c0_i32 = arith.constant 0 : i32
    %c0_i32_0 = arith.constant 0 : i32
    return %arg0, %c0_i32 : i32, i32
  }
  func.func @transform_8(%arg0: i32) -> (i32, i32) {
    %c0_i32 = arith.constant 0 : i32
    %c0_i32_0 = arith.constant 0 : i32
    return %arg0, %c0_i32 : i32, i32
  }
}

</mosaic_0001>

<llo_original>
// kernel: _lambda_.3
$region0: #{_lambda_.3}
  #allocation0 [shape = 'u32[]', space=smem, size = 0x4, offset = 0x4, fixed_abs, tag = 'smem constant byte address 0x4 - core index']
  #allocation1 [shape = 'u32[144,128]{1,0:T(1,128)}', space=vmem, size = 0x12000, scoped, tag = 'internal scratch']
  %s0 = inlined_call_operand.vmem [shape: f32[512,4], index: 0, kind: input, shape index: {}]
  %s1 = inlined_call_operand.vmem [shape: f32[4,4], index: 1, kind: input, shape index: {}]
  %s2 = inlined_call_operand.vmem [shape: f32[1,4], index: 2, kind: input, shape index: {}]
  %s3 = inlined_call_operand.vmem [shape: f32[1,4], index: 3, kind: input, shape index: {}]
  %s4 = inlined_call_operand.vmem [shape: f32[4,4], index: 4, kind: input, shape index: {}]
  %s5 = inlined_call_operand.vmem [shape: f32[1,4], index: 5, kind: input, shape index: {}]
  %s6 = inlined_call_operand.vmem [shape: f32[1,4], index: 6, kind: input, shape index: {}]
  %s7 = inlined_call_operand.vmem [shape: f32[512,4], index: 7, kind: output, shape index: {0}]
  %s8 = inlined_call_operand.vmem [shape: f32[512,4], index: 8, kind: output, shape index: {1}]
  %9 = xla_tuple %s7, %s8
  %s10 = sld [smem:[#allocation0]]
  $region69: #{_lambda_.3} parent=0
    _
  %s12 = ssub.s32 1, %s10
  %s13 = scalar_select 0, %s12, %s10
  loop: start=0, step=1, limit=4
  $region2: #{_lambda_.3} parent=0 // loop_pre_header
    _
  $region3: #{_lambda_.3} parent=0 // loop_header
    %s15 = sphi 0, %s19
    %p16 = scmp.ge.s32.totalorder %s15, 4
    %s25 = sphi 0, %s27
    %s28 = sphi 0, %s25
    %s29 = sphi 0, %s28
    %s45 = sphi 0, %s29
    %s49 = sphi 0, %s49
    %s51 = sphi 0, %s49
    %s52 = sphi 0, %s51
    %s66 = sphi 0, %s52
    %s70 = sphi 0, %s70
    %s72 = sphi 0, %s70
    %s73 = sphi 0, %s72
    %s87 = sphi 0, %s73
    %s91 = sphi 0, %s91
    %s93 = sphi 0, %s91
    %s94 = sphi 0, %s93
    %s108 = sphi 0, %s94
    %s112 = sphi 0, %s112
    %s114 = sphi 0, %s112
    %s115 = sphi 0, %s114
    %s129 = sphi 0, %s115
    %s133 = sphi 0, %s133
    %s135 = sphi 0, %s133
    %s136 = sphi 0, %s135
    %s150 = sphi 0, %s136
    %s154 = sphi 0, %s154
    %s156 = sphi 0, %s154
    %s157 = sphi 0, %s156
    %s171 = sphi 0, %s157
    %s177 = sphi 0, %s179
    %s180 = sphi 0, %s177
    %s181 = sphi 0, %s180
    %s197 = sphi 0, %s181
    %s203 = sphi 0, %s205
    %s206 = sphi 0, %s203
    %s207 = sphi 0, %s206
    %s223 = sphi 0, %s207
  $region4: #{_lambda_.3} parent=0 // loop_header_branch
    %18 = sbr.rel (%p16) target = $region8
  $region5: #{_lambda_.3} parent=0 // loop_body
    %s20 = ssub.s32 %s15, 1
    %s21 = ssub.s32 %s15, 2
    %s22 = sadd.s32 %s15, 1
    %s23 = ssub.s32 %s15, %s22
    %p24 = scmp.eq.s32.totalorder %s23, 0
    %s26 = sadd.s32 %s25, 1
    %s27 = scalar_select %p24, %s25, %s26
    %p30 = pneg %p24
    %p31 = scmp.eq.s32.totalorder %s15, 1
    %p32 = por %p30, %p31
    %p33 = scmp.ne.s32.totalorder %s25, %s28
    %p34 = scmp.eq.s32.totalorder %s15, 0
    %p35 = por %p33, %p34
    %p36 = scmp.ne.s32.totalorder %s25, %s28
    %p37 = scmp.eq.s32.totalorder %s20, 1
    %p38 = por %p36, %p37
    %p39 = scmp.ne.s32.totalorder %s28, %s29
    %p40 = scmp.eq.s32.totalorder %s20, 0
    %p41 = por %p39, %p40
    %p42 = scmp.ne.s32.totalorder %s28, %s29
    %p43 = scmp.eq.s32.totalorder %s21, 1
    %p44 = por %p42, %p43
    %p46 = scmp.ne.s32.totalorder %s29, %s45
    %p47 = scmp.eq.s32.totalorder %s21, 0
    %p48 = por %p46, %p47
    %s50 = sadd.s32 %s49, 1
    %p53 = scmp.eq.s32.totalorder %s15, 1
    %p54 = scmp.ne.s32.totalorder %s49, %s51
    %p55 = scmp.eq.s32.totalorder %s15, 0
    %p56 = por %p54, %p55
    %p57 = scmp.ne.s32.totalorder %s49, %s51
    %p58 = scmp.eq.s32.totalorder %s20, 1
    %p59 = por %p57, %p58
    %p60 = scmp.ne.s32.totalorder %s51, %s52
    %p61 = scmp.eq.s32.totalorder %s20, 0
    %p62 = por %p60, %p61
    %p63 = scmp.ne.s32.totalorder %s51, %s52
    %p64 = scmp.eq.s32.totalorder %s21, 1
    %p65 = por %p63, %p64
    %p67 = scmp.ne.s32.totalorder %s52, %s66
    %p68 = scmp.eq.s32.totalorder %s21, 0
    %p69 = por %p67, %p68
    %s71 = sadd.s32 %s70, 1
    %p74 = scmp.eq.s32.totalorder %s15, 1
    %p75 = scmp.ne.s32.totalorder %s70, %s72
    %p76 = scmp.eq.s32.totalorder %s15, 0
    %p77 = por %p75, %p76
    %p78 = scmp.ne.s32.totalorder %s70, %s72
    %p79 = scmp.eq.s32.totalorder %s20, 1
    %p80 = por %p78, %p79
    %p81 = scmp.ne.s32.totalorder %s72, %s73
    %p82 = scmp.eq.s32.totalorder %s20, 0
    %p83 = por %p81, %p82
    %p84 = scmp.ne.s32.totalorder %s72, %s73
    %p85 = scmp.eq.s32.totalorder %s21, 1
    %p86 = por %p84, %p85
    %p88 = scmp.ne.s32.totalorder %s73, %s87
    %p89 = scmp.eq.s32.totalorder %s21, 0
    %p90 = por %p88, %p89
    %s92 = sadd.s32 %s91, 1
    %p95 = scmp.eq.s32.totalorder %s15, 1
    %p96 = scmp.ne.s32.totalorder %s91, %s93
    %p97 = scmp.eq.s32.totalorder %s15, 0
    %p98 = por %p96, %p97
    %p99 = scmp.ne.s32.totalorder %s91, %s93
    %p100 = scmp.eq.s32.totalorder %s20, 1
    %p101 = por %p99, %p100
    %p102 = scmp.ne.s32.totalorder %s93, %s94
    %p103 = scmp.eq.s32.totalorder %s20, 0
    %p104 = por %p102, %p103
    %p105 = scmp.ne.s32.totalorder %s93, %s94
    %p106 = scmp.eq.s32.totalorder %s21, 1
    %p107 = por %p105, %p106
    %p109 = scmp.ne.s32.totalorder %s94, %s108
    %p110 = scmp.eq.s32.totalorder %s21, 0
    %p111 = por %p109, %p110
    %s113 = sadd.s32 %s112, 1
    %p116 = scmp.eq.s32.totalorder %s15, 1
    %p117 = scmp.ne.s32.totalorder %s112, %s114
    %p118 = scmp.eq.s32.totalorder %s15, 0
    %p119 = por %p117, %p118
    %p120 = scmp.ne.s32.totalorder %s112, %s114
    %p121 = scmp.eq.s32.totalorder %s20, 1
    %p122 = por %p120, %p121
    %p123 = scmp.ne.s32.totalorder %s114, %s115
    %p124 = scmp.eq.s32.totalorder %s20, 0
    %p125 = por %p123, %p124
    %p126 = scmp.ne.s32.totalorder %s114, %s115
    %p127 = scmp.eq.s32.totalorder %s21, 1
    %p128 = por %p126, %p127
    %p130 = scmp.ne.s32.totalorder %s115, %s129
    %p131 = scmp.eq.s32.totalorder %s21, 0
    %p132 = por %p130, %p131
    %s134 = sadd.s32 %s133, 1
    %p137 = scmp.eq.s32.totalorder %s15, 1
    %p138 = scmp.ne.s32.totalorder %s133, %s135
    %p139 = scmp.eq.s32.totalorder %s15, 0
    %p140 = por %p138, %p139
    %p141 = scmp.ne.s32.totalorder %s133, %s135
    %p142 = scmp.eq.s32.totalorder %s20, 1
    %p143 = por %p141, %p142
    %p144 = scmp.ne.s32.totalorder %s135, %s136
    %p145 = scmp.eq.s32.totalorder %s20, 0
    %p146 = por %p144, %p145
    %p147 = scmp.ne.s32.totalorder %s135, %s136
    %p148 = scmp.eq.s32.totalorder %s21, 1
    %p149 = por %p147, %p148
    %p151 = scmp.ne.s32.totalorder %s136, %s150
    %p152 = scmp.eq.s32.totalorder %s21, 0
    %p153 = por %p151, %p152
    %s155 = sadd.s32 %s154, 1
    %p158 = scmp.eq.s32.totalorder %s15, 1
    %p159 = scmp.ne.s32.totalorder %s154, %s156
    %p160 = scmp.eq.s32.totalorder %s15, 0
    %p161 = por %p159, %p160
    %p162 = scmp.ne.s32.totalorder %s154, %s156
    %p163 = scmp.eq.s32.totalorder %s20, 1
    %p164 = por %p162, %p163
    %p165 = scmp.ne.s32.totalorder %s156, %s157
    %p166 = scmp.eq.s32.totalorder %s20, 0
    %p167 = por %p165, %p166
    %p168 = scmp.ne.s32.totalorder %s156, %s157
    %p169 = scmp.eq.s32.totalorder %s21, 1
    %p170 = por %p168, %p169
    %p172 = scmp.ne.s32.totalorder %s157, %s171
    %p173 = scmp.eq.s32.totalorder %s21, 0
    %p174 = por %p172, %p173
    %s175 = ssub.s32 %s15, %s22
    %p176 = scmp.eq.s32.totalorder %s175, 0
    %s178 = sadd.s32 %s177, 1
    %s179 = scalar_select %p176, %s177, %s178
    %p182 = pneg %p176
    %p183 = scmp.eq.s32.totalorder %s15, 1
    %p184 = por %p182, %p183
    %p185 = scmp.ne.s32.totalorder %s177, %s180
    %p186 = scmp.eq.s32.totalorder %s15, 0
    %p187 = por %p185, %p186
    %p188 = scmp.ne.s32.totalorder %s177, %s180
    %p189 = scmp.eq.s32.totalorder %s20, 1
    %p190 = por %p188, %p189
    %p191 = scmp.ne.s32.totalorder %s180, %s181
    %p192 = scmp.eq.s32.totalorder %s20, 0
    %p193 = por %p191, %p192
    %p194 = scmp.ne.s32.totalorder %s180, %s181
    %p195 = scmp.eq.s32.totalorder %s21, 1
    %p196 = por %p194, %p195
    %p198 = scmp.ne.s32.totalorder %s181, %s197
    %p199 = scmp.eq.s32.totalorder %s21, 0
    %p200 = por %p198, %p199
    %s201 = ssub.s32 %s15, %s22
    %p202 = scmp.eq.s32.totalorder %s201, 0
    %s204 = sadd.s32 %s203, 1
    %s205 = scalar_select %p202, %s203, %s204
    %p208 = pneg %p202
    %p209 = scmp.eq.s32.totalorder %s15, 1
    %p210 = por %p208, %p209
    %p211 = scmp.ne.s32.totalorder %s203, %s206
    %p212 = scmp.eq.s32.totalorder %s15, 0
    %p213 = por %p211, %p212
    %p214 = scmp.ne.s32.totalorder %s203, %s206
    %p215 = scmp.eq.s32.totalorder %s20, 1
    %p216 = por %p214, %p215
    %p217 = scmp.ne.s32.totalorder %s206, %s207
    %p218 = scmp.eq.s32.totalorder %s20, 0
    %p219 = por %p217, %p218
    %p220 = scmp.ne.s32.totalorder %s206, %s207
    %p221 = scmp.eq.s32.totalorder %s21, 1
    %p222 = por %p220, %p221
    %p224 = scmp.ne.s32.totalorder %s207, %s223
    %p225 = scmp.eq.s32.totalorder %s21, 0
    %p226 = por %p224, %p225
    %p227 = scmp.le.s32.totalorder 1, %s15
    %p228 = scmp.lt.s32.totalorder %s15, 3
    %p229 = pnand %p227, %p228
    %p230 = pneg %p229
    // Predicated region
    $region9: #{_lambda_.3} parent=5 // pred_check
      _
    $region10: #{_lambda_.3} parent=5 // pred_check_branch
      %232 = sbr.rel (%p229) target = $region12
    $region11: #{_lambda_.3} parent=5 // pred_region
      %s233 = ssub.s32 %s15, 1
      // Predicated region
      $region13: #{_lambda_.3} parent=11 // pred_check
        %p234 = pneg %p62
      $region14: #{_lambda_.3} parent=11 // pred_check_branch
        %236 = sbr.rel (%p234) target = $region16
      $region15: #{_lambda_.3} parent=11 // pred_region
        _
      $region16: #{_lambda_.3} parent=11 // pred_fallthru
        _
      // Predicated region
      $region17: #{_lambda_.3} parent=11 // pred_check
        %p237 = pneg %p83
      $region18: #{_lambda_.3} parent=11 // pred_check_branch
        %239 = sbr.rel (%p237) target = $region20
      $region19: #{_lambda_.3} parent=11 // pred_region
        _
      $region20: #{_lambda_.3} parent=11 // pred_fallthru
        _
      // Predicated region
      $region21: #{_lambda_.3} parent=11 // pred_check
        %p240 = pneg %p104
      $region22: #{_lambda_.3} parent=11 // pred_check_branch
        %242 = sbr.rel (%p240) target = $region24
      $region23: #{_lambda_.3} parent=11 // pred_region
        _
      $region24: #{_lambda_.3} parent=11 // pred_fallthru
        _
      // Predicated region
      $region25: #{_lambda_.3} parent=11 // pred_check
        %p243 = pneg %p125
      $region26: #{_lambda_.3} parent=11 // pred_check_branch
        %245 = sbr.rel (%p243) target = $region28
      $region27: #{_lambda_.3} parent=11 // pred_region
        _
      $region28: #{_lambda_.3} parent=11 // pred_fallthru
        _
      // Predicated region
      $region29: #{_lambda_.3} parent=11 // pred_check
        %p246 = pneg %p146
      $region30: #{_lambda_.3} parent=11 // pred_check_branch
        %248 = sbr.rel (%p246) target = $region32
      $region31: #{_lambda_.3} parent=11 // pred_region
        _
      $region32: #{_lambda_.3} parent=11 // pred_fallthru
        _
      // Predicated region
      $region33: #{_lambda_.3} parent=11 // pred_check
        %p249 = pneg %p167
      $region34: #{_lambda_.3} parent=11 // pred_check_branch
        %251 = sbr.rel (%p249) target = $region36
      $region35: #{_lambda_.3} parent=11 // pred_region
        _
      $region36: #{_lambda_.3} parent=11 // pred_fallthru
        _
    $region12: #{_lambda_.3} parent=5 // pred_fallthru
      _
    %p252 = scmp.lt.s32.totalorder %s15, 2
    // Predicated region
    $region37: #{_lambda_.3} parent=5 // pred_check
      %p253 = pneg %p252
    $region38: #{_lambda_.3} parent=5 // pred_check_branch
      %255 = sbr.rel (%p253) target = $region40
    $region39: #{_lambda_.3} parent=5 // pred_region
      // Predicated region
      $region41: #{_lambda_.3} parent=39 // pred_check
        %p256 = pneg %p35
      $region42: #{_lambda_.3} parent=39 // pred_check_branch
        %258 = sbr.rel (%p256) target = $region44
      $region43: #{_lambda_.3} parent=39 // pred_region
        %s259 = smul.u32 32, %s15
        %p260 = scmp.lt.s32.totalorder %s259, 63
        %s261 = scalar_select %p260, %s259, 63
        %s262 = smul.addr %s261, 8
        %s263 = scalar_lea.vmem %s0, %s262
        %s264 = smul.u32 32, %s15
      $region44: #{_lambda_.3} parent=39 // pred_fallthru
        _
    $region40: #{_lambda_.3} parent=5 // pred_fallthru
      _
    %p265 = scmp.le.s32.totalorder 1, %s15
    %p266 = scmp.lt.s32.totalorder %s15, 3
    %p267 = pnand %p265, %p266
    %p268 = pneg %p267
    // Predicated region
    $region45: #{_lambda_.3} parent=5 // pred_check
      _
    $region46: #{_lambda_.3} parent=5 // pred_check_branch
      %270 = sbr.rel (%p267) target = $region48
    $region47: #{_lambda_.3} parent=5 // pred_region
      %s271 = ssub.s32 %s15, 1
      %s272 = smul.u32 32, %s20
      %p273 = scmp.lt.s32.totalorder %s272, 63
      %s274 = scalar_select %p273, %s272, 63
      %s275 = smul.addr %s274, 8
      %s276 = scalar_lea.vmem %s0, %s275
      %p277 = pneg %p41
      %p278 = pneg %p38
      %p279 = pneg %p62
      %p280 = pneg %p59
      %p281 = pneg %p83
      %p282 = pneg %p80
      %p283 = pneg %p104
      %p284 = pneg %p101
      %p285 = pneg %p125
      %p286 = pneg %p122
      %p287 = pneg %p146
      %p288 = pneg %p143
      %p289 = pneg %p167
      %p290 = pneg %p164
      %p291 = pneg %p193
      %p292 = pneg %p190
      %s293 = smul.u32 32, %s20
      %p294 = scmp.lt.s32.totalorder %s293, 63
      %s295 = scalar_select %p294, %s293, 63
      %s296 = smul.addr %s295, 8
      %s297 = scalar_lea.vmem %s7, %s296
      %p298 = pneg %p219
      %p299 = pneg %p216
      %s300 = smul.u32 32, %s20
      %p301 = scmp.lt.s32.totalorder %s300, 63
      %s302 = scalar_select %p301, %s300, 63
      %s303 = smul.addr %s302, 8
      %s304 = scalar_lea.vmem %s8, %s303
      %s305 = smul.u32 32, %s20
      %p306 = scmp.lt.s32.totalorder %s305, 63
      %s307 = scalar_select %p306, %s305, 63
      %s308 = smul.addr %s307, 8
      %s309 = scalar_lea.vmem %s0, %s308
      %s310 = smul.u32 32, %s20
      %s311 = smul.u32 32, %s20
      %p312 = scmp.lt.s32.totalorder %s311, 63
      %s313 = scalar_select %p312, %s311, 63
      %s314 = smul.addr %s313, 8
      %s315 = scalar_lea.vmem %s7, %s314
      %s316 = smul.u32 32, %s20
      %s317 = smul.u32 32, %s20
      %p318 = scmp.lt.s32.totalorder %s317, 63
      %s319 = scalar_select %p318, %s317, 63
      %s320 = smul.addr %s319, 8
      %s321 = scalar_lea.vmem %s8, %s320
      %s322 = smul.u32 32, %s20
      %v323 = vld [vmem:[%s309] sm:$0xff]
      %v324 = vld [vmem:[%s309 + $0x8] sm:$0xff]
      %v325 = vld [vmem:[%s309 + $0x10] sm:$0xff]
      %v326 = vld [vmem:[%s309 + $0x18] sm:$0xff]
      %v327 = vld [vmem:[%s309 + $0x20] sm:$0xff]
      %v328 = vld [vmem:[%s309 + $0x28] sm:$0xff]
      %v329 = vld [vmem:[%s309 + $0x30] sm:$0xff]
      %v330 = vld [vmem:[%s309 + $0x38] sm:$0xff]
      %v331 = vld [vmem:[%s309 + $0x40] sm:$0xff]
      %v332 = vld [vmem:[%s309 + $0x48] sm:$0xff]
      %v333 = vld [vmem:[%s309 + $0x50] sm:$0xff]
      %v334 = vld [vmem:[%s309 + $0x58] sm:$0xff]
      %v335 = vld [vmem:[%s309 + $0x60] sm:$0xff]
      %v336 = vld [vmem:[%s309 + $0x68] sm:$0xff]
      %v337 = vld [vmem:[%s309 + $0x70] sm:$0xff]
      %v338 = vld [vmem:[%s309 + $0x78] sm:$0xff]
      %v339 = vld [vmem:[%s309 + $0x80] sm:$0xff]
      %v340 = vld [vmem:[%s309 + $0x88] sm:$0xff]
      %v341 = vld [vmem:[%s309 + $0x90] sm:$0xff]
      %v342 = vld [vmem:[%s309 + $0x98] sm:$0xff]
      %v343 = vld [vmem:[%s309 + $0xa0] sm:$0xff]
      %v344 = vld [vmem:[%s309 + $0xa8] sm:$0xff]
      %v345 = vld [vmem:[%s309 + $0xb0] sm:$0xff]
      %v346 = vld [vmem:[%s309 + $0xb8] sm:$0xff]
      %v347 = vld [vmem:[%s309 + $0xc0] sm:$0xff]
      %v348 = vld [vmem:[%s309 + $0xc8] sm:$0xff]
      %v349 = vld [vmem:[%s309 + $0xd0] sm:$0xff]
      %v350 = vld [vmem:[%s309 + $0xd8] sm:$0xff]
      %v351 = vld [vmem:[%s309 + $0xe0] sm:$0xff]
      %v352 = vld [vmem:[%s309 + $0xe8] sm:$0xff]
      %v353 = vld [vmem:[%s309 + $0xf0] sm:$0xff]
      %v354 = vld [vmem:[%s309 + $0xf8] sm:$0xff]
      %v355 = vld [vmem:[%s1] sm:$0xf]
      %vm356 = vcmask 31744
      %v358 = vsel %vm356, %v323, 0
      %v361 = vsel %vm356, %v324, 0
      %v364 = vsel %vm356, %v325, 0
      %v367 = vsel %vm356, %v326, 0
      %v370 = vsel %vm356, %v327, 0
      %v373 = vsel %vm356, %v328, 0
      %v376 = vsel %vm356, %v329, 0
      %v379 = vsel %vm356, %v330, 0
      %v382 = vsel %vm356, %v331, 0
      %v385 = vsel %vm356, %v332, 0
      %v388 = vsel %vm356, %v333, 0
      %v391 = vsel %vm356, %v334, 0
      %v394 = vsel %vm356, %v335, 0
      %v397 = vsel %vm356, %v336, 0
      %v400 = vsel %vm356, %v337, 0
      %v403 = vsel %vm356, %v338, 0
      %v406 = vsel %vm356, %v339, 0
      %v409 = vsel %vm356, %v340, 0
      %v412 = vsel %vm356, %v341, 0
      %v415 = vsel %vm356, %v342, 0
      %v418 = vsel %vm356, %v343, 0
      %v421 = vsel %vm356, %v344, 0
      %v424 = vsel %vm356, %v345, 0
      %v427 = vsel %vm356, %v346, 0
      %v430 = vsel %vm356, %v347, 0
      %v433 = vsel %vm356, %v348, 0
      %v436 = vsel %vm356, %v349, 0
      %v439 = vsel %vm356, %v350, 0
      %v442 = vsel %vm356, %v351, 0
      %v445 = vsel %vm356, %v352, 0
      %v448 = vsel %vm356, %v353, 0
      %v451 = vsel %vm356, %v354, 0
      %vm453 = vcmask 1043456
      %v455 = vsel %vm453, %v355, 0
      %457 = vmatprep.subr.mxu0 0.0
      %458 = vmatpush1.msra.mxu0 %v455
      %459 = vmatprep.subr.mxu0 0.0
      %460 = vmatpush1.msra.mxu0 0.0
      %461 = vmatprep.subr.mxu0 0.0
      %462 = vmatpush1.msra.mxu0 0.0
      %463 = vmatprep.subr.mxu0 0.0
      %464 = vmatpush1.msra.mxu0 0.0
      %465 = vmatprep.subr.mxu0 0.0
      %466 = vmatpush1.msra.mxu0 0.0
      %467 = vmatprep.subr.mxu0 0.0
      %468 = vmatpush1.msra.mxu0 0.0
      %469 = vmatprep.subr.mxu0 0.0
      %470 = vmatpush1.msra.mxu0 0.0
      %471 = vmatprep.subr.mxu0 0.0
      %472 = vmatpush1.msra.mxu0 0.0
      %473 = vmatprep.subr.mxu0 0.0
      %474 = vmatpush1.msra.mxu0 0.0
      %475 = vmatprep.subr.mxu0 0.0
      %476 = vmatpush1.msra.mxu0 0.0
      %477 = vmatprep.subr.mxu0 0.0
      %478 = vmatpush1.msra.mxu0 0.0
      %479 = vmatprep.subr.mxu0 0.0
      %480 = vmatpush1.msra.mxu0 0.0
      %481 = vmatprep.subr.mxu0 0.0
      %482 = vmatpush1.msra.mxu0 0.0
      %483 = vmatprep.subr.mxu0 0.0
      %484 = vmatpush1.msra.mxu0 0.0
      %485 = vmatprep.subr.mxu0 0.0
      %486 = vmatpush1.msra.mxu0 0.0
      %487 = vmatprep.subr.mxu0 0.0
      %488 = vmatpush1.msra.mxu0 0.0
      %489 = vmatprep.subr.mxu0 0.0
      %490 = vmatpush1.msra.mxu0 0.0
      %491 = vmatprep.subr.mxu0 0.0
      %492 = vmatpush1.msra.mxu0 0.0
      %493 = vmatprep.subr.mxu0 0.0
      %494 = vmatpush1.msra.mxu0 0.0
      %495 = vmatprep.subr.mxu0 0.0
      %496 = vmatpush1.msra.mxu0 0.0
      %497 = vmatprep.subr.mxu0 0.0
      %498 = vmatpush1.msra.mxu0 0.0
      %499 = vmatprep.subr.mxu0 0.0
      %500 = vmatpush1.msra.mxu0 0.0
      %501 = vmatprep.subr.mxu0 0.0
      %502 = vmatpush1.msra.mxu0 0.0
      %503 = vmatprep.subr.mxu0 0.0
      %504 = vmatpush1.msra.mxu0 0.0
      %505 = vmatprep.subr.mxu0 0.0
      %506 = vmatpush1.msra.mxu0 0.0
      %507 = vmatprep.subr.mxu0 0.0
      %508 = vmatpush1.msra.mxu0 0.0
      %509 = vmatprep.subr.mxu0 0.0
      %510 = vmatpush1.msra.mxu0 0.0
      %511 = vmatprep.subr.mxu0 0.0
      %512 = vmatpush1.msra.mxu0 0.0
      %513 = vmatprep.subr.mxu0 0.0
      %514 = vmatpush1.msra.mxu0 0.0
      %515 = vmatprep.subr.mxu0 0.0
      %516 = vmatpush1.msra.mxu0 0.0
      %517 = vmatprep.subr.mxu0 0.0
      %518 = vmatpush1.msra.mxu0 0.0
      %519 = vmatprep.subr.mxu0 0.0
      %520 = vmatpush1.msra.mxu0 0.0
      %521 = vmatprep.mubr.f32.mxu0 0.0
      %522 = vmatmul.mubr.f32.gmra.mrb[0].mxu0 %v358
      %v523 = vpop.f32.mrb[0].mxu0
      %v524 = vadd.f32 0.0, %v523
      %v525 = vpop.f32.mrb[0].mxu0
      %526 = vmatprep.mubr.f32.mxu0 0.0
      %527 = vmatmul.mubr.f32.gmra.mrb[0].mxu0 %v361
      %v528 = vpop.f32.mrb[0].mxu0
      %v529 = vadd.f32 0.0, %v528
      %v530 = vpop.f32.mrb[0].mxu0
      %531 = vmatprep.mubr.f32.mxu0 0.0
      %532 = vmatmul.mubr.f32.gmra.mrb[0].mxu0 %v364
      %v533 = vpop.f32.mrb[0].mxu0
      %v534 = vadd.f32 0.0, %v533
      %v535 = vpop.f32.mrb[0].mxu0
      %536 = vmatprep.mubr.f32.mxu0 0.0
      %537 = vmatmul.mubr.f32.gmra.mrb[0].mxu0 %v367
      %v538 = vpop.f32.mrb[0].mxu0
      %v539 = vadd.f32 0.0, %v538
      %v540 = vpop.f32.mrb[0].mxu0
      %541 = vmatprep.mubr.f32.mxu0 0.0
      %542 = vmatmul.mubr.f32.gmra.mrb[0].mxu0 %v370
      %v543 = vpop.f32.mrb[0].mxu0
      %v544 = vadd.f32 0.0, %v543
      %v545 = vpop.f32.mrb[0].mxu0
      %546 = vmatprep.mubr.f32.mxu0 0.0
      %547 = vmatmul.mubr.f32.gmra.mrb[0].mxu0 %v373
      %v548 = vpop.f32.mrb[0].mxu0
      %v549 = vadd.f32 0.0, %v548
      %v550 = vpop.f32.mrb[0].mxu0
      %551 = vmatprep.mubr.f32.mxu0 0.0
      %552 = vmatmul.mubr.f32.gmra.mrb[0].mxu0 %v376
      %v553 = vpop.f32.mrb[0].mxu0
      %v554 = vadd.f32 0.0, %v553
      %v555 = vpop.f32.mrb[0].mxu0
      %556 = vmatprep.mubr.f32.mxu0 0.0
      %557 = vmatmul.mubr.f32.gmra.mrb[0].mxu0 %v379
      %v558 = vpop.f32.mrb[0].mxu0
      %v559 = vadd.f32 0.0, %v558
      %v560 = vpop.f32.mrb[0].mxu0
      %561 = vmatprep.mubr.f32.mxu0 0.0
      %562 = vmatmul.mubr.f32.gmra.mrb[0].mxu0 %v382
      %v563 = vpop.f32.mrb[0].mxu0
      %v564 = vadd.f32 0.0, %v563
      %v565 = vpop.f32.mrb[0].mxu0
      %566 = vmatprep.mubr.f32.mxu0 0.0
      %567 = vmatmul.mubr.f32.gmra.mrb[0].mxu0 %v385
      %v568 = vpop.f32.mrb[0].mxu0
      %v569 = vadd.f32 0.0, %v568
      %v570 = vpop.f32.mrb[0].mxu0
      %571 = vmatprep.mubr.f32.mxu0 0.0
      %572 = vmatmul.mubr.f32.gmra.mrb[0].mxu0 %v388
      %v573 = vpop.f32.mrb[0].mxu0
      %v574 = vadd.f32 0.0, %v573
      %v575 = vpop.f32.mrb[0].mxu0
      %576 = vmatprep.mubr.f32.mxu0 0.0
      %577 = vmatmul.mubr.f32.gmra.mrb[0].mxu0 %v391
      %v578 = vpop.f32.mrb[0].mxu0
      %v579 = vadd.f32 0.0, %v578
      %v580 = vpop.f32.mrb[0].mxu0
      %581 = vmatprep.mubr.f32.mxu0 0.0
      %582 = vmatmul.mubr.f32.gmra.mrb[0].mxu0 %v394
      %v583 = vpop.f32.mrb[0].mxu0
      %v584 = vadd.f32 0.0, %v583
      %v585 = vpop.f32.mrb[0].mxu0
      %586 = vmatprep.mubr.f32.mxu0 0.0
      %587 = vmatmul.mubr.f32.gmra.mrb[0].mxu0 %v397
      %v588 = vpop.f32.mrb[0].mxu0
      %v589 = vadd.f32 0.0, %v588
      %v590 = vpop.f32.mrb[0].mxu0
      %591 = vmatprep.mubr.f32.mxu0 0.0
      %592 = vmatmul.mubr.f32.gmra.mrb[0].mxu0 %v400
      %v593 = vpop.f32.mrb[0].mxu0
      %v594 = vadd.f32 0.0, %v593
      %v595 = vpop.f32.mrb[0].mxu0
      %596 = vmatprep.mubr.f32.mxu0 0.0
      %597 = vmatmul.mubr.f32.gmra.mrb[0].mxu0 %v403
      %v598 = vpop.f32.mrb[0].mxu0
      %v599 = vadd.f32 0.0, %v598
      %v600 = vpop.f32.mrb[0].mxu0
      %601 = vmatprep.mubr.f32.mxu0 0.0
      %602 = vmatmul.mubr.f32.gmra.mrb[0].mxu0 %v406
      %v603 = vpop.f32.mrb[0].mxu0
      %v604 = vadd.f32 0.0, %v603
      %v605 = vpop.f32.mrb[0].mxu0
      %606 = vmatprep.mubr.f32.mxu0 0.0
      %607 = vmatmul.mubr.f32.gmra.mrb[0].mxu0 %v409
      %v608 = vpop.f32.mrb[0].mxu0
      %v609 = vadd.f32 0.0, %v608
      %v610 = vpop.f32.mrb[0].mxu0
      %611 = vmatprep.mubr.f32.mxu0 0.0
      %612 = vmatmul.mubr.f32.gmra.mrb[0].mxu0 %v412
      %v613 = vpop.f32.mrb[0].mxu0
      %v614 = vadd.f32 0.0, %v613
      %v615 = vpop.f32.mrb[0].mxu0
      %616 = vmatprep.mubr.f32.mxu0 0.0
      %617 = vmatmul.mubr.f32.gmra.mrb[0].mxu0 %v415
      %v618 = vpop.f32.mrb[0].mxu0
      %v619 = vadd.f32 0.0, %v618
      %v620 = vpop.f32.mrb[0].mxu0
      %621 = vmatprep.mubr.f32.mxu0 0.0
      %622 = vmatmul.mubr.f32.gmra.mrb[0].mxu0 %v418
      %v623 = vpop.f32.mrb[0].mxu0
      %v624 = vadd.f32 0.0, %v623
      %v625 = vpop.f32.mrb[0].mxu0
      %626 = vmatprep.mubr.f32.mxu0 0.0
      %627 = vmatmul.mubr.f32.gmra.mrb[0].mxu0 %v421
      %v628 = vpop.f32.mrb[0].mxu0
      %v629 = vadd.f32 0.0, %v628
      %v630 = vpop.f32.mrb[0].mxu0
      %631 = vmatprep.mubr.f32.mxu0 0.0
      %632 = vmatmul.mubr.f32.gmra.mrb[0].mxu0 %v424
      %v633 = vpop.f32.mrb[0].mxu0
      %v634 = vadd.f32 0.0, %v633
      %v635 = vpop.f32.mrb[0].mxu0
      %636 = vmatprep.mubr.f32.mxu0 0.0
      %637 = vmatmul.mubr.f32.gmra.mrb[0].mxu0 %v427
      %v638 = vpop.f32.mrb[0].mxu0
      %v639 = vadd.f32 0.0, %v638
      %v640 = vpop.f32.mrb[0].mxu0
      %641 = vmatprep.mubr.f32.mxu0 0.0
      %642 = vmatmul.mubr.f32.gmra.mrb[0].mxu0 %v430
      %v643 = vpop.f32.mrb[0].mxu0
      %v644 = vadd.f32 0.0, %v643
      %v645 = vpop.f32.mrb[0].mxu0
      %646 = vmatprep.mubr.f32.mxu0 0.0
      %647 = vmatmul.mubr.f32.gmra.mrb[0].mxu0 %v433
      %v648 = vpop.f32.mrb[0].mxu0
      %v649 = vadd.f32 0.0, %v648
      %v650 = vpop.f32.mrb[0].mxu0
      %651 = vmatprep.mubr.f32.mxu0 0.0
      %652 = vmatmul.mubr.f32.gmra.mrb[0].mxu0 %v436
      %v653 = vpop.f32.mrb[0].mxu0
      %v654 = vadd.f32 0.0, %v653
      %v655 = vpop.f32.mrb[0].mxu0
      %656 = vmatprep.mubr.f32.mxu0 0.0
      %657 = vmatmul.mubr.f32.gmra.mrb[0].mxu0 %v439
      %v658 = vpop.f32.mrb[0].mxu0
      %v659 = vadd.f32 0.0, %v658
      %v660 = vpop.f32.mrb[0].mxu0
      %661 = vmatprep.mubr.f32.mxu0 0.0
      %662 = vmatmul.mubr.f32.gmra.mrb[0].mxu0 %v442
      %v663 = vpop.f32.mrb[0].mxu0
      %v664 = vadd.f32 0.0, %v663
      %v665 = vpop.f32.mrb[0].mxu0
      %666 = vmatprep.mubr.f32.mxu0 0.0
      %667 = vmatmul.mubr.f32.gmra.mrb[0].mxu0 %v445
      %v668 = vpop.f32.mrb[0].mxu0
      %v669 = vadd.f32 0.0, %v668
      %v670 = vpop.f32.mrb[0].mxu0
      %671 = vmatprep.mubr.f32.mxu0 0.0
      %672 = vmatmul.mubr.f32.gmra.mrb[0].mxu0 %v448
      %v673 = vpop.f32.mrb[0].mxu0
      %v674 = vadd.f32 0.0, %v673
      %v675 = vpop.f32.mrb[0].mxu0
      %676 = vmatprep.mubr.f32.mxu0 0.0
      %677 = vmatmul.mubr.f32.gmra.mrb[0].mxu0 %v451
      %v678 = vpop.f32.mrb[0].mxu0
      %v679 = vadd.f32 0.0, %v678
      %v680 = vpop.f32.mrb[0].mxu0
      %681 = vdwg.mxu0
      %v682 = vld [vmem:[%s2] sm:$0x1]
      %v684 = vlaneseq
      %v685 = vshrl.u32 %v684, 7
      %v686 = vsub.s32 0, %v685
      %v687 = vrot.slane %v682, %v686
      %v689 = vmul.f32 %v524, %v687
      %v690 = vmul.f32 %v529, %v687
      %v691 = vmul.f32 %v534, %v687
      %v692 = vmul.f32 %v539, %v687
      %v693 = vmul.f32 %v544, %v687
      %v694 = vmul.f32 %v549, %v687
      %v695 = vmul.f32 %v554, %v687
      %v696 = vmul.f32 %v559, %v687
      %v697 = vmul.f32 %v564, %v687
      %v698 = vmul.f32 %v569, %v687
      %v699 = vmul.f32 %v574, %v687
      %v700 = vmul.f32 %v579, %v687
      %v701 = vmul.f32 %v584, %v687
      %v702 = vmul.f32 %v589, %v687
      %v703 = vmul.f32 %v594, %v687
      %v704 = vmul.f32 %v599, %v687
      %v705 = vmul.f32 %v604, %v687
      %v706 = vmul.f32 %v609, %v687
      %v707 = vmul.f32 %v614, %v687
      %v708 = vmul.f32 %v619, %v687
      %v709 = vmul.f32 %v624, %v687
      %v710 = vmul.f32 %v629, %v687
      %v711 = vmul.f32 %v634, %v687
      %v712 = vmul.f32 %v639, %v687
      %v713 = vmul.f32 %v644, %v687
      %v714 = vmul.f32 %v649, %v687
      %v715 = vmul.f32 %v654, %v687
      %v716 = vmul.f32 %v659, %v687
      %v717 = vmul.f32 %v664, %v687
      %v718 = vmul.f32 %v669, %v687
      %v719 = vmul.f32 %v674, %v687
      %v720 = vmul.f32 %v679, %v687
      %v721 = vld [vmem:[%s3] sm:$0x1]
      %v723 = vlaneseq
      %v724 = vshrl.u32 %v723, 7
      %v725 = vsub.s32 0, %v724
      %v726 = vrot.slane %v721, %v725
      %v728 = vadd.f32 %v689, %v726
      %v729 = vadd.f32 %v690, %v726
      %v730 = vadd.f32 %v691, %v726
      %v731 = vadd.f32 %v692, %v726
      %v732 = vadd.f32 %v693, %v726
      %v733 = vadd.f32 %v694, %v726
      %v734 = vadd.f32 %v695, %v726
      %v735 = vadd.f32 %v696, %v726
      %v736 = vadd.f32 %v697, %v726
      %v737 = vadd.f32 %v698, %v726
      %v738 = vadd.f32 %v699, %v726
      %v739 = vadd.f32 %v700, %v726
      %v740 = vadd.f32 %v701, %v726
      %v741 = vadd.f32 %v702, %v726
      %v742 = vadd.f32 %v703, %v726
      %v743 = vadd.f32 %v704, %v726
      %v744 = vadd.f32 %v705, %v726
      %v745 = vadd.f32 %v706, %v726
      %v746 = vadd.f32 %v707, %v726
      %v747 = vadd.f32 %v708, %v726
      %v748 = vadd.f32 %v709, %v726
      %v749 = vadd.f32 %v710, %v726
      %v750 = vadd.f32 %v711, %v726
      %v751 = vadd.f32 %v712, %v726
      %v752 = vadd.f32 %v713, %v726
      %v753 = vadd.f32 %v714, %v726
      %v754 = vadd.f32 %v715, %v726
      %v755 = vadd.f32 %v716, %v726
      %v756 = vadd.f32 %v717, %v726
      %v757 = vadd.f32 %v718, %v726
      %v758 = vadd.f32 %v719, %v726
      %v759 = vadd.f32 %v720, %v726
      %v760 = vxor.u32 %v728, 2147483648
      %v761 = vxor.u32 %v729, 2147483648
      %v762 = vxor.u32 %v730, 2147483648
      %v763 = vxor.u32 %v731, 2147483648
      %v764 = vxor.u32 %v732, 2147483648
      %v765 = vxor.u32 %v733, 2147483648
      %v766 = vxor.u32 %v734, 2147483648
      %v767 = vxor.u32 %v735, 2147483648
      %v768 = vxor.u32 %v736, 2147483648
      %v769 = vxor.u32 %v737, 2147483648
      %v770 = vxor.u32 %v738, 2147483648
      %v771 = vxor.u32 %v739, 2147483648
      %v772 = vxor.u32 %v740, 2147483648
      %v773 = vxor.u32 %v741, 2147483648
      %v774 = vxor.u32 %v742, 2147483648
      %v775 = vxor.u32 %v743, 2147483648
      %v776 = vxor.u32 %v744, 2147483648
      %v777 = vxor.u32 %v745, 2147483648
      %v778 = vxor.u32 %v746, 2147483648
      %v779 = vxor.u32 %v747, 2147483648
      %v780 = vxor.u32 %v748, 2147483648
      %v781 = vxor.u32 %v749, 2147483648
      %v782 = vxor.u32 %v750, 2147483648
      %v783 = vxor.u32 %v751, 2147483648
      %v784 = vxor.u32 %v752, 2147483648
      %v785 = vxor.u32 %v753, 2147483648
      %v786 = vxor.u32 %v754, 2147483648
      %v787 = vxor.u32 %v755, 2147483648
      %v788 = vxor.u32 %v756, 2147483648
      %v789 = vxor.u32 %v757, 2147483648
      %v790 = vxor.u32 %v758, 2147483648
      %v791 = vxor.u32 %v759, 2147483648
      %v792 = vmul.f32 %v760, 1.442695
      %v793 = vpow.pop %v792
      %v794 = vmul.f32 %v761, 1.442695
      %v795 = vpow.pop %v794
      %v796 = vmul.f32 %v762, 1.442695
      %v797 = vpow.pop %v796
      %v798 = vmul.f32 %v763, 1.442695
      %v799 = vpow.pop %v798
      %v800 = vmul.f32 %v764, 1.442695
      %v801 = vpow.pop %v800
      %v802 = vmul.f32 %v765, 1.442695
      %v803 = vpow.pop %v802
      %v804 = vmul.f32 %v766, 1.442695
      %v805 = vpow.pop %v804
      %v806 = vmul.f32 %v767, 1.442695
      %v807 = vpow.pop %v806
      %v808 = vmul.f32 %v768, 1.442695
      %v809 = vpow.pop %v808
      %v810 = vmul.f32 %v769, 1.442695
      %v811 = vpow.pop %v810
      %v812 = vmul.f32 %v770, 1.442695
      %v813 = vpow.pop %v812
      %v814 = vmul.f32 %v771, 1.442695
      %v815 = vpow.pop %v814
      %v816 = vmul.f32 %v772, 1.442695
      %v817 = vpow.pop %v816
      %v818 = vmul.f32 %v773, 1.442695
      %v819 = vpow.pop %v818
      %v820 = vmul.f32 %v774, 1.442695
      %v821 = vpow.pop %v820
      %v822 = vmul.f32 %v775, 1.442695
      %v823 = vpow.pop %v822
      %v824 = vmul.f32 %v776, 1.442695
      %v825 = vpow.pop %v824
      %v826 = vmul.f32 %v777, 1.442695
      %v827 = vpow.pop %v826
      %v828 = vmul.f32 %v778, 1.442695
      %v829 = vpow.pop %v828
      %v830 = vmul.f32 %v779, 1.442695
      %v831 = vpow.pop %v830
      %v832 = vmul.f32 %v780, 1.442695
      %v833 = vpow.pop %v832
      %v834 = vmul.f32 %v781, 1.442695
      %v835 = vpow.pop %v834
      %v836 = vmul.f32 %v782, 1.442695
      %v837 = vpow.pop %v836
      %v838 = vmul.f32 %v783, 1.442695
      %v839 = vpow.pop %v838
      %v840 = vmul.f32 %v784, 1.442695
      %v841 = vpow.pop %v840
      %v842 = vmul.f32 %v785, 1.442695
      %v843 = vpow.pop %v842
      %v844 = vmul.f32 %v786, 1.442695
      %v845 = vpow.pop %v844
      %v846 = vmul.f32 %v787, 1.442695
      %v847 = vpow.pop %v846
      %v848 = vmul.f32 %v788, 1.442695
      %v849 = vpow.pop %v848
      %v850 = vmul.f32 %v789, 1.442695
      %v851 = vpow.pop %v850
      %v852 = vmul.f32 %v790, 1.442695
      %v853 = vpow.pop %v852
      %v854 = vmul.f32 %v791, 1.442695
      %v855 = vpow.pop %v854
      %v856 = vadd.f32 %v793, 1.0
      %v857 = vadd.f32 %v795, 1.0
      %v858 = vadd.f32 %v797, 1.0
      %v859 = vadd.f32 %v799, 1.0
      %v860 = vadd.f32 %v801, 1.0
      %v861 = vadd.f32 %v803, 1.0
      %v862 = vadd.f32 %v805, 1.0
      %v863 = vadd.f32 %v807, 1.0
      %v864 = vadd.f32 %v809, 1.0
      %v865 = vadd.f32 %v811, 1.0
      %v866 = vadd.f32 %v813, 1.0
      %v867 = vadd.f32 %v815, 1.0
      %v868 = vadd.f32 %v817, 1.0
      %v869 = vadd.f32 %v819, 1.0
      %v870 = vadd.f32 %v821, 1.0
      %v871 = vadd.f32 %v823, 1.0
      %v872 = vadd.f32 %v825, 1.0
      %v873 = vadd.f32 %v827, 1.0
      %v874 = vadd.f32 %v829, 1.0
      %v875 = vadd.f32 %v831, 1.0
      %v876 = vadd.f32 %v833, 1.0
      %v877 = vadd.f32 %v835, 1.0
      %v878 = vadd.f32 %v837, 1.0
      %v879 = vadd.f32 %v839, 1.0
      %v880 = vadd.f32 %v841, 1.0
      %v881 = vadd.f32 %v843, 1.0
      %v882 = vadd.f32 %v845, 1.0
      %v883 = vadd.f32 %v847, 1.0
      %v884 = vadd.f32 %v849, 1.0
      %v885 = vadd.f32 %v851, 1.0
      %v886 = vadd.f32 %v853, 1.0
      %v887 = vadd.f32 %v855, 1.0
      %v888 = vrcp.pop %v856
      %v889 = vmul.f32 1.0, %v888
      %v890 = vrcp.pop %v857
      %v891 = vmul.f32 1.0, %v890
      %v892 = vrcp.pop %v858
      %v893 = vmul.f32 1.0, %v892
      %v894 = vrcp.pop %v859
      %v895 = vmul.f32 1.0, %v894
      %v896 = vrcp.pop %v860
      %v897 = vmul.f32 1.0, %v896
      %v898 = vrcp.pop %v861
      %v899 = vmul.f32 1.0, %v898
      %v900 = vrcp.pop %v862
      %v901 = vmul.f32 1.0, %v900
      %v902 = vrcp.pop %v863
      %v903 = vmul.f32 1.0, %v902
      %v904 = vrcp.pop %v864
      %v905 = vmul.f32 1.0, %v904
      %v906 = vrcp.pop %v865
      %v907 = vmul.f32 1.0, %v906
      %v908 = vrcp.pop %v866
      %v909 = vmul.f32 1.0, %v908
      %v910 = vrcp.pop %v867
      %v911 = vmul.f32 1.0, %v910
      %v912 = vrcp.pop %v868
      %v913 = vmul.f32 1.0, %v912
      %v914 = vrcp.pop %v869
      %v915 = vmul.f32 1.0, %v914
      %v916 = vrcp.pop %v870
      %v917 = vmul.f32 1.0, %v916
      %v918 = vrcp.pop %v871
      %v919 = vmul.f32 1.0, %v918
      %v920 = vrcp.pop %v872
      %v921 = vmul.f32 1.0, %v920
      %v922 = vrcp.pop %v873
      %v923 = vmul.f32 1.0, %v922
      %v924 = vrcp.pop %v874
      %v925 = vmul.f32 1.0, %v924
      %v926 = vrcp.pop %v875
      %v927 = vmul.f32 1.0, %v926
      %v928 = vrcp.pop %v876
      %v929 = vmul.f32 1.0, %v928
      %v930 = vrcp.pop %v877
      %v931 = vmul.f32 1.0, %v930
      %v932 = vrcp.pop %v878
      %v933 = vmul.f32 1.0, %v932
      %v934 = vrcp.pop %v879
      %v935 = vmul.f32 1.0, %v934
      %v936 = vrcp.pop %v880
      %v937 = vmul.f32 1.0, %v936
      %v938 = vrcp.pop %v881
      %v939 = vmul.f32 1.0, %v938
      %v940 = vrcp.pop %v882
      %v941 = vmul.f32 1.0, %v940
      %v942 = vrcp.pop %v883
      %v943 = vmul.f32 1.0, %v942
      %v944 = vrcp.pop %v884
      %v945 = vmul.f32 1.0, %v944
      %v946 = vrcp.pop %v885
      %v947 = vmul.f32 1.0, %v946
      %v948 = vrcp.pop %v886
      %v949 = vmul.f32 1.0, %v948
      %v950 = vrcp.pop %v887
      %v951 = vmul.f32 1.0, %v950
      %v952 = vmul.f32 %v728, %v889
      %v953 = vmul.f32 %v729, %v891
      %v954 = vmul.f32 %v730, %v893
      %v955 = vmul.f32 %v731, %v895
      %v956 = vmul.f32 %v732, %v897
      %v957 = vmul.f32 %v733, %v899
      %v958 = vmul.f32 %v734, %v901
      %v959 = vmul.f32 %v735, %v903
      %v960 = vmul.f32 %v736, %v905
      %v961 = vmul.f32 %v737, %v907
      %v962 = vmul.f32 %v738, %v909
      %v963 = vmul.f32 %v739, %v911
      %v964 = vmul.f32 %v740, %v913
      %v965 = vmul.f32 %v741, %v915
      %v966 = vmul.f32 %v742, %v917
      %v967 = vmul.f32 %v743, %v919
      %v968 = vmul.f32 %v744, %v921
      %v969 = vmul.f32 %v745, %v923
      %v970 = vmul.f32 %v746, %v925
      %v971 = vmul.f32 %v747, %v927
      %v972 = vmul.f32 %v748, %v929
      %v973 = vmul.f32 %v749, %v931
      %v974 = vmul.f32 %v750, %v933
      %v975 = vmul.f32 %v751, %v935
      %v976 = vmul.f32 %v752, %v937
      %v977 = vmul.f32 %v753, %v939
      %v978 = vmul.f32 %v754, %v941
      %v979 = vmul.f32 %v755, %v943
      %v980 = vmul.f32 %v756, %v945
      %v981 = vmul.f32 %v757, %v947
      %v982 = vmul.f32 %v758, %v949
      %v983 = vmul.f32 %v759, %v951
      %984 = vst.msk [vmem:[%s315] sm:$0xff] %vm356, %v952
      %985 = vst.msk [vmem:[%s315 + $0x8] sm:$0xff] %vm356, %v953
      %986 = vst.msk [vmem:[%s315 + $0x10] sm:$0xff] %vm356, %v954
      %987 = vst.msk [vmem:[%s315 + $0x18] sm:$0xff] %vm356, %v955
      %988 = vst.msk [vmem:[%s315 + $0x20] sm:$0xff] %vm356, %v956
      %989 = vst.msk [vmem:[%s315 + $0x28] sm:$0xff] %vm356, %v957
      %990 = vst.msk [vmem:[%s315 + $0x30] sm:$0xff] %vm356, %v958
      %991 = vst.msk [vmem:[%s315 + $0x38] sm:$0xff] %vm356, %v959
      %992 = vst.msk [vmem:[%s315 + $0x40] sm:$0xff] %vm356, %v960
      %993 = vst.msk [vmem:[%s315 + $0x48] sm:$0xff] %vm356, %v961
      %994 = vst.msk [vmem:[%s315 + $0x50] sm:$0xff] %vm356, %v962
      %995 = vst.msk [vmem:[%s315 + $0x58] sm:$0xff] %vm356, %v963
      %996 = vst.msk [vmem:[%s315 + $0x60] sm:$0xff] %vm356, %v964
      %997 = vst.msk [vmem:[%s315 + $0x68] sm:$0xff] %vm356, %v965
      %998 = vst.msk [vmem:[%s315 + $0x70] sm:$0xff] %vm356, %v966
      %999 = vst.msk [vmem:[%s315 + $0x78] sm:$0xff] %vm356, %v967
      %1000 = vst.msk [vmem:[%s315 + $0x80] sm:$0xff] %vm356, %v968
      %1001 = vst.msk [vmem:[%s315 + $0x88] sm:$0xff] %vm356, %v969
      %1002 = vst.msk [vmem:[%s315 + $0x90] sm:$0xff] %vm356, %v970
      %1003 = vst.msk [vmem:[%s315 + $0x98] sm:$0xff] %vm356, %v971
      %1004 = vst.msk [vmem:[%s315 + $0xa0] sm:$0xff] %vm356, %v972
      %1005 = vst.msk [vmem:[%s315 + $0xa8] sm:$0xff] %vm356, %v973
      %1006 = vst.msk [vmem:[%s315 + $0xb0] sm:$0xff] %vm356, %v974
      %1007 = vst.msk [vmem:[%s315 + $0xb8] sm:$0xff] %vm356, %v975
      %1008 = vst.msk [vmem:[%s315 + $0xc0] sm:$0xff] %vm356, %v976
      %1009 = vst.msk [vmem:[%s315 + $0xc8] sm:$0xff] %vm356, %v977
      %1010 = vst.msk [vmem:[%s315 + $0xd0] sm:$0xff] %vm356, %v978
      %1011 = vst.msk [vmem:[%s315 + $0xd8] sm:$0xff] %vm356, %v979
      %1012 = vst.msk [vmem:[%s315 + $0xe0] sm:$0xff] %vm356, %v980
      %1013 = vst.msk [vmem:[%s315 + $0xe8] sm:$0xff] %vm356, %v981
      %1014 = vst.msk [vmem:[%s315 + $0xf0] sm:$0xff] %vm356, %v982
      %1015 = vst.msk [vmem:[%s315 + $0xf8] sm:$0xff] %vm356, %v983
      %v1016 = vld [vmem:[%s4] sm:$0xf]
      %v1018 = vsel %vm453, %v1016, 0
      %1020 = vmatprep.subr.mxu0 0.0
      %1021 = vmatpush1.msra.mxu0 %v1018
      %1022 = vmatprep.subr.mxu0 0.0
      %1023 = vmatpush1.msra.mxu0 0.0
      %1024 = vmatprep.subr.mxu0 0.0
      %1025 = vmatpush1.msra.mxu0 0.0
      %1026 = vmatprep.subr.mxu0 0.0
      %1027 = vmatpush1.msra.mxu0 0.0
      %1028 = vmatprep.subr.mxu0 0.0
      %1029 = vmatpush1.msra.mxu0 0.0
      %1030 = vmatprep.subr.mxu0 0.0
      %1031 = vmatpush1.msra.mxu0 0.0
      %1032 = vmatprep.subr.mxu0 0.0
      %1033 = vmatpush1.msra.mxu0 0.0
      %1034 = vmatprep.subr.mxu0 0.0
      %1035 = vmatpush1.msra.mxu0 0.0
      %1036 = vmatprep.subr.mxu0 0.0
      %1037 = vmatpush1.msra.mxu0 0.0
      %1038 = vmatprep.subr.mxu0 0.0
      %1039 = vmatpush1.msra.mxu0 0.0
      %1040 = vmatprep.subr.mxu0 0.0
      %1041 = vmatpush1.msra.mxu0 0.0
      %1042 = vmatprep.subr.mxu0 0.0
      %1043 = vmatpush1.msra.mxu0 0.0
      %1044 = vmatprep.subr.mxu0 0.0
      %1045 = vmatpush1.msra.mxu0 0.0
      %1046 = vmatprep.subr.mxu0 0.0
      %1047 = vmatpush1.msra.mxu0 0.0
      %1048 = vmatprep.subr.mxu0 0.0
      %1049 = vmatpush1.msra.mxu0 0.0
      %1050 = vmatprep.subr.mxu0 0.0
      %1051 = vmatpush1.msra.mxu0 0.0
      %1052 = vmatprep.subr.mxu0 0.0
      %1053 = vmatpush1.msra.mxu0 0.0
      %1054 = vmatprep.subr.mxu0 0.0
      %1055 = vmatpush1.msra.mxu0 0.0
      %1056 = vmatprep.subr.mxu0 0.0
      %1057 = vmatpush1.msra.mxu0 0.0
      %1058 = vmatprep.subr.mxu0 0.0
      %1059 = vmatpush1.msra.mxu0 0.0
      %1060 = vmatprep.subr.mxu0 0.0
      %1061 = vmatpush1.msra.mxu0 0.0
      %1062 = vmatprep.subr.mxu0 0.0
      %1063 = vmatpush1.msra.mxu0 0.0
      %1064 = vmatprep.subr.mxu0 0.0
      %1065 = vmatpush1.msra.mxu0 0.0
      %1066 = vmatprep.subr.mxu0 0.0
      %1067 = vmatpush1.msra.mxu0 0.0
      %1068 = vmatprep.subr.mxu0 0.0
      %1069 = vmatpush1.msra.mxu0 0.0
      %1070 = vmatprep.subr.mxu0 0.0
      %1071 = vmatpush1.msra.mxu0 0.0
      %1072 = vmatprep.subr.mxu0 0.0
      %1073 = vmatpush1.msra.mxu0 0.0
      %1074 = vmatprep.subr.mxu0 0.0
      %1075 = vmatpush1.msra.mxu0 0.0
      %1076 = vmatprep.subr.mxu0 0.0
      %1077 = vmatpush1.msra.mxu0 0.0
      %1078 = vmatprep.subr.mxu0 0.0
      %1079 = vmatpush1.msra.mxu0 0.0
      %1080 = vmatprep.subr.mxu0 0.0
      %1081 = vmatpush1.msra.mxu0 0.0
      %1082 = vmatprep.subr.mxu0 0.0
      %1083 = vmatpush1.msra.mxu0 0.0
      %1084 = vmatprep.mubr.f32.mxu0 0.0
      %1085 = vmatmul.mubr.f32.gmra.mrb[0].mxu0 %v358
      %v1086 = vpop.f32.mrb[0].mxu0
      %v1087 = vadd.f32 0.0, %v1086
      %v1088 = vpop.f32.mrb[0].mxu0
      %1089 = vmatprep.mubr.f32.mxu0 0.0
      %1090 = vmatmul.mubr.f32.gmra.mrb[0].mxu0 %v361
      %v1091 = vpop.f32.mrb[0].mxu0
      %v1092 = vadd.f32 0.0, %v1091
      %v1093 = vpop.f32.mrb[0].mxu0
      %1094 = vmatprep.mubr.f32.mxu0 0.0
      %1095 = vmatmul.mubr.f32.gmra.mrb[0].mxu0 %v364
      %v1096 = vpop.f32.mrb[0].mxu0
      %v1097 = vadd.f32 0.0, %v1096
      %v1098 = vpop.f32.mrb[0].mxu0
      %1099 = vmatprep.mubr.f32.mxu0 0.0
      %1100 = vmatmul.mubr.f32.gmra.mrb[0].mxu0 %v367
      %v1101 = vpop.f32.mrb[0].mxu0
      %v1102 = vadd.f32 0.0, %v1101
      %v1103 = vpop.f32.mrb[0].mxu0
      %1104 = vmatprep.mubr.f32.mxu0 0.0
      %1105 = vmatmul.mubr.f32.gmra.mrb[0].mxu0 %v370
      %v1106 = vpop.f32.mrb[0].mxu0
      %v1107 = vadd.f32 0.0, %v1106
      %v1108 = vpop.f32.mrb[0].mxu0
      %1109 = vmatprep.mubr.f32.mxu0 0.0
      %1110 = vmatmul.mubr.f32.gmra.mrb[0].mxu0 %v373
      %v1111 = vpop.f32.mrb[0].mxu0
      %v1112 = vadd.f32 0.0, %v1111
      %v1113 = vpop.f32.mrb[0].mxu0
      %1114 = vmatprep.mubr.f32.mxu0 0.0
      %1115 = vmatmul.mubr.f32.gmra.mrb[0].mxu0 %v376
      %v1116 = vpop.f32.mrb[0].mxu0
      %v1117 = vadd.f32 0.0, %v1116
      %v1118 = vpop.f32.mrb[0].mxu0
      %1119 = vmatprep.mubr.f32.mxu0 0.0
      %1120 = vmatmul.mubr.f32.gmra.mrb[0].mxu0 %v379
      %v1121 = vpop.f32.mrb[0].mxu0
      %v1122 = vadd.f32 0.0, %v1121
      %v1123 = vpop.f32.mrb[0].mxu0
      %1124 = vmatprep.mubr.f32.mxu0 0.0
      %1125 = vmatmul.mubr.f32.gmra.mrb[0].mxu0 %v382
      %v1126 = vpop.f32.mrb[0].mxu0
      %v1127 = vadd.f32 0.0, %v1126
      %v1128 = vpop.f32.mrb[0].mxu0
      %1129 = vmatprep.mubr.f32.mxu0 0.0
      %1130 = vmatmul.mubr.f32.gmra.mrb[0].mxu0 %v385
      %v1131 = vpop.f32.mrb[0].mxu0
      %v1132 = vadd.f32 0.0, %v1131
      %v1133 = vpop.f32.mrb[0].mxu0
      %1134 = vmatprep.mubr.f32.mxu0 0.0
      %1135 = vmatmul.mubr.f32.gmra.mrb[0].mxu0 %v388
      %v1136 = vpop.f32.mrb[0].mxu0
      %v1137 = vadd.f32 0.0, %v1136
      %v1138 = vpop.f32.mrb[0].mxu0
      %1139 = vmatprep.mubr.f32.mxu0 0.0
      %1140 = vmatmul.mubr.f32.gmra.mrb[0].mxu0 %v391
      %v1141 = vpop.f32.mrb[0].mxu0
      %v1142 = vadd.f32 0.0, %v1141
      %v1143 = vpop.f32.mrb[0].mxu0
      %1144 = vmatprep.mubr.f32.mxu0 0.0
      %1145 = vmatmul.mubr.f32.gmra.mrb[0].mxu0 %v394
      %v1146 = vpop.f32.mrb[0].mxu0
      %v1147 = vadd.f32 0.0, %v1146
      %v1148 = vpop.f32.mrb[0].mxu0
      %1149 = vmatprep.mubr.f32.mxu0 0.0
      %1150 = vmatmul.mubr.f32.gmra.mrb[0].mxu0 %v397
      %v1151 = vpop.f32.mrb[0].mxu0
      %v1152 = vadd.f32 0.0, %v1151
      %v1153 = vpop.f32.mrb[0].mxu0
      %1154 = vmatprep.mubr.f32.mxu0 0.0
      %1155 = vmatmul.mubr.f32.gmra.mrb[0].mxu0 %v400
      %v1156 = vpop.f32.mrb[0].mxu0
      %v1157 = vadd.f32 0.0, %v1156
      %v1158 = vpop.f32.mrb[0].mxu0
      %1159 = vmatprep.mubr.f32.mxu0 0.0
      %1160 = vmatmul.mubr.f32.gmra.mrb[0].mxu0 %v403
      %v1161 = vpop.f32.mrb[0].mxu0
      %v1162 = vadd.f32 0.0, %v1161
      %v1163 = vpop.f32.mrb[0].mxu0
      %1164 = vmatprep.mubr.f32.mxu0 0.0
      %1165 = vmatmul.mubr.f32.gmra.mrb[0].mxu0 %v406
      %v1166 = vpop.f32.mrb[0].mxu0
      %v1167 = vadd.f32 0.0, %v1166
      %v1168 = vpop.f32.mrb[0].mxu0
      %1169 = vmatprep.mubr.f32.mxu0 0.0
      %1170 = vmatmul.mubr.f32.gmra.mrb[0].mxu0 %v409
      %v1171 = vpop.f32.mrb[0].mxu0
      %v1172 = vadd.f32 0.0, %v1171
      %v1173 = vpop.f32.mrb[0].mxu0
      %1174 = vmatprep.mubr.f32.mxu0 0.0
      %1175 = vmatmul.mubr.f32.gmra.mrb[0].mxu0 %v412
      %v1176 = vpop.f32.mrb[0].mxu0
      %v1177 = vadd.f32 0.0, %v1176
      %v1178 = vpop.f32.mrb[0].mxu0
      %1179 = vmatprep.mubr.f32.mxu0 0.0
      %1180 = vmatmul.mubr.f32.gmra.mrb[0].mxu0 %v415
      %v1181 = vpop.f32.mrb[0].mxu0
      %v1182 = vadd.f32 0.0, %v1181
      %v1183 = vpop.f32.mrb[0].mxu0
      %1184 = vmatprep.mubr.f32.mxu0 0.0
      %1185 = vmatmul.mubr.f32.gmra.mrb[0].mxu0 %v418
      %v1186 = vpop.f32.mrb[0].mxu0
      %v1187 = vadd.f32 0.0, %v1186
      %v1188 = vpop.f32.mrb[0].mxu0
      %1189 = vmatprep.mubr.f32.mxu0 0.0
      %1190 = vmatmul.mubr.f32.gmra.mrb[0].mxu0 %v421
      %v1191 = vpop.f32.mrb[0].mxu0
      %v1192 = vadd.f32 0.0, %v1191
      %v1193 = vpop.f32.mrb[0].mxu0
      %1194 = vmatprep.mubr.f32.mxu0 0.0
      %1195 = vmatmul.mubr.f32.gmra.mrb[0].mxu0 %v424
      %v1196 = vpop.f32.mrb[0].mxu0
      %v1197 = vadd.f32 0.0, %v1196
      %v1198 = vpop.f32.mrb[0].mxu0
      %1199 = vmatprep.mubr.f32.mxu0 0.0
      %1200 = vmatmul.mubr.f32.gmra.mrb[0].mxu0 %v427
      %v1201 = vpop.f32.mrb[0].mxu0
      %v1202 = vadd.f32 0.0, %v1201
      %v1203 = vpop.f32.mrb[0].mxu0
      %1204 = vmatprep.mubr.f32.mxu0 0.0
      %1205 = vmatmul.mubr.f32.gmra.mrb[0].mxu0 %v430
      %v1206 = vpop.f32.mrb[0].mxu0
      %v1207 = vadd.f32 0.0, %v1206
      %v1208 = vpop.f32.mrb[0].mxu0
      %1209 = vmatprep.mubr.f32.mxu0 0.0
      %1210 = vmatmul.mubr.f32.gmra.mrb[0].mxu0 %v433
      %v1211 = vpop.f32.mrb[0].mxu0
      %v1212 = vadd.f32 0.0, %v1211
      %v1213 = vpop.f32.mrb[0].mxu0
      %1214 = vmatprep.mubr.f32.mxu0 0.0
      %1215 = vmatmul.mubr.f32.gmra.mrb[0].mxu0 %v436
      %v1216 = vpop.f32.mrb[0].mxu0
      %v1217 = vadd.f32 0.0, %v1216
      %v1218 = vpop.f32.mrb[0].mxu0
      %1219 = vmatprep.mubr.f32.mxu0 0.0
      %1220 = vmatmul.mubr.f32.gmra.mrb[0].mxu0 %v439
      %v1221 = vpop.f32.mrb[0].mxu0
      %v1222 = vadd.f32 0.0, %v1221
      %v1223 = vpop.f32.mrb[0].mxu0
      %1224 = vmatprep.mubr.f32.mxu0 0.0
      %1225 = vmatmul.mubr.f32.gmra.mrb[0].mxu0 %v442
      %v1226 = vpop.f32.mrb[0].mxu0
      %v1227 = vadd.f32 0.0, %v1226
      %v1228 = vpop.f32.mrb[0].mxu0
      %1229 = vmatprep.mubr.f32.mxu0 0.0
      %1230 = vmatmul.mubr.f32.gmra.mrb[0].mxu0 %v445
      %v1231 = vpop.f32.mrb[0].mxu0
      %v1232 = vadd.f32 0.0, %v1231
      %v1233 = vpop.f32.mrb[0].mxu0
      %1234 = vmatprep.mubr.f32.mxu0 0.0
      %1235 = vmatmul.mubr.f32.gmra.mrb[0].mxu0 %v448
      %v1236 = vpop.f32.mrb[0].mxu0
      %v1237 = vadd.f32 0.0, %v1236
      %v1238 = vpop.f32.mrb[0].mxu0
      %1239 = vmatprep.mubr.f32.mxu0 0.0
      %1240 = vmatmul.mubr.f32.gmra.mrb[0].mxu0 %v451
      %v1241 = vpop.f32.mrb[0].mxu0
      %v1242 = vadd.f32 0.0, %v1241
      %v1243 = vpop.f32.mrb[0].mxu0
      %1244 = vdwg.mxu0
      %v1245 = vld [vmem:[%s5] sm:$0x1]
      %v1247 = vlaneseq
      %v1248 = vshrl.u32 %v1247, 7
      %v1249 = vsub.s32 0, %v1248
      %v1250 = vrot.slane %v1245, %v1249
      %v1252 = vmul.f32 %v1087, %v1250
      %v1253 = vmul.f32 %v1092, %v1250
      %v1254 = vmul.f32 %v1097, %v1250
      %v1255 = vmul.f32 %v1102, %v1250
      %v1256 = vmul.f32 %v1107, %v1250
      %v1257 = vmul.f32 %v1112, %v1250
      %v1258 = vmul.f32 %v1117, %v1250
      %v1259 = vmul.f32 %v1122, %v1250
      %v1260 = vmul.f32 %v1127, %v1250
      %v1261 = vmul.f32 %v1132, %v1250
      %v1262 = vmul.f32 %v1137, %v1250
      %v1263 = vmul.f32 %v1142, %v1250
      %v1264 = vmul.f32 %v1147, %v1250
      %v1265 = vmul.f32 %v1152, %v1250
      %v1266 = vmul.f32 %v1157, %v1250
      %v1267 = vmul.f32 %v1162, %v1250
      %v1268 = vmul.f32 %v1167, %v1250
      %v1269 = vmul.f32 %v1172, %v1250
      %v1270 = vmul.f32 %v1177, %v1250
      %v1271 = vmul.f32 %v1182, %v1250
      %v1272 = vmul.f32 %v1187, %v1250
      %v1273 = vmul.f32 %v1192, %v1250
      %v1274 = vmul.f32 %v1197, %v1250
      %v1275 = vmul.f32 %v1202, %v1250
      %v1276 = vmul.f32 %v1207, %v1250
      %v1277 = vmul.f32 %v1212, %v1250
      %v1278 = vmul.f32 %v1217, %v1250
      %v1279 = vmul.f32 %v1222, %v1250
      %v1280 = vmul.f32 %v1227, %v1250
      %v1281 = vmul.f32 %v1232, %v1250
      %v1282 = vmul.f32 %v1237, %v1250
      %v1283 = vmul.f32 %v1242, %v1250
      %v1284 = vld [vmem:[%s6] sm:$0x1]
      %v1286 = vlaneseq
      %v1287 = vshrl.u32 %v1286, 7
      %v1288 = vsub.s32 0, %v1287
      %v1289 = vrot.slane %v1284, %v1288
      %v1291 = vadd.f32 %v1252, %v1289
      %v1292 = vadd.f32 %v1253, %v1289
      %v1293 = vadd.f32 %v1254, %v1289
      %v1294 = vadd.f32 %v1255, %v1289
      %v1295 = vadd.f32 %v1256, %v1289
      %v1296 = vadd.f32 %v1257, %v1289
      %v1297 = vadd.f32 %v1258, %v1289
      %v1298 = vadd.f32 %v1259, %v1289
      %v1299 = vadd.f32 %v1260, %v1289
      %v1300 = vadd.f32 %v1261, %v1289
      %v1301 = vadd.f32 %v1262, %v1289
      %v1302 = vadd.f32 %v1263, %v1289
      %v1303 = vadd.f32 %v1264, %v1289
      %v1304 = vadd.f32 %v1265, %v1289
      %v1305 = vadd.f32 %v1266, %v1289
      %v1306 = vadd.f32 %v1267, %v1289
      %v1307 = vadd.f32 %v1268, %v1289
      %v1308 = vadd.f32 %v1269, %v1289
      %v1309 = vadd.f32 %v1270, %v1289
      %v1310 = vadd.f32 %v1271, %v1289
      %v1311 = vadd.f32 %v1272, %v1289
      %v1312 = vadd.f32 %v1273, %v1289
      %v1313 = vadd.f32 %v1274, %v1289
      %v1314 = vadd.f32 %v1275, %v1289
      %v1315 = vadd.f32 %v1276, %v1289
      %v1316 = vadd.f32 %v1277, %v1289
      %v1317 = vadd.f32 %v1278, %v1289
      %v1318 = vadd.f32 %v1279, %v1289
      %v1319 = vadd.f32 %v1280, %v1289
      %v1320 = vadd.f32 %v1281, %v1289
      %v1321 = vadd.f32 %v1282, %v1289
      %v1322 = vadd.f32 %v1283, %v1289
      %v1323 = vxor.u32 %v1291, 2147483648
      %v1324 = vxor.u32 %v1292, 2147483648
      %v1325 = vxor.u32 %v1293, 2147483648
      %v1326 = vxor.u32 %v1294, 2147483648
      %v1327 = vxor.u32 %v1295, 2147483648
      %v1328 = vxor.u32 %v1296, 2147483648
      %v1329 = vxor.u32 %v1297, 2147483648
      %v1330 = vxor.u32 %v1298, 2147483648
      %v1331 = vxor.u32 %v1299, 2147483648
      %v1332 = vxor.u32 %v1300, 2147483648
      %v1333 = vxor.u32 %v1301, 2147483648
      %v1334 = vxor.u32 %v1302, 2147483648
      %v1335 = vxor.u32 %v1303, 2147483648
      %v1336 = vxor.u32 %v1304, 2147483648
      %v1337 = vxor.u32 %v1305, 2147483648
      %v1338 = vxor.u32 %v1306, 2147483648
      %v1339 = vxor.u32 %v1307, 2147483648
      %v1340 = vxor.u32 %v1308, 2147483648
      %v1341 = vxor.u32 %v1309, 2147483648
      %v1342 = vxor.u32 %v1310, 2147483648
      %v1343 = vxor.u32 %v1311, 2147483648
      %v1344 = vxor.u32 %v1312, 2147483648
      %v1345 = vxor.u32 %v1313, 2147483648
      %v1346 = vxor.u32 %v1314, 2147483648
      %v1347 = vxor.u32 %v1315, 2147483648
      %v1348 = vxor.u32 %v1316, 2147483648
      %v1349 = vxor.u32 %v1317, 2147483648
      %v1350 = vxor.u32 %v1318, 2147483648
      %v1351 = vxor.u32 %v1319, 2147483648
      %v1352 = vxor.u32 %v1320, 2147483648
      %v1353 = vxor.u32 %v1321, 2147483648
      %v1354 = vxor.u32 %v1322, 2147483648
      %v1355 = vmul.f32 %v1323, 1.442695
      %v1356 = vpow.pop %v1355
      %v1357 = vmul.f32 %v1324, 1.442695
      %v1358 = vpow.pop %v1357
      %v1359 = vmul.f32 %v1325, 1.442695
      %v1360 = vpow.pop %v1359
      %v1361 = vmul.f32 %v1326, 1.442695
      %v1362 = vpow.pop %v1361
      %v1363 = vmul.f32 %v1327, 1.442695
      %v1364 = vpow.pop %v1363
      %v1365 = vmul.f32 %v1328, 1.442695
      %v1366 = vpow.pop %v1365
      %v1367 = vmul.f32 %v1329, 1.442695
      %v1368 = vpow.pop %v1367
      %v1369 = vmul.f32 %v1330, 1.442695
      %v1370 = vpow.pop %v1369
      %v1371 = vmul.f32 %v1331, 1.442695
      %v1372 = vpow.pop %v1371
      %v1373 = vmul.f32 %v1332, 1.442695
      %v1374 = vpow.pop %v1373
      %v1375 = vmul.f32 %v1333, 1.442695
      %v1376 = vpow.pop %v1375
      %v1377 = vmul.f32 %v1334, 1.442695
      %v1378 = vpow.pop %v1377
      %v1379 = vmul.f32 %v1335, 1.442695
      %v1380 = vpow.pop %v1379
      %v1381 = vmul.f32 %v1336, 1.442695
      %v1382 = vpow.pop %v1381
      %v1383 = vmul.f32 %v1337, 1.442695
      %v1384 = vpow.pop %v1383
      %v1385 = vmul.f32 %v1338, 1.442695
      %v1386 = vpow.pop %v1385
      %v1387 = vmul.f32 %v1339, 1.442695
      %v1388 = vpow.pop %v1387
      %v1389 = vmul.f32 %v1340, 1.442695
      %v1390 = vpow.pop %v1389
      %v1391 = vmul.f32 %v1341, 1.442695
      %v1392 = vpow.pop %v1391
      %v1393 = vmul.f32 %v1342, 1.442695
      %v1394 = vpow.pop %v1393
      %v1395 = vmul.f32 %v1343, 1.442695
      %v1396 = vpow.pop %v1395
      %v1397 = vmul.f32 %v1344, 1.442695
      %v1398 = vpow.pop %v1397
      %v1399 = vmul.f32 %v1345, 1.442695
      %v1400 = vpow.pop %v1399
      %v1401 = vmul.f32 %v1346, 1.442695
      %v1402 = vpow.pop %v1401
      %v1403 = vmul.f32 %v1347, 1.442695
      %v1404 = vpow.pop %v1403
      %v1405 = vmul.f32 %v1348, 1.442695
      %v1406 = vpow.pop %v1405
      %v1407 = vmul.f32 %v1349, 1.442695
      %v1408 = vpow.pop %v1407
      %v1409 = vmul.f32 %v1350, 1.442695
      %v1410 = vpow.pop %v1409
      %v1411 = vmul.f32 %v1351, 1.442695
      %v1412 = vpow.pop %v1411
      %v1413 = vmul.f32 %v1352, 1.442695
      %v1414 = vpow.pop %v1413
      %v1415 = vmul.f32 %v1353, 1.442695
      %v1416 = vpow.pop %v1415
      %v1417 = vmul.f32 %v1354, 1.442695
      %v1418 = vpow.pop %v1417
      %v1419 = vadd.f32 %v1356, 1.0
      %v1420 = vadd.f32 %v1358, 1.0
      %v1421 = vadd.f32 %v1360, 1.0
      %v1422 = vadd.f32 %v1362, 1.0
      %v1423 = vadd.f32 %v1364, 1.0
      %v1424 = vadd.f32 %v1366, 1.0
      %v1425 = vadd.f32 %v1368, 1.0
      %v1426 = vadd.f32 %v1370, 1.0
      %v1427 = vadd.f32 %v1372, 1.0
      %v1428 = vadd.f32 %v1374, 1.0
      %v1429 = vadd.f32 %v1376, 1.0
      %v1430 = vadd.f32 %v1378, 1.0
      %v1431 = vadd.f32 %v1380, 1.0
      %v1432 = vadd.f32 %v1382, 1.0
      %v1433 = vadd.f32 %v1384, 1.0
      %v1434 = vadd.f32 %v1386, 1.0
      %v1435 = vadd.f32 %v1388, 1.0
      %v1436 = vadd.f32 %v1390, 1.0
      %v1437 = vadd.f32 %v1392, 1.0
      %v1438 = vadd.f32 %v1394, 1.0
      %v1439 = vadd.f32 %v1396, 1.0
      %v1440 = vadd.f32 %v1398, 1.0
      %v1441 = vadd.f32 %v1400, 1.0
      %v1442 = vadd.f32 %v1402, 1.0
      %v1443 = vadd.f32 %v1404, 1.0
      %v1444 = vadd.f32 %v1406, 1.0
      %v1445 = vadd.f32 %v1408, 1.0
      %v1446 = vadd.f32 %v1410, 1.0
      %v1447 = vadd.f32 %v1412, 1.0
      %v1448 = vadd.f32 %v1414, 1.0
      %v1449 = vadd.f32 %v1416, 1.0
      %v1450 = vadd.f32 %v1418, 1.0
      %v1451 = vrcp.pop %v1419
      %v1452 = vmul.f32 1.0, %v1451
      %v1453 = vrcp.pop %v1420
      %v1454 = vmul.f32 1.0, %v1453
      %v1455 = vrcp.pop %v1421
      %v1456 = vmul.f32 1.0, %v1455
      %v1457 = vrcp.pop %v1422
      %v1458 = vmul.f32 1.0, %v1457
      %v1459 = vrcp.pop %v1423
      %v1460 = vmul.f32 1.0, %v1459
      %v1461 = vrcp.pop %v1424
      %v1462 = vmul.f32 1.0, %v1461
      %v1463 = vrcp.pop %v1425
      %v1464 = vmul.f32 1.0, %v1463
      %v1465 = vrcp.pop %v1426
      %v1466 = vmul.f32 1.0, %v1465
      %v1467 = vrcp.pop %v1427
      %v1468 = vmul.f32 1.0, %v1467
      %v1469 = vrcp.pop %v1428
      %v1470 = vmul.f32 1.0, %v1469
      %v1471 = vrcp.pop %v1429
      %v1472 = vmul.f32 1.0, %v1471
      %v1473 = vrcp.pop %v1430
      %v1474 = vmul.f32 1.0, %v1473
      %v1475 = vrcp.pop %v1431
      %v1476 = vmul.f32 1.0, %v1475
      %v1477 = vrcp.pop %v1432
      %v1478 = vmul.f32 1.0, %v1477
      %v1479 = vrcp.pop %v1433
      %v1480 = vmul.f32 1.0, %v1479
      %v1481 = vrcp.pop %v1434
      %v1482 = vmul.f32 1.0, %v1481
      %v1483 = vrcp.pop %v1435
      %v1484 = vmul.f32 1.0, %v1483
      %v1485 = vrcp.pop %v1436
      %v1486 = vmul.f32 1.0, %v1485
      %v1487 = vrcp.pop %v1437
      %v1488 = vmul.f32 1.0, %v1487
      %v1489 = vrcp.pop %v1438
      %v1490 = vmul.f32 1.0, %v1489
      %v1491 = vrcp.pop %v1439
      %v1492 = vmul.f32 1.0, %v1491
      %v1493 = vrcp.pop %v1440
      %v1494 = vmul.f32 1.0, %v1493
      %v1495 = vrcp.pop %v1441
      %v1496 = vmul.f32 1.0, %v1495
      %v1497 = vrcp.pop %v1442
      %v1498 = vmul.f32 1.0, %v1497
      %v1499 = vrcp.pop %v1443
      %v1500 = vmul.f32 1.0, %v1499
      %v1501 = vrcp.pop %v1444
      %v1502 = vmul.f32 1.0, %v1501
      %v1503 = vrcp.pop %v1445
      %v1504 = vmul.f32 1.0, %v1503
      %v1505 = vrcp.pop %v1446
      %v1506 = vmul.f32 1.0, %v1505
      %v1507 = vrcp.pop %v1447
      %v1508 = vmul.f32 1.0, %v1507
      %v1509 = vrcp.pop %v1448
      %v1510 = vmul.f32 1.0, %v1509
      %v1511 = vrcp.pop %v1449
      %v1512 = vmul.f32 1.0, %v1511
      %v1513 = vrcp.pop %v1450
      %v1514 = vmul.f32 1.0, %v1513
      %v1515 = vmul.f32 %v1291, %v1452
      %v1516 = vmul.f32 %v1292, %v1454
      %v1517 = vmul.f32 %v1293, %v1456
      %v1518 = vmul.f32 %v1294, %v1458
      %v1519 = vmul.f32 %v1295, %v1460
      %v1520 = vmul.f32 %v1296, %v1462
      %v1521 = vmul.f32 %v1297, %v1464
      %v1522 = vmul.f32 %v1298, %v1466
      %v1523 = vmul.f32 %v1299, %v1468
      %v1524 = vmul.f32 %v1300, %v1470
      %v1525 = vmul.f32 %v1301, %v1472
      %v1526 = vmul.f32 %v1302, %v1474
      %v1527 = vmul.f32 %v1303, %v1476
      %v1528 = vmul.f32 %v1304, %v1478
      %v1529 = vmul.f32 %v1305, %v1480
      %v1530 = vmul.f32 %v1306, %v1482
      %v1531 = vmul.f32 %v1307, %v1484
      %v1532 = vmul.f32 %v1308, %v1486
      %v1533 = vmul.f32 %v1309, %v1488
      %v1534 = vmul.f32 %v1310, %v1490
      %v1535 = vmul.f32 %v1311, %v1492
      %v1536 = vmul.f32 %v1312, %v1494
      %v1537 = vmul.f32 %v1313, %v1496
      %v1538 = vmul.f32 %v1314, %v1498
      %v1539 = vmul.f32 %v1315, %v1500
      %v1540 = vmul.f32 %v1316, %v1502
      %v1541 = vmul.f32 %v1317, %v1504
      %v1542 = vmul.f32 %v1318, %v1506
      %v1543 = vmul.f32 %v1319, %v1508
      %v1544 = vmul.f32 %v1320, %v1510
      %v1545 = vmul.f32 %v1321, %v1512
      %v1546 = vmul.f32 %v1322, %v1514
      %1547 = vst.msk [vmem:[%s321] sm:$0xff] %vm356, %v1515
      %1548 = vst.msk [vmem:[%s321 + $0x8] sm:$0xff] %vm356, %v1516
      %1549 = vst.msk [vmem:[%s321 + $0x10] sm:$0xff] %vm356, %v1517
      %1550 = vst.msk [vmem:[%s321 + $0x18] sm:$0xff] %vm356, %v1518
      %1551 = vst.msk [vmem:[%s321 + $0x20] sm:$0xff] %vm356, %v1519
      %1552 = vst.msk [vmem:[%s321 + $0x28] sm:$0xff] %vm356, %v1520
      %1553 = vst.msk [vmem:[%s321 + $0x30] sm:$0xff] %vm356, %v1521
      %1554 = vst.msk [vmem:[%s321 + $0x38] sm:$0xff] %vm356, %v1522
      %1555 = vst.msk [vmem:[%s321 + $0x40] sm:$0xff] %vm356, %v1523
      %1556 = vst.msk [vmem:[%s321 + $0x48] sm:$0xff] %vm356, %v1524
      %1557 = vst.msk [vmem:[%s321 + $0x50] sm:$0xff] %vm356, %v1525
      %1558 = vst.msk [vmem:[%s321 + $0x58] sm:$0xff] %vm356, %v1526
      %1559 = vst.msk [vmem:[%s321 + $0x60] sm:$0xff] %vm356, %v1527
      %1560 = vst.msk [vmem:[%s321 + $0x68] sm:$0xff] %vm356, %v1528
      %1561 = vst.msk [vmem:[%s321 + $0x70] sm:$0xff] %vm356, %v1529
      %1562 = vst.msk [vmem:[%s321 + $0x78] sm:$0xff] %vm356, %v1530
      %1563 = vst.msk [vmem:[%s321 + $0x80] sm:$0xff] %vm356, %v1531
      %1564 = vst.msk [vmem:[%s321 + $0x88] sm:$0xff] %vm356, %v1532
      %1565 = vst.msk [vmem:[%s321 + $0x90] sm:$0xff] %vm356, %v1533
      %1566 = vst.msk [vmem:[%s321 + $0x98] sm:$0xff] %vm356, %v1534
      %1567 = vst.msk [vmem:[%s321 + $0xa0] sm:$0xff] %vm356, %v1535
      %1568 = vst.msk [vmem:[%s321 + $0xa8] sm:$0xff] %vm356, %v1536
      %1569 = vst.msk [vmem:[%s321 + $0xb0] sm:$0xff] %vm356, %v1537
      %1570 = vst.msk [vmem:[%s321 + $0xb8] sm:$0xff] %vm356, %v1538
      %1571 = vst.msk [vmem:[%s321 + $0xc0] sm:$0xff] %vm356, %v1539
      %1572 = vst.msk [vmem:[%s321 + $0xc8] sm:$0xff] %vm356, %v1540
      %1573 = vst.msk [vmem:[%s321 + $0xd0] sm:$0xff] %vm356, %v1541
      %1574 = vst.msk [vmem:[%s321 + $0xd8] sm:$0xff] %vm356, %v1542
      %1575 = vst.msk [vmem:[%s321 + $0xe0] sm:$0xff] %vm356, %v1543
      %1576 = vst.msk [vmem:[%s321 + $0xe8] sm:$0xff] %vm356, %v1544
      %1577 = vst.msk [vmem:[%s321 + $0xf0] sm:$0xff] %vm356, %v1545
      %1578 = vst.msk [vmem:[%s321 + $0xf8] sm:$0xff] %vm356, %v1546
      %s1579 = smul.u32 32, %s20
      %p1580 = scmp.lt.s32.totalorder %s1579, 63
      %s1581 = scalar_select %p1580, %s1579, 63
      %s1582 = smul.addr %s1581, 8
      %s1583 = scalar_lea.vmem %s7, %s1582
      %s1584 = smul.u32 32, %s20
      %p1585 = scmp.lt.s32.totalorder %s1584, 63
      %s1586 = scalar_select %p1585, %s1584, 63
      %s1587 = smul.addr %s1586, 8
      %s1588 = scalar_lea.vmem %s8, %s1587
      // Predicated region
      $region49: #{_lambda_.3} parent=47 // pred_check
        %p1589 = pneg %p190
      $region50: #{_lambda_.3} parent=47 // pred_check_branch
        %1591 = sbr.rel (%p1589) target = $region52
      $region51: #{_lambda_.3} parent=47 // pred_region
        %s1592 = smul.u32 32, %s20
      $region52: #{_lambda_.3} parent=47 // pred_fallthru
        _
      // Predicated region
      $region53: #{_lambda_.3} parent=47 // pred_check
        %p1593 = pneg %p216
      $region54: #{_lambda_.3} parent=47 // pred_check_branch
        %1595 = sbr.rel (%p1593) target = $region56
      $region55: #{_lambda_.3} parent=47 // pred_region
        %s1596 = smul.u32 32, %s20
      $region56: #{_lambda_.3} parent=47 // pred_fallthru
        _
    $region48: #{_lambda_.3} parent=5 // pred_fallthru
      _
    %p1597 = scmp.le.s32.totalorder 2, %s15
    // Predicated region
    $region57: #{_lambda_.3} parent=5 // pred_check
      %p1598 = pneg %p1597
    $region58: #{_lambda_.3} parent=5 // pred_check_branch
      %1600 = sbr.rel (%p1598) target = $region60
    $region59: #{_lambda_.3} parent=5 // pred_region
      %s1601 = ssub.s32 %s15, 2
      // Predicated region
      $region61: #{_lambda_.3} parent=59 // pred_check
        %p1602 = pneg %p196
      $region62: #{_lambda_.3} parent=59 // pred_check_branch
        %1604 = sbr.rel (%p1602) target = $region64
      $region63: #{_lambda_.3} parent=59 // pred_region
        %s1605 = smul.u32 32, %s21
        %p1606 = scmp.lt.s32.totalorder %s1605, 63
        %s1607 = scalar_select %p1606, %s1605, 63
        %s1608 = smul.addr %s1607, 8
        %s1609 = scalar_lea.vmem %s7, %s1608
      $region64: #{_lambda_.3} parent=59 // pred_fallthru
        _
      // Predicated region
      $region65: #{_lambda_.3} parent=59 // pred_check
        %p1610 = pneg %p222
      $region66: #{_lambda_.3} parent=59 // pred_check_branch
        %1612 = sbr.rel (%p1610) target = $region68
      $region67: #{_lambda_.3} parent=59 // pred_region
        %s1613 = smul.u32 32, %s21
        %p1614 = scmp.lt.s32.totalorder %s1613, 63
        %s1615 = scalar_select %p1614, %s1613, 63
        %s1616 = smul.addr %s1615, 8
        %s1617 = scalar_lea.vmem %s8, %s1616
      $region68: #{_lambda_.3} parent=59 // pred_fallthru
        _
    $region60: #{_lambda_.3} parent=5 // pred_fallthru
      _
  $region6: #{_lambda_.3} parent=0 // loop_footer
    %s19 = sadd.s32 1, %s15
  $region7: #{_lambda_.3} parent=0 // loop_footer_branch
    %14 = sbr.rel target = $region3
  $region8: #{_lambda_.3} parent=0 // loop_exit
    _

// kernel: _lambda_.5
$region0: #{_lambda_.5}
  #allocation0 [shape = 'u32[]', space=smem, size = 0x4, offset = 0x4, fixed_abs, tag = 'smem constant byte address 0x4 - core index']
  #allocation1 [shape = 'u32[144,128]{1,0:T(1,128)}', space=vmem, size = 0x12000, scoped, tag = 'internal scratch']
  %s0 = inlined_call_operand.vmem [shape: f32[512,4], index: 0, kind: input, shape index: {}]
  %s1 = inlined_call_operand.vmem [shape: f32[512,4], index: 1, kind: input, shape index: {}]
  %s2 = inlined_call_operand.vmem [shape: f32[4,8], index: 2, kind: input, shape index: {}]
  %s3 = inlined_call_operand.vmem [shape: f32[4,8], index: 3, kind: input, shape index: {}]
  %s4 = inlined_call_operand.vmem [shape: f32[1,8], index: 4, kind: input, shape index: {}]
  %s5 = inlined_call_operand.vmem [shape: f32[1,8], index: 5, kind: input, shape index: {}]
  %s6 = inlined_call_operand.vmem [shape: f32[512,8], index: 6, kind: output, shape index: {}]
  %s7 = sld [smem:[#allocation0]]
  $region57: #{_lambda_.5} parent=0
    _
  %s9 = ssub.s32 1, %s7
  %s10 = scalar_select 0, %s9, %s7
  loop: start=0, step=1, limit=4
  $region2: #{_lambda_.5} parent=0 // loop_pre_header
    _
  $region3: #{_lambda_.5} parent=0 // loop_header
    %s12 = sphi 0, %s16
    %p13 = scmp.ge.s32.totalorder %s12, 4
    %s22 = sphi 0, %s24
    %s25 = sphi 0, %s22
    %s26 = sphi 0, %s25
    %s42 = sphi 0, %s26
    %s48 = sphi 0, %s50
    %s51 = sphi 0, %s48
    %s52 = sphi 0, %s51
    %s68 = sphi 0, %s52
    %s72 = sphi 0, %s72
    %s74 = sphi 0, %s72
    %s75 = sphi 0, %s74
    %s89 = sphi 0, %s75
    %s93 = sphi 0, %s93
    %s95 = sphi 0, %s93
    %s96 = sphi 0, %s95
    %s110 = sphi 0, %s96
    %s114 = sphi 0, %s114
    %s116 = sphi 0, %s114
    %s117 = sphi 0, %s116
    %s131 = sphi 0, %s117
    %s135 = sphi 0, %s135
    %s137 = sphi 0, %s135
    %s138 = sphi 0, %s137
    %s152 = sphi 0, %s138
    %s158 = sphi 0, %s160
    %s161 = sphi 0, %s158
    %s162 = sphi 0, %s161
    %s178 = sphi 0, %s162
  $region4: #{_lambda_.5} parent=0 // loop_header_branch
    %15 = sbr.rel (%p13) target = $region8
  $region5: #{_lambda_.5} parent=0 // loop_body
    %s17 = ssub.s32 %s12, 1
    %s18 = ssub.s32 %s12, 2
    %s19 = sadd.s32 %s12, 1
    %s20 = ssub.s32 %s12, %s19
    %p21 = scmp.eq.s32.totalorder %s20, 0
    %s23 = sadd.s32 %s22, 1
    %s24 = scalar_select %p21, %s22, %s23
    %p27 = pneg %p21
    %p28 = scmp.eq.s32.totalorder %s12, 1
    %p29 = por %p27, %p28
    %p30 = scmp.ne.s32.totalorder %s22, %s25
    %p31 = scmp.eq.s32.totalorder %s12, 0
    %p32 = por %p30, %p31
    %p33 = scmp.ne.s32.totalorder %s22, %s25
    %p34 = scmp.eq.s32.totalorder %s17, 1
    %p35 = por %p33, %p34
    %p36 = scmp.ne.s32.totalorder %s25, %s26
    %p37 = scmp.eq.s32.totalorder %s17, 0
    %p38 = por %p36, %p37
    %p39 = scmp.ne.s32.totalorder %s25, %s26
    %p40 = scmp.eq.s32.totalorder %s18, 1
    %p41 = por %p39, %p40
    %p43 = scmp.ne.s32.totalorder %s26, %s42
    %p44 = scmp.eq.s32.totalorder %s18, 0
    %p45 = por %p43, %p44
    %s46 = ssub.s32 %s12, %s19
    %p47 = scmp.eq.s32.totalorder %s46, 0
    %s49 = sadd.s32 %s48, 1
    %s50 = scalar_select %p47, %s48, %s49
    %p53 = pneg %p47
    %p54 = scmp.eq.s32.totalorder %s12, 1
    %p55 = por %p53, %p54
    %p56 = scmp.ne.s32.totalorder %s48, %s51
    %p57 = scmp.eq.s32.totalorder %s12, 0
    %p58 = por %p56, %p57
    %p59 = scmp.ne.s32.totalorder %s48, %s51
    %p60 = scmp.eq.s32.totalorder %s17, 1
    %p61 = por %p59, %p60
    %p62 = scmp.ne.s32.totalorder %s51, %s52
    %p63 = scmp.eq.s32.totalorder %s17, 0
    %p64 = por %p62, %p63
    %p65 = scmp.ne.s32.totalorder %s51, %s52
    %p66 = scmp.eq.s32.totalorder %s18, 1
    %p67 = por %p65, %p66
    %p69 = scmp.ne.s32.totalorder %s52, %s68
    %p70 = scmp.eq.s32.totalorder %s18, 0
    %p71 = por %p69, %p70
    %s73 = sadd.s32 %s72, 1
    %p76 = scmp.eq.s32.totalorder %s12, 1
    %p77 = scmp.ne.s32.totalorder %s72, %s74
    %p78 = scmp.eq.s32.totalorder %s12, 0
    %p79 = por %p77, %p78
    %p80 = scmp.ne.s32.totalorder %s72, %s74
    %p81 = scmp.eq.s32.totalorder %s17, 1
    %p82 = por %p80, %p81
    %p83 = scmp.ne.s32.totalorder %s74, %s75
    %p84 = scmp.eq.s32.totalorder %s17, 0
    %p85 = por %p83, %p84
    %p86 = scmp.ne.s32.totalorder %s74, %s75
    %p87 = scmp.eq.s32.totalorder %s18, 1
    %p88 = por %p86, %p87
    %p90 = scmp.ne.s32.totalorder %s75, %s89
    %p91 = scmp.eq.s32.totalorder %s18, 0
    %p92 = por %p90, %p91
    %s94 = sadd.s32 %s93, 1
    %p97 = scmp.eq.s32.totalorder %s12, 1
    %p98 = scmp.ne.s32.totalorder %s93, %s95
    %p99 = scmp.eq.s32.totalorder %s12, 0
    %p100 = por %p98, %p99
    %p101 = scmp.ne.s32.totalorder %s93, %s95
    %p102 = scmp.eq.s32.totalorder %s17, 1
    %p103 = por %p101, %p102
    %p104 = scmp.ne.s32.totalorder %s95, %s96
    %p105 = scmp.eq.s32.totalorder %s17, 0
    %p106 = por %p104, %p105
    %p107 = scmp.ne.s32.totalorder %s95, %s96
    %p108 = scmp.eq.s32.totalorder %s18, 1
    %p109 = por %p107, %p108
    %p111 = scmp.ne.s32.totalorder %s96, %s110
    %p112 = scmp.eq.s32.totalorder %s18, 0
    %p113 = por %p111, %p112
    %s115 = sadd.s32 %s114, 1
    %p118 = scmp.eq.s32.totalorder %s12, 1
    %p119 = scmp.ne.s32.totalorder %s114, %s116
    %p120 = scmp.eq.s32.totalorder %s12, 0
    %p121 = por %p119, %p120
    %p122 = scmp.ne.s32.totalorder %s114, %s116
    %p123 = scmp.eq.s32.totalorder %s17, 1
    %p124 = por %p122, %p123
    %p125 = scmp.ne.s32.totalorder %s116, %s117
    %p126 = scmp.eq.s32.totalorder %s17, 0
    %p127 = por %p125, %p126
    %p128 = scmp.ne.s32.totalorder %s116, %s117
    %p129 = scmp.eq.s32.totalorder %s18, 1
    %p130 = por %p128, %p129
    %p132 = scmp.ne.s32.totalorder %s117, %s131
    %p133 = scmp.eq.s32.totalorder %s18, 0
    %p134 = por %p132, %p133
    %s136 = sadd.s32 %s135, 1
    %p139 = scmp.eq.s32.totalorder %s12, 1
    %p140 = scmp.ne.s32.totalorder %s135, %s137
    %p141 = scmp.eq.s32.totalorder %s12, 0
    %p142 = por %p140, %p141
    %p143 = scmp.ne.s32.totalorder %s135, %s137
    %p144 = scmp.eq.s32.totalorder %s17, 1
    %p145 = por %p143, %p144
    %p146 = scmp.ne.s32.totalorder %s137, %s138
    %p147 = scmp.eq.s32.totalorder %s17, 0
    %p148 = por %p146, %p147
    %p149 = scmp.ne.s32.totalorder %s137, %s138
    %p150 = scmp.eq.s32.totalorder %s18, 1
    %p151 = por %p149, %p150
    %p153 = scmp.ne.s32.totalorder %s138, %s152
    %p154 = scmp.eq.s32.totalorder %s18, 0
    %p155 = por %p153, %p154
    %s156 = ssub.s32 %s12, %s19
    %p157 = scmp.eq.s32.totalorder %s156, 0
    %s159 = sadd.s32 %s158, 1
    %s160 = scalar_select %p157, %s158, %s159
    %p163 = pneg %p157
    %p164 = scmp.eq.s32.totalorder %s12, 1
    %p165 = por %p163, %p164
    %p166 = scmp.ne.s32.totalorder %s158, %s161
    %p167 = scmp.eq.s32.totalorder %s12, 0
    %p168 = por %p166, %p167
    %p169 = scmp.ne.s32.totalorder %s158, %s161
    %p170 = scmp.eq.s32.totalorder %s17, 1
    %p171 = por %p169, %p170
    %p172 = scmp.ne.s32.totalorder %s161, %s162
    %p173 = scmp.eq.s32.totalorder %s17, 0
    %p174 = por %p172, %p173
    %p175 = scmp.ne.s32.totalorder %s161, %s162
    %p176 = scmp.eq.s32.totalorder %s18, 1
    %p177 = por %p175, %p176
    %p179 = scmp.ne.s32.totalorder %s162, %s178
    %p180 = scmp.eq.s32.totalorder %s18, 0
    %p181 = por %p179, %p180
    %p182 = scmp.le.s32.totalorder 1, %s12
    %p183 = scmp.lt.s32.totalorder %s12, 3
    %p184 = pnand %p182, %p183
    %p185 = pneg %p184
    // Predicated region
    $region9: #{_lambda_.5} parent=5 // pred_check
      _
    $region10: #{_lambda_.5} parent=5 // pred_check_branch
      %187 = sbr.rel (%p184) target = $region12
    $region11: #{_lambda_.5} parent=5 // pred_region
      %s188 = ssub.s32 %s12, 1
      // Predicated region
      $region13: #{_lambda_.5} parent=11 // pred_check
        %p189 = pneg %p85
      $region14: #{_lambda_.5} parent=11 // pred_check_branch
        %191 = sbr.rel (%p189) target = $region16
      $region15: #{_lambda_.5} parent=11 // pred_region
        _
      $region16: #{_lambda_.5} parent=11 // pred_fallthru
        _
      // Predicated region
      $region17: #{_lambda_.5} parent=11 // pred_check
        %p192 = pneg %p106
      $region18: #{_lambda_.5} parent=11 // pred_check_branch
        %194 = sbr.rel (%p192) target = $region20
      $region19: #{_lambda_.5} parent=11 // pred_region
        _
      $region20: #{_lambda_.5} parent=11 // pred_fallthru
        _
      // Predicated region
      $region21: #{_lambda_.5} parent=11 // pred_check
        %p195 = pneg %p127
      $region22: #{_lambda_.5} parent=11 // pred_check_branch
        %197 = sbr.rel (%p195) target = $region24
      $region23: #{_lambda_.5} parent=11 // pred_region
        _
      $region24: #{_lambda_.5} parent=11 // pred_fallthru
        _
      // Predicated region
      $region25: #{_lambda_.5} parent=11 // pred_check
        %p198 = pneg %p148
      $region26: #{_lambda_.5} parent=11 // pred_check_branch
        %200 = sbr.rel (%p198) target = $region28
      $region27: #{_lambda_.5} parent=11 // pred_region
        _
      $region28: #{_lambda_.5} parent=11 // pred_fallthru
        _
    $region12: #{_lambda_.5} parent=5 // pred_fallthru
      _
    %p201 = scmp.lt.s32.totalorder %s12, 2
    // Predicated region
    $region29: #{_lambda_.5} parent=5 // pred_check
      %p202 = pneg %p201
    $region30: #{_lambda_.5} parent=5 // pred_check_branch
      %204 = sbr.rel (%p202) target = $region32
    $region31: #{_lambda_.5} parent=5 // pred_region
      // Predicated region
      $region33: #{_lambda_.5} parent=31 // pred_check
        %p205 = pneg %p32
      $region34: #{_lambda_.5} parent=31 // pred_check_branch
        %207 = sbr.rel (%p205) target = $region36
      $region35: #{_lambda_.5} parent=31 // pred_region
        %s208 = smul.u32 32, %s12
        %p209 = scmp.lt.s32.totalorder %s208, 63
        %s210 = scalar_select %p209, %s208, 63
        %s211 = smul.addr %s210, 8
        %s212 = scalar_lea.vmem %s0, %s211
        %s213 = smul.u32 32, %s12
      $region36: #{_lambda_.5} parent=31 // pred_fallthru
        _
      // Predicated region
      $region37: #{_lambda_.5} parent=31 // pred_check
        %p214 = pneg %p58
      $region38: #{_lambda_.5} parent=31 // pred_check_branch
        %216 = sbr.rel (%p214) target = $region40
      $region39: #{_lambda_.5} parent=31 // pred_region
        %s217 = smul.u32 32, %s12
        %p218 = scmp.lt.s32.totalorder %s217, 63
        %s219 = scalar_select %p218, %s217, 63
        %s220 = smul.addr %s219, 8
        %s221 = scalar_lea.vmem %s1, %s220
        %s222 = smul.u32 32, %s12
      $region40: #{_lambda_.5} parent=31 // pred_fallthru
        _
    $region32: #{_lambda_.5} parent=5 // pred_fallthru
      _
    %p223 = scmp.le.s32.totalorder 1, %s12
    %p224 = scmp.lt.s32.totalorder %s12, 3
    %p225 = pnand %p223, %p224
    %p226 = pneg %p225
    // Predicated region
    $region41: #{_lambda_.5} parent=5 // pred_check
      _
    $region42: #{_lambda_.5} parent=5 // pred_check_branch
      %228 = sbr.rel (%p225) target = $region44
    $region43: #{_lambda_.5} parent=5 // pred_region
      %s229 = ssub.s32 %s12, 1
      %s230 = smul.u32 32, %s17
      %p231 = scmp.lt.s32.totalorder %s230, 63
      %s232 = scalar_select %p231, %s230, 63
      %s233 = smul.addr %s232, 8
      %s234 = scalar_lea.vmem %s0, %s233
      %p235 = pneg %p38
      %p236 = pneg %p35
      %s237 = smul.u32 32, %s17
      %p238 = scmp.lt.s32.totalorder %s237, 63
      %s239 = scalar_select %p238, %s237, 63
      %s240 = smul.addr %s239, 8
      %s241 = scalar_lea.vmem %s1, %s240
      %p242 = pneg %p64
      %p243 = pneg %p61
      %p244 = pneg %p85
      %p245 = pneg %p82
      %p246 = pneg %p106
      %p247 = pneg %p103
      %p248 = pneg %p127
      %p249 = pneg %p124
      %p250 = pneg %p148
      %p251 = pneg %p145
      %p252 = pneg %p174
      %p253 = pneg %p171
      %s254 = smul.u32 32, %s17
      %p255 = scmp.lt.s32.totalorder %s254, 63
      %s256 = scalar_select %p255, %s254, 63
      %s257 = smul.addr %s256, 8
      %s258 = scalar_lea.vmem %s6, %s257
      %s259 = smul.u32 32, %s17
      %p260 = scmp.lt.s32.totalorder %s259, 63
      %s261 = scalar_select %p260, %s259, 63
      %s262 = smul.addr %s261, 8
      %s263 = scalar_lea.vmem %s0, %s262
      %s264 = smul.u32 32, %s17
      %s265 = smul.u32 32, %s17
      %p266 = scmp.lt.s32.totalorder %s265, 63
      %s267 = scalar_select %p266, %s265, 63
      %s268 = smul.addr %s267, 8
      %s269 = scalar_lea.vmem %s1, %s268
      %s270 = smul.u32 32, %s17
      %s271 = smul.u32 32, %s17
      %p272 = scmp.lt.s32.totalorder %s271, 63
      %s273 = scalar_select %p272, %s271, 63
      %s274 = smul.addr %s273, 8
      %s275 = scalar_lea.vmem %s6, %s274
      %s276 = smul.u32 32, %s17
      %v277 = vld [vmem:[%s263] sm:$0xff]
      %v278 = vld [vmem:[%s263 + $0x8] sm:$0xff]
      %v279 = vld [vmem:[%s263 + $0x10] sm:$0xff]
      %v280 = vld [vmem:[%s263 + $0x18] sm:$0xff]
      %v281 = vld [vmem:[%s263 + $0x20] sm:$0xff]
      %v282 = vld [vmem:[%s263 + $0x28] sm:$0xff]
      %v283 = vld [vmem:[%s263 + $0x30] sm:$0xff]
      %v284 = vld [vmem:[%s263 + $0x38] sm:$0xff]
      %v285 = vld [vmem:[%s263 + $0x40] sm:$0xff]
      %v286 = vld [vmem:[%s263 + $0x48] sm:$0xff]
      %v287 = vld [vmem:[%s263 + $0x50] sm:$0xff]
      %v288 = vld [vmem:[%s263 + $0x58] sm:$0xff]
      %v289 = vld [vmem:[%s263 + $0x60] sm:$0xff]
      %v290 = vld [vmem:[%s263 + $0x68] sm:$0xff]
      %v291 = vld [vmem:[%s263 + $0x70] sm:$0xff]
      %v292 = vld [vmem:[%s263 + $0x78] sm:$0xff]
      %v293 = vld [vmem:[%s263 + $0x80] sm:$0xff]
      %v294 = vld [vmem:[%s263 + $0x88] sm:$0xff]
      %v295 = vld [vmem:[%s263 + $0x90] sm:$0xff]
      %v296 = vld [vmem:[%s263 + $0x98] sm:$0xff]
      %v297 = vld [vmem:[%s263 + $0xa0] sm:$0xff]
      %v298 = vld [vmem:[%s263 + $0xa8] sm:$0xff]
      %v299 = vld [vmem:[%s263 + $0xb0] sm:$0xff]
      %v300 = vld [vmem:[%s263 + $0xb8] sm:$0xff]
      %v301 = vld [vmem:[%s263 + $0xc0] sm:$0xff]
      %v302 = vld [vmem:[%s263 + $0xc8] sm:$0xff]
      %v303 = vld [vmem:[%s263 + $0xd0] sm:$0xff]
      %v304 = vld [vmem:[%s263 + $0xd8] sm:$0xff]
      %v305 = vld [vmem:[%s263 + $0xe0] sm:$0xff]
      %v306 = vld [vmem:[%s263 + $0xe8] sm:$0xff]
      %v307 = vld [vmem:[%s263 + $0xf0] sm:$0xff]
      %v308 = vld [vmem:[%s263 + $0xf8] sm:$0xff]
      %v309 = vld [vmem:[%s2] sm:$0xf]
      %v310 = vld [vmem:[%s269] sm:$0xff]
      %v311 = vld [vmem:[%s269 + $0x8] sm:$0xff]
      %v312 = vld [vmem:[%s269 + $0x10] sm:$0xff]
      %v313 = vld [vmem:[%s269 + $0x18] sm:$0xff]
      %v314 = vld [vmem:[%s269 + $0x20] sm:$0xff]
      %v315 = vld [vmem:[%s269 + $0x28] sm:$0xff]
      %v316 = vld [vmem:[%s269 + $0x30] sm:$0xff]
      %v317 = vld [vmem:[%s269 + $0x38] sm:$0xff]
      %v318 = vld [vmem:[%s269 + $0x40] sm:$0xff]
      %v319 = vld [vmem:[%s269 + $0x48] sm:$0xff]
      %v320 = vld [vmem:[%s269 + $0x50] sm:$0xff]
      %v321 = vld [vmem:[%s269 + $0x58] sm:$0xff]
      %v322 = vld [vmem:[%s269 + $0x60] sm:$0xff]
      %v323 = vld [vmem:[%s269 + $0x68] sm:$0xff]
      %v324 = vld [vmem:[%s269 + $0x70] sm:$0xff]
      %v325 = vld [vmem:[%s269 + $0x78] sm:$0xff]
      %v326 = vld [vmem:[%s269 + $0x80] sm:$0xff]
      %v327 = vld [vmem:[%s269 + $0x88] sm:$0xff]
      %v328 = vld [vmem:[%s269 + $0x90] sm:$0xff]
      %v329 = vld [vmem:[%s269 + $0x98] sm:$0xff]
      %v330 = vld [vmem:[%s269 + $0xa0] sm:$0xff]
      %v331 = vld [vmem:[%s269 + $0xa8] sm:$0xff]
      %v332 = vld [vmem:[%s269 + $0xb0] sm:$0xff]
      %v333 = vld [vmem:[%s269 + $0xb8] sm:$0xff]
      %v334 = vld [vmem:[%s269 + $0xc0] sm:$0xff]
      %v335 = vld [vmem:[%s269 + $0xc8] sm:$0xff]
      %v336 = vld [vmem:[%s269 + $0xd0] sm:$0xff]
      %v337 = vld [vmem:[%s269 + $0xd8] sm:$0xff]
      %v338 = vld [vmem:[%s269 + $0xe0] sm:$0xff]
      %v339 = vld [vmem:[%s269 + $0xe8] sm:$0xff]
      %v340 = vld [vmem:[%s269 + $0xf0] sm:$0xff]
      %v341 = vld [vmem:[%s269 + $0xf8] sm:$0xff]
      %v342 = vld [vmem:[%s3] sm:$0xf]
      %vm343 = vcmask 31744
      %v345 = vsel %vm343, %v310, 0
      %v348 = vsel %vm343, %v311, 0
      %v351 = vsel %vm343, %v312, 0
      %v354 = vsel %vm343, %v313, 0
      %v357 = vsel %vm343, %v314, 0
      %v360 = vsel %vm343, %v315, 0
      %v363 = vsel %vm343, %v316, 0
      %v366 = vsel %vm343, %v317, 0
      %v369 = vsel %vm343, %v318, 0
      %v372 = vsel %vm343, %v319, 0
      %v375 = vsel %vm343, %v320, 0
      %v378 = vsel %vm343, %v321, 0
      %v381 = vsel %vm343, %v322, 0
      %v384 = vsel %vm343, %v323, 0
      %v387 = vsel %vm343, %v324, 0
      %v390 = vsel %vm343, %v325, 0
      %v393 = vsel %vm343, %v326, 0
      %v396 = vsel %vm343, %v327, 0
      %v399 = vsel %vm343, %v328, 0
      %v402 = vsel %vm343, %v329, 0
      %v405 = vsel %vm343, %v330, 0
      %v408 = vsel %vm343, %v331, 0
      %v411 = vsel %vm343, %v332, 0
      %v414 = vsel %vm343, %v333, 0
      %v417 = vsel %vm343, %v334, 0
      %v420 = vsel %vm343, %v335, 0
      %v423 = vsel %vm343, %v336, 0
      %v426 = vsel %vm343, %v337, 0
      %v429 = vsel %vm343, %v338, 0
      %v432 = vsel %vm343, %v339, 0
      %v435 = vsel %vm343, %v340, 0
      %v438 = vsel %vm343, %v341, 0
      %vm440 = vcmask 1043456
      %v442 = vsel %vm440, %v342, 0
      %444 = vmatprep.subr.mxu0 0.0
      %445 = vmatpush1.msra.mxu0 %v442
      %446 = vmatprep.subr.mxu0 0.0
      %447 = vmatpush1.msra.mxu0 0.0
      %448 = vmatprep.subr.mxu0 0.0
      %449 = vmatpush1.msra.mxu0 0.0
      %450 = vmatprep.subr.mxu0 0.0
      %451 = vmatpush1.msra.mxu0 0.0
      %452 = vmatprep.subr.mxu0 0.0
      %453 = vmatpush1.msra.mxu0 0.0
      %454 = vmatprep.subr.mxu0 0.0
      %455 = vmatpush1.msra.mxu0 0.0
      %456 = vmatprep.subr.mxu0 0.0
      %457 = vmatpush1.msra.mxu0 0.0
      %458 = vmatprep.subr.mxu0 0.0
      %459 = vmatpush1.msra.mxu0 0.0
      %460 = vmatprep.subr.mxu0 0.0
      %461 = vmatpush1.msra.mxu0 0.0
      %462 = vmatprep.subr.mxu0 0.0
      %463 = vmatpush1.msra.mxu0 0.0
      %464 = vmatprep.subr.mxu0 0.0
      %465 = vmatpush1.msra.mxu0 0.0
      %466 = vmatprep.subr.mxu0 0.0
      %467 = vmatpush1.msra.mxu0 0.0
      %468 = vmatprep.subr.mxu0 0.0
      %469 = vmatpush1.msra.mxu0 0.0
      %470 = vmatprep.subr.mxu0 0.0
      %471 = vmatpush1.msra.mxu0 0.0
      %472 = vmatprep.subr.mxu0 0.0
      %473 = vmatpush1.msra.mxu0 0.0
      %474 = vmatprep.subr.mxu0 0.0
      %475 = vmatpush1.msra.mxu0 0.0
      %476 = vmatprep.subr.mxu0 0.0
      %477 = vmatpush1.msra.mxu0 0.0
      %478 = vmatprep.subr.mxu0 0.0
      %479 = vmatpush1.msra.mxu0 0.0
      %480 = vmatprep.subr.mxu0 0.0
      %481 = vmatpush1.msra.mxu0 0.0
      %482 = vmatprep.subr.mxu0 0.0
      %483 = vmatpush1.msra.mxu0 0.0
      %484 = vmatprep.subr.mxu0 0.0
      %485 = vmatpush1.msra.mxu0 0.0
      %486 = vmatprep.subr.mxu0 0.0
      %487 = vmatpush1.msra.mxu0 0.0
      %488 = vmatprep.subr.mxu0 0.0
      %489 = vmatpush1.msra.mxu0 0.0
      %490 = vmatprep.subr.mxu0 0.0
      %491 = vmatpush1.msra.mxu0 0.0
      %492 = vmatprep.subr.mxu0 0.0
      %493 = vmatpush1.msra.mxu0 0.0
      %494 = vmatprep.subr.mxu0 0.0
      %495 = vmatpush1.msra.mxu0 0.0
      %496 = vmatprep.subr.mxu0 0.0
      %497 = vmatpush1.msra.mxu0 0.0
      %498 = vmatprep.subr.mxu0 0.0
      %499 = vmatpush1.msra.mxu0 0.0
      %500 = vmatprep.subr.mxu0 0.0
      %501 = vmatpush1.msra.mxu0 0.0
      %502 = vmatprep.subr.mxu0 0.0
      %503 = vmatpush1.msra.mxu0 0.0
      %504 = vmatprep.subr.mxu0 0.0
      %505 = vmatpush1.msra.mxu0 0.0
      %506 = vmatprep.subr.mxu0 0.0
      %507 = vmatpush1.msra.mxu0 0.0
      %508 = vmatprep.mubr.f32.mxu0 0.0
      %509 = vmatmul.mubr.f32.gmra.mrb[0].mxu0 %v345
      %v510 = vpop.f32.mrb[0].mxu0
      %v511 = vadd.f32 0.0, %v510
      %v512 = vpop.f32.mrb[0].mxu0
      %513 = vmatprep.mubr.f32.mxu0 0.0
      %514 = vmatmul.mubr.f32.gmra.mrb[0].mxu0 %v348
      %v515 = vpop.f32.mrb[0].mxu0
      %v516 = vadd.f32 0.0, %v515
      %v517 = vpop.f32.mrb[0].mxu0
      %518 = vmatprep.mubr.f32.mxu0 0.0
      %519 = vmatmul.mubr.f32.gmra.mrb[0].mxu0 %v351
      %v520 = vpop.f32.mrb[0].mxu0
      %v521 = vadd.f32 0.0, %v520
      %v522 = vpop.f32.mrb[0].mxu0
      %523 = vmatprep.mubr.f32.mxu0 0.0
      %524 = vmatmul.mubr.f32.gmra.mrb[0].mxu0 %v354
      %v525 = vpop.f32.mrb[0].mxu0
      %v526 = vadd.f32 0.0, %v525
      %v527 = vpop.f32.mrb[0].mxu0
      %528 = vmatprep.mubr.f32.mxu0 0.0
      %529 = vmatmul.mubr.f32.gmra.mrb[0].mxu0 %v357
      %v530 = vpop.f32.mrb[0].mxu0
      %v531 = vadd.f32 0.0, %v530
      %v532 = vpop.f32.mrb[0].mxu0
      %533 = vmatprep.mubr.f32.mxu0 0.0
      %534 = vmatmul.mubr.f32.gmra.mrb[0].mxu0 %v360
      %v535 = vpop.f32.mrb[0].mxu0
      %v536 = vadd.f32 0.0, %v535
      %v537 = vpop.f32.mrb[0].mxu0
      %538 = vmatprep.mubr.f32.mxu0 0.0
      %539 = vmatmul.mubr.f32.gmra.mrb[0].mxu0 %v363
      %v540 = vpop.f32.mrb[0].mxu0
      %v541 = vadd.f32 0.0, %v540
      %v542 = vpop.f32.mrb[0].mxu0
      %543 = vmatprep.mubr.f32.mxu0 0.0
      %544 = vmatmul.mubr.f32.gmra.mrb[0].mxu0 %v366
      %v545 = vpop.f32.mrb[0].mxu0
      %v546 = vadd.f32 0.0, %v545
      %v547 = vpop.f32.mrb[0].mxu0
      %548 = vmatprep.mubr.f32.mxu0 0.0
      %549 = vmatmul.mubr.f32.gmra.mrb[0].mxu0 %v369
      %v550 = vpop.f32.mrb[0].mxu0
      %v551 = vadd.f32 0.0, %v550
      %v552 = vpop.f32.mrb[0].mxu0
      %553 = vmatprep.mubr.f32.mxu0 0.0
      %554 = vmatmul.mubr.f32.gmra.mrb[0].mxu0 %v372
      %v555 = vpop.f32.mrb[0].mxu0
      %v556 = vadd.f32 0.0, %v555
      %v557 = vpop.f32.mrb[0].mxu0
      %558 = vmatprep.mubr.f32.mxu0 0.0
      %559 = vmatmul.mubr.f32.gmra.mrb[0].mxu0 %v375
      %v560 = vpop.f32.mrb[0].mxu0
      %v561 = vadd.f32 0.0, %v560
      %v562 = vpop.f32.mrb[0].mxu0
      %563 = vmatprep.mubr.f32.mxu0 0.0
      %564 = vmatmul.mubr.f32.gmra.mrb[0].mxu0 %v378
      %v565 = vpop.f32.mrb[0].mxu0
      %v566 = vadd.f32 0.0, %v565
      %v567 = vpop.f32.mrb[0].mxu0
      %568 = vmatprep.mubr.f32.mxu0 0.0
      %569 = vmatmul.mubr.f32.gmra.mrb[0].mxu0 %v381
      %v570 = vpop.f32.mrb[0].mxu0
      %v571 = vadd.f32 0.0, %v570
      %v572 = vpop.f32.mrb[0].mxu0
      %573 = vmatprep.mubr.f32.mxu0 0.0
      %574 = vmatmul.mubr.f32.gmra.mrb[0].mxu0 %v384
      %v575 = vpop.f32.mrb[0].mxu0
      %v576 = vadd.f32 0.0, %v575
      %v577 = vpop.f32.mrb[0].mxu0
      %578 = vmatprep.mubr.f32.mxu0 0.0
      %579 = vmatmul.mubr.f32.gmra.mrb[0].mxu0 %v387
      %v580 = vpop.f32.mrb[0].mxu0
      %v581 = vadd.f32 0.0, %v580
      %v582 = vpop.f32.mrb[0].mxu0
      %583 = vmatprep.mubr.f32.mxu0 0.0
      %584 = vmatmul.mubr.f32.gmra.mrb[0].mxu0 %v390
      %v585 = vpop.f32.mrb[0].mxu0
      %v586 = vadd.f32 0.0, %v585
      %v587 = vpop.f32.mrb[0].mxu0
      %588 = vmatprep.mubr.f32.mxu0 0.0
      %589 = vmatmul.mubr.f32.gmra.mrb[0].mxu0 %v393
      %v590 = vpop.f32.mrb[0].mxu0
      %v591 = vadd.f32 0.0, %v590
      %v592 = vpop.f32.mrb[0].mxu0
      %593 = vmatprep.mubr.f32.mxu0 0.0
      %594 = vmatmul.mubr.f32.gmra.mrb[0].mxu0 %v396
      %v595 = vpop.f32.mrb[0].mxu0
      %v596 = vadd.f32 0.0, %v595
      %v597 = vpop.f32.mrb[0].mxu0
      %598 = vmatprep.mubr.f32.mxu0 0.0
      %599 = vmatmul.mubr.f32.gmra.mrb[0].mxu0 %v399
      %v600 = vpop.f32.mrb[0].mxu0
      %v601 = vadd.f32 0.0, %v600
      %v602 = vpop.f32.mrb[0].mxu0
      %603 = vmatprep.mubr.f32.mxu0 0.0
      %604 = vmatmul.mubr.f32.gmra.mrb[0].mxu0 %v402
      %v605 = vpop.f32.mrb[0].mxu0
      %v606 = vadd.f32 0.0, %v605
      %v607 = vpop.f32.mrb[0].mxu0
      %608 = vmatprep.mubr.f32.mxu0 0.0
      %609 = vmatmul.mubr.f32.gmra.mrb[0].mxu0 %v405
      %v610 = vpop.f32.mrb[0].mxu0
      %v611 = vadd.f32 0.0, %v610
      %v612 = vpop.f32.mrb[0].mxu0
      %613 = vmatprep.mubr.f32.mxu0 0.0
      %614 = vmatmul.mubr.f32.gmra.mrb[0].mxu0 %v408
      %v615 = vpop.f32.mrb[0].mxu0
      %v616 = vadd.f32 0.0, %v615
      %v617 = vpop.f32.mrb[0].mxu0
      %618 = vmatprep.mubr.f32.mxu0 0.0
      %619 = vmatmul.mubr.f32.gmra.mrb[0].mxu0 %v411
      %v620 = vpop.f32.mrb[0].mxu0
      %v621 = vadd.f32 0.0, %v620
      %v622 = vpop.f32.mrb[0].mxu0
      %623 = vmatprep.mubr.f32.mxu0 0.0
      %624 = vmatmul.mubr.f32.gmra.mrb[0].mxu0 %v414
      %v625 = vpop.f32.mrb[0].mxu0
      %v626 = vadd.f32 0.0, %v625
      %v627 = vpop.f32.mrb[0].mxu0
      %628 = vmatprep.mubr.f32.mxu0 0.0
      %629 = vmatmul.mubr.f32.gmra.mrb[0].mxu0 %v417
      %v630 = vpop.f32.mrb[0].mxu0
      %v631 = vadd.f32 0.0, %v630
      %v632 = vpop.f32.mrb[0].mxu0
      %633 = vmatprep.mubr.f32.mxu0 0.0
      %634 = vmatmul.mubr.f32.gmra.mrb[0].mxu0 %v420
      %v635 = vpop.f32.mrb[0].mxu0
      %v636 = vadd.f32 0.0, %v635
      %v637 = vpop.f32.mrb[0].mxu0
      %638 = vmatprep.mubr.f32.mxu0 0.0
      %639 = vmatmul.mubr.f32.gmra.mrb[0].mxu0 %v423
      %v640 = vpop.f32.mrb[0].mxu0
      %v641 = vadd.f32 0.0, %v640
      %v642 = vpop.f32.mrb[0].mxu0
      %643 = vmatprep.mubr.f32.mxu0 0.0
      %644 = vmatmul.mubr.f32.gmra.mrb[0].mxu0 %v426
      %v645 = vpop.f32.mrb[0].mxu0
      %v646 = vadd.f32 0.0, %v645
      %v647 = vpop.f32.mrb[0].mxu0
      %648 = vmatprep.mubr.f32.mxu0 0.0
      %649 = vmatmul.mubr.f32.gmra.mrb[0].mxu0 %v429
      %v650 = vpop.f32.mrb[0].mxu0
      %v651 = vadd.f32 0.0, %v650
      %v652 = vpop.f32.mrb[0].mxu0
      %653 = vmatprep.mubr.f32.mxu0 0.0
      %654 = vmatmul.mubr.f32.gmra.mrb[0].mxu0 %v432
      %v655 = vpop.f32.mrb[0].mxu0
      %v656 = vadd.f32 0.0, %v655
      %v657 = vpop.f32.mrb[0].mxu0
      %658 = vmatprep.mubr.f32.mxu0 0.0
      %659 = vmatmul.mubr.f32.gmra.mrb[0].mxu0 %v435
      %v660 = vpop.f32.mrb[0].mxu0
      %v661 = vadd.f32 0.0, %v660
      %v662 = vpop.f32.mrb[0].mxu0
      %663 = vmatprep.mubr.f32.mxu0 0.0
      %664 = vmatmul.mubr.f32.gmra.mrb[0].mxu0 %v438
      %v665 = vpop.f32.mrb[0].mxu0
      %v666 = vadd.f32 0.0, %v665
      %v667 = vpop.f32.mrb[0].mxu0
      %668 = vdwg.mxu0
      %v670 = vsel %vm343, %v277, 0
      %v673 = vsel %vm343, %v278, 0
      %v676 = vsel %vm343, %v279, 0
      %v679 = vsel %vm343, %v280, 0
      %v682 = vsel %vm343, %v281, 0
      %v685 = vsel %vm343, %v282, 0
      %v688 = vsel %vm343, %v283, 0
      %v691 = vsel %vm343, %v284, 0
      %v694 = vsel %vm343, %v285, 0
      %v697 = vsel %vm343, %v286, 0
      %v700 = vsel %vm343, %v287, 0
      %v703 = vsel %vm343, %v288, 0
      %v706 = vsel %vm343, %v289, 0
      %v709 = vsel %vm343, %v290, 0
      %v712 = vsel %vm343, %v291, 0
      %v715 = vsel %vm343, %v292, 0
      %v718 = vsel %vm343, %v293, 0
      %v721 = vsel %vm343, %v294, 0
      %v724 = vsel %vm343, %v295, 0
      %v727 = vsel %vm343, %v296, 0
      %v730 = vsel %vm343, %v297, 0
      %v733 = vsel %vm343, %v298, 0
      %v736 = vsel %vm343, %v299, 0
      %v739 = vsel %vm343, %v300, 0
      %v742 = vsel %vm343, %v301, 0
      %v745 = vsel %vm343, %v302, 0
      %v748 = vsel %vm343, %v303, 0
      %v751 = vsel %vm343, %v304, 0
      %v754 = vsel %vm343, %v305, 0
      %v757 = vsel %vm343, %v306, 0
      %v760 = vsel %vm343, %v307, 0
      %v763 = vsel %vm343, %v308, 0
      %v766 = vsel %vm440, %v309, 0
      %768 = vmatprep.subr.mxu0 0.0
      %769 = vmatpush1.msra.mxu0 %v766
      %770 = vmatprep.subr.mxu0 0.0
      %771 = vmatpush1.msra.mxu0 0.0
      %772 = vmatprep.subr.mxu0 0.0
      %773 = vmatpush1.msra.mxu0 0.0
      %774 = vmatprep.subr.mxu0 0.0
      %775 = vmatpush1.msra.mxu0 0.0
      %776 = vmatprep.subr.mxu0 0.0
      %777 = vmatpush1.msra.mxu0 0.0
      %778 = vmatprep.subr.mxu0 0.0
      %779 = vmatpush1.msra.mxu0 0.0
      %780 = vmatprep.subr.mxu0 0.0
      %781 = vmatpush1.msra.mxu0 0.0
      %782 = vmatprep.subr.mxu0 0.0
      %783 = vmatpush1.msra.mxu0 0.0
      %784 = vmatprep.subr.mxu0 0.0
      %785 = vmatpush1.msra.mxu0 0.0
      %786 = vmatprep.subr.mxu0 0.0
      %787 = vmatpush1.msra.mxu0 0.0
      %788 = vmatprep.subr.mxu0 0.0
      %789 = vmatpush1.msra.mxu0 0.0
      %790 = vmatprep.subr.mxu0 0.0
      %791 = vmatpush1.msra.mxu0 0.0
      %792 = vmatprep.subr.mxu0 0.0
      %793 = vmatpush1.msra.mxu0 0.0
      %794 = vmatprep.subr.mxu0 0.0
      %795 = vmatpush1.msra.mxu0 0.0
      %796 = vmatprep.subr.mxu0 0.0
      %797 = vmatpush1.msra.mxu0 0.0
      %798 = vmatprep.subr.mxu0 0.0
      %799 = vmatpush1.msra.mxu0 0.0
      %800 = vmatprep.subr.mxu0 0.0
      %801 = vmatpush1.msra.mxu0 0.0
      %802 = vmatprep.subr.mxu0 0.0
      %803 = vmatpush1.msra.mxu0 0.0
      %804 = vmatprep.subr.mxu0 0.0
      %805 = vmatpush1.msra.mxu0 0.0
      %806 = vmatprep.subr.mxu0 0.0
      %807 = vmatpush1.msra.mxu0 0.0
      %808 = vmatprep.subr.mxu0 0.0
      %809 = vmatpush1.msra.mxu0 0.0
      %810 = vmatprep.subr.mxu0 0.0
      %811 = vmatpush1.msra.mxu0 0.0
      %812 = vmatprep.subr.mxu0 0.0
      %813 = vmatpush1.msra.mxu0 0.0
      %814 = vmatprep.subr.mxu0 0.0
      %815 = vmatpush1.msra.mxu0 0.0
      %816 = vmatprep.subr.mxu0 0.0
      %817 = vmatpush1.msra.mxu0 0.0
      %818 = vmatprep.subr.mxu0 0.0
      %819 = vmatpush1.msra.mxu0 0.0
      %820 = vmatprep.subr.mxu0 0.0
      %821 = vmatpush1.msra.mxu0 0.0
      %822 = vmatprep.subr.mxu0 0.0
      %823 = vmatpush1.msra.mxu0 0.0
      %824 = vmatprep.subr.mxu0 0.0
      %825 = vmatpush1.msra.mxu0 0.0
      %826 = vmatprep.subr.mxu0 0.0
      %827 = vmatpush1.msra.mxu0 0.0
      %828 = vmatprep.subr.mxu0 0.0
      %829 = vmatpush1.msra.mxu0 0.0
      %830 = vmatprep.subr.mxu0 0.0
      %831 = vmatpush1.msra.mxu0 0.0
      %832 = vmatprep.mubr.f32.mxu0 0.0
      %833 = vmatmul.mubr.f32.gmra.mrb[0].mxu0 %v670
      %v834 = vpop.f32.mrb[0].mxu0
      %v835 = vadd.f32 %v511, %v834
      %v836 = vpop.f32.mrb[0].mxu0
      %837 = vmatprep.mubr.f32.mxu0 0.0
      %838 = vmatmul.mubr.f32.gmra.mrb[0].mxu0 %v673
      %v839 = vpop.f32.mrb[0].mxu0
      %v840 = vadd.f32 %v516, %v839
      %v841 = vpop.f32.mrb[0].mxu0
      %842 = vmatprep.mubr.f32.mxu0 0.0
      %843 = vmatmul.mubr.f32.gmra.mrb[0].mxu0 %v676
      %v844 = vpop.f32.mrb[0].mxu0
      %v845 = vadd.f32 %v521, %v844
      %v846 = vpop.f32.mrb[0].mxu0
      %847 = vmatprep.mubr.f32.mxu0 0.0
      %848 = vmatmul.mubr.f32.gmra.mrb[0].mxu0 %v679
      %v849 = vpop.f32.mrb[0].mxu0
      %v850 = vadd.f32 %v526, %v849
      %v851 = vpop.f32.mrb[0].mxu0
      %852 = vmatprep.mubr.f32.mxu0 0.0
      %853 = vmatmul.mubr.f32.gmra.mrb[0].mxu0 %v682
      %v854 = vpop.f32.mrb[0].mxu0
      %v855 = vadd.f32 %v531, %v854
      %v856 = vpop.f32.mrb[0].mxu0
      %857 = vmatprep.mubr.f32.mxu0 0.0
      %858 = vmatmul.mubr.f32.gmra.mrb[0].mxu0 %v685
      %v859 = vpop.f32.mrb[0].mxu0
      %v860 = vadd.f32 %v536, %v859
      %v861 = vpop.f32.mrb[0].mxu0
      %862 = vmatprep.mubr.f32.mxu0 0.0
      %863 = vmatmul.mubr.f32.gmra.mrb[0].mxu0 %v688
      %v864 = vpop.f32.mrb[0].mxu0
      %v865 = vadd.f32 %v541, %v864
      %v866 = vpop.f32.mrb[0].mxu0
      %867 = vmatprep.mubr.f32.mxu0 0.0
      %868 = vmatmul.mubr.f32.gmra.mrb[0].mxu0 %v691
      %v869 = vpop.f32.mrb[0].mxu0
      %v870 = vadd.f32 %v546, %v869
      %v871 = vpop.f32.mrb[0].mxu0
      %872 = vmatprep.mubr.f32.mxu0 0.0
      %873 = vmatmul.mubr.f32.gmra.mrb[0].mxu0 %v694
      %v874 = vpop.f32.mrb[0].mxu0
      %v875 = vadd.f32 %v551, %v874
      %v876 = vpop.f32.mrb[0].mxu0
      %877 = vmatprep.mubr.f32.mxu0 0.0
      %878 = vmatmul.mubr.f32.gmra.mrb[0].mxu0 %v697
      %v879 = vpop.f32.mrb[0].mxu0
      %v880 = vadd.f32 %v556, %v879
      %v881 = vpop.f32.mrb[0].mxu0
      %882 = vmatprep.mubr.f32.mxu0 0.0
      %883 = vmatmul.mubr.f32.gmra.mrb[0].mxu0 %v700
      %v884 = vpop.f32.mrb[0].mxu0
      %v885 = vadd.f32 %v561, %v884
      %v886 = vpop.f32.mrb[0].mxu0
      %887 = vmatprep.mubr.f32.mxu0 0.0
      %888 = vmatmul.mubr.f32.gmra.mrb[0].mxu0 %v703
      %v889 = vpop.f32.mrb[0].mxu0
      %v890 = vadd.f32 %v566, %v889
      %v891 = vpop.f32.mrb[0].mxu0
      %892 = vmatprep.mubr.f32.mxu0 0.0
      %893 = vmatmul.mubr.f32.gmra.mrb[0].mxu0 %v706
      %v894 = vpop.f32.mrb[0].mxu0
      %v895 = vadd.f32 %v571, %v894
      %v896 = vpop.f32.mrb[0].mxu0
      %897 = vmatprep.mubr.f32.mxu0 0.0
      %898 = vmatmul.mubr.f32.gmra.mrb[0].mxu0 %v709
      %v899 = vpop.f32.mrb[0].mxu0
      %v900 = vadd.f32 %v576, %v899
      %v901 = vpop.f32.mrb[0].mxu0
      %902 = vmatprep.mubr.f32.mxu0 0.0
      %903 = vmatmul.mubr.f32.gmra.mrb[0].mxu0 %v712
      %v904 = vpop.f32.mrb[0].mxu0
      %v905 = vadd.f32 %v581, %v904
      %v906 = vpop.f32.mrb[0].mxu0
      %907 = vmatprep.mubr.f32.mxu0 0.0
      %908 = vmatmul.mubr.f32.gmra.mrb[0].mxu0 %v715
      %v909 = vpop.f32.mrb[0].mxu0
      %v910 = vadd.f32 %v586, %v909
      %v911 = vpop.f32.mrb[0].mxu0
      %912 = vmatprep.mubr.f32.mxu0 0.0
      %913 = vmatmul.mubr.f32.gmra.mrb[0].mxu0 %v718
      %v914 = vpop.f32.mrb[0].mxu0
      %v915 = vadd.f32 %v591, %v914
      %v916 = vpop.f32.mrb[0].mxu0
      %917 = vmatprep.mubr.f32.mxu0 0.0
      %918 = vmatmul.mubr.f32.gmra.mrb[0].mxu0 %v721
      %v919 = vpop.f32.mrb[0].mxu0
      %v920 = vadd.f32 %v596, %v919
      %v921 = vpop.f32.mrb[0].mxu0
      %922 = vmatprep.mubr.f32.mxu0 0.0
      %923 = vmatmul.mubr.f32.gmra.mrb[0].mxu0 %v724
      %v924 = vpop.f32.mrb[0].mxu0
      %v925 = vadd.f32 %v601, %v924
      %v926 = vpop.f32.mrb[0].mxu0
      %927 = vmatprep.mubr.f32.mxu0 0.0
      %928 = vmatmul.mubr.f32.gmra.mrb[0].mxu0 %v727
      %v929 = vpop.f32.mrb[0].mxu0
      %v930 = vadd.f32 %v606, %v929
      %v931 = vpop.f32.mrb[0].mxu0
      %932 = vmatprep.mubr.f32.mxu0 0.0
      %933 = vmatmul.mubr.f32.gmra.mrb[0].mxu0 %v730
      %v934 = vpop.f32.mrb[0].mxu0
      %v935 = vadd.f32 %v611, %v934
      %v936 = vpop.f32.mrb[0].mxu0
      %937 = vmatprep.mubr.f32.mxu0 0.0
      %938 = vmatmul.mubr.f32.gmra.mrb[0].mxu0 %v733
      %v939 = vpop.f32.mrb[0].mxu0
      %v940 = vadd.f32 %v616, %v939
      %v941 = vpop.f32.mrb[0].mxu0
      %942 = vmatprep.mubr.f32.mxu0 0.0
      %943 = vmatmul.mubr.f32.gmra.mrb[0].mxu0 %v736
      %v944 = vpop.f32.mrb[0].mxu0
      %v945 = vadd.f32 %v621, %v944
      %v946 = vpop.f32.mrb[0].mxu0
      %947 = vmatprep.mubr.f32.mxu0 0.0
      %948 = vmatmul.mubr.f32.gmra.mrb[0].mxu0 %v739
      %v949 = vpop.f32.mrb[0].mxu0
      %v950 = vadd.f32 %v626, %v949
      %v951 = vpop.f32.mrb[0].mxu0
      %952 = vmatprep.mubr.f32.mxu0 0.0
      %953 = vmatmul.mubr.f32.gmra.mrb[0].mxu0 %v742
      %v954 = vpop.f32.mrb[0].mxu0
      %v955 = vadd.f32 %v631, %v954
      %v956 = vpop.f32.mrb[0].mxu0
      %957 = vmatprep.mubr.f32.mxu0 0.0
      %958 = vmatmul.mubr.f32.gmra.mrb[0].mxu0 %v745
      %v959 = vpop.f32.mrb[0].mxu0
      %v960 = vadd.f32 %v636, %v959
      %v961 = vpop.f32.mrb[0].mxu0
      %962 = vmatprep.mubr.f32.mxu0 0.0
      %963 = vmatmul.mubr.f32.gmra.mrb[0].mxu0 %v748
      %v964 = vpop.f32.mrb[0].mxu0
      %v965 = vadd.f32 %v641, %v964
      %v966 = vpop.f32.mrb[0].mxu0
      %967 = vmatprep.mubr.f32.mxu0 0.0
      %968 = vmatmul.mubr.f32.gmra.mrb[0].mxu0 %v751
      %v969 = vpop.f32.mrb[0].mxu0
      %v970 = vadd.f32 %v646, %v969
      %v971 = vpop.f32.mrb[0].mxu0
      %972 = vmatprep.mubr.f32.mxu0 0.0
      %973 = vmatmul.mubr.f32.gmra.mrb[0].mxu0 %v754
      %v974 = vpop.f32.mrb[0].mxu0
      %v975 = vadd.f32 %v651, %v974
      %v976 = vpop.f32.mrb[0].mxu0
      %977 = vmatprep.mubr.f32.mxu0 0.0
      %978 = vmatmul.mubr.f32.gmra.mrb[0].mxu0 %v757
      %v979 = vpop.f32.mrb[0].mxu0
      %v980 = vadd.f32 %v656, %v979
      %v981 = vpop.f32.mrb[0].mxu0
      %982 = vmatprep.mubr.f32.mxu0 0.0
      %983 = vmatmul.mubr.f32.gmra.mrb[0].mxu0 %v760
      %v984 = vpop.f32.mrb[0].mxu0
      %v985 = vadd.f32 %v661, %v984
      %v986 = vpop.f32.mrb[0].mxu0
      %987 = vmatprep.mubr.f32.mxu0 0.0
      %988 = vmatmul.mubr.f32.gmra.mrb[0].mxu0 %v763
      %v989 = vpop.f32.mrb[0].mxu0
      %v990 = vadd.f32 %v666, %v989
      %v991 = vpop.f32.mrb[0].mxu0
      %992 = vdwg.mxu0
      %v993 = vld [vmem:[%s4] sm:$0x1]
      %v995 = vlaneseq
      %v996 = vshrl.u32 %v995, 7
      %v997 = vsub.s32 0, %v996
      %v998 = vrot.slane %v993, %v997
      %v1000 = vmul.f32 %v835, %v998
      %v1001 = vmul.f32 %v840, %v998
      %v1002 = vmul.f32 %v845, %v998
      %v1003 = vmul.f32 %v850, %v998
      %v1004 = vmul.f32 %v855, %v998
      %v1005 = vmul.f32 %v860, %v998
      %v1006 = vmul.f32 %v865, %v998
      %v1007 = vmul.f32 %v870, %v998
      %v1008 = vmul.f32 %v875, %v998
      %v1009 = vmul.f32 %v880, %v998
      %v1010 = vmul.f32 %v885, %v998
      %v1011 = vmul.f32 %v890, %v998
      %v1012 = vmul.f32 %v895, %v998
      %v1013 = vmul.f32 %v900, %v998
      %v1014 = vmul.f32 %v905, %v998
      %v1015 = vmul.f32 %v910, %v998
      %v1016 = vmul.f32 %v915, %v998
      %v1017 = vmul.f32 %v920, %v998
      %v1018 = vmul.f32 %v925, %v998
      %v1019 = vmul.f32 %v930, %v998
      %v1020 = vmul.f32 %v935, %v998
      %v1021 = vmul.f32 %v940, %v998
      %v1022 = vmul.f32 %v945, %v998
      %v1023 = vmul.f32 %v950, %v998
      %v1024 = vmul.f32 %v955, %v998
      %v1025 = vmul.f32 %v960, %v998
      %v1026 = vmul.f32 %v965, %v998
      %v1027 = vmul.f32 %v970, %v998
      %v1028 = vmul.f32 %v975, %v998
      %v1029 = vmul.f32 %v980, %v998
      %v1030 = vmul.f32 %v985, %v998
      %v1031 = vmul.f32 %v990, %v998
      %v1032 = vld [vmem:[%s5] sm:$0x1]
      %v1034 = vlaneseq
      %v1035 = vshrl.u32 %v1034, 7
      %v1036 = vsub.s32 0, %v1035
      %v1037 = vrot.slane %v1032, %v1036
      %v1039 = vadd.f32 %v1000, %v1037
      %v1040 = vadd.f32 %v1001, %v1037
      %v1041 = vadd.f32 %v1002, %v1037
      %v1042 = vadd.f32 %v1003, %v1037
      %v1043 = vadd.f32 %v1004, %v1037
      %v1044 = vadd.f32 %v1005, %v1037
      %v1045 = vadd.f32 %v1006, %v1037
      %v1046 = vadd.f32 %v1007, %v1037
      %v1047 = vadd.f32 %v1008, %v1037
      %v1048 = vadd.f32 %v1009, %v1037
      %v1049 = vadd.f32 %v1010, %v1037
      %v1050 = vadd.f32 %v1011, %v1037
      %v1051 = vadd.f32 %v1012, %v1037
      %v1052 = vadd.f32 %v1013, %v1037
      %v1053 = vadd.f32 %v1014, %v1037
      %v1054 = vadd.f32 %v1015, %v1037
      %v1055 = vadd.f32 %v1016, %v1037
      %v1056 = vadd.f32 %v1017, %v1037
      %v1057 = vadd.f32 %v1018, %v1037
      %v1058 = vadd.f32 %v1019, %v1037
      %v1059 = vadd.f32 %v1020, %v1037
      %v1060 = vadd.f32 %v1021, %v1037
      %v1061 = vadd.f32 %v1022, %v1037
      %v1062 = vadd.f32 %v1023, %v1037
      %v1063 = vadd.f32 %v1024, %v1037
      %v1064 = vadd.f32 %v1025, %v1037
      %v1065 = vadd.f32 %v1026, %v1037
      %v1066 = vadd.f32 %v1027, %v1037
      %v1067 = vadd.f32 %v1028, %v1037
      %v1068 = vadd.f32 %v1029, %v1037
      %v1069 = vadd.f32 %v1030, %v1037
      %v1070 = vadd.f32 %v1031, %v1037
      %v1071 = vxor.u32 %v1039, 2147483648
      %v1072 = vxor.u32 %v1040, 2147483648
      %v1073 = vxor.u32 %v1041, 2147483648
      %v1074 = vxor.u32 %v1042, 2147483648
      %v1075 = vxor.u32 %v1043, 2147483648
      %v1076 = vxor.u32 %v1044, 2147483648
      %v1077 = vxor.u32 %v1045, 2147483648
      %v1078 = vxor.u32 %v1046, 2147483648
      %v1079 = vxor.u32 %v1047, 2147483648
      %v1080 = vxor.u32 %v1048, 2147483648
      %v1081 = vxor.u32 %v1049, 2147483648
      %v1082 = vxor.u32 %v1050, 2147483648
      %v1083 = vxor.u32 %v1051, 2147483648
      %v1084 = vxor.u32 %v1052, 2147483648
      %v1085 = vxor.u32 %v1053, 2147483648
      %v1086 = vxor.u32 %v1054, 2147483648
      %v1087 = vxor.u32 %v1055, 2147483648
      %v1088 = vxor.u32 %v1056, 2147483648
      %v1089 = vxor.u32 %v1057, 2147483648
      %v1090 = vxor.u32 %v1058, 2147483648
      %v1091 = vxor.u32 %v1059, 2147483648
      %v1092 = vxor.u32 %v1060, 2147483648
      %v1093 = vxor.u32 %v1061, 2147483648
      %v1094 = vxor.u32 %v1062, 2147483648
      %v1095 = vxor.u32 %v1063, 2147483648
      %v1096 = vxor.u32 %v1064, 2147483648
      %v1097 = vxor.u32 %v1065, 2147483648
      %v1098 = vxor.u32 %v1066, 2147483648
      %v1099 = vxor.u32 %v1067, 2147483648
      %v1100 = vxor.u32 %v1068, 2147483648
      %v1101 = vxor.u32 %v1069, 2147483648
      %v1102 = vxor.u32 %v1070, 2147483648
      %v1103 = vmul.f32 %v1071, 1.442695
      %v1104 = vpow.pop %v1103
      %v1105 = vmul.f32 %v1072, 1.442695
      %v1106 = vpow.pop %v1105
      %v1107 = vmul.f32 %v1073, 1.442695
      %v1108 = vpow.pop %v1107
      %v1109 = vmul.f32 %v1074, 1.442695
      %v1110 = vpow.pop %v1109
      %v1111 = vmul.f32 %v1075, 1.442695
      %v1112 = vpow.pop %v1111
      %v1113 = vmul.f32 %v1076, 1.442695
      %v1114 = vpow.pop %v1113
      %v1115 = vmul.f32 %v1077, 1.442695
      %v1116 = vpow.pop %v1115
      %v1117 = vmul.f32 %v1078, 1.442695
      %v1118 = vpow.pop %v1117
      %v1119 = vmul.f32 %v1079, 1.442695
      %v1120 = vpow.pop %v1119
      %v1121 = vmul.f32 %v1080, 1.442695
      %v1122 = vpow.pop %v1121
      %v1123 = vmul.f32 %v1081, 1.442695
      %v1124 = vpow.pop %v1123
      %v1125 = vmul.f32 %v1082, 1.442695
      %v1126 = vpow.pop %v1125
      %v1127 = vmul.f32 %v1083, 1.442695
      %v1128 = vpow.pop %v1127
      %v1129 = vmul.f32 %v1084, 1.442695
      %v1130 = vpow.pop %v1129
      %v1131 = vmul.f32 %v1085, 1.442695
      %v1132 = vpow.pop %v1131
      %v1133 = vmul.f32 %v1086, 1.442695
      %v1134 = vpow.pop %v1133
      %v1135 = vmul.f32 %v1087, 1.442695
      %v1136 = vpow.pop %v1135
      %v1137 = vmul.f32 %v1088, 1.442695
      %v1138 = vpow.pop %v1137
      %v1139 = vmul.f32 %v1089, 1.442695
      %v1140 = vpow.pop %v1139
      %v1141 = vmul.f32 %v1090, 1.442695
      %v1142 = vpow.pop %v1141
      %v1143 = vmul.f32 %v1091, 1.442695
      %v1144 = vpow.pop %v1143
      %v1145 = vmul.f32 %v1092, 1.442695
      %v1146 = vpow.pop %v1145
      %v1147 = vmul.f32 %v1093, 1.442695
      %v1148 = vpow.pop %v1147
      %v1149 = vmul.f32 %v1094, 1.442695
      %v1150 = vpow.pop %v1149
      %v1151 = vmul.f32 %v1095, 1.442695
      %v1152 = vpow.pop %v1151
      %v1153 = vmul.f32 %v1096, 1.442695
      %v1154 = vpow.pop %v1153
      %v1155 = vmul.f32 %v1097, 1.442695
      %v1156 = vpow.pop %v1155
      %v1157 = vmul.f32 %v1098, 1.442695
      %v1158 = vpow.pop %v1157
      %v1159 = vmul.f32 %v1099, 1.442695
      %v1160 = vpow.pop %v1159
      %v1161 = vmul.f32 %v1100, 1.442695
      %v1162 = vpow.pop %v1161
      %v1163 = vmul.f32 %v1101, 1.442695
      %v1164 = vpow.pop %v1163
      %v1165 = vmul.f32 %v1102, 1.442695
      %v1166 = vpow.pop %v1165
      %v1167 = vadd.f32 %v1104, 1.0
      %v1168 = vadd.f32 %v1106, 1.0
      %v1169 = vadd.f32 %v1108, 1.0
      %v1170 = vadd.f32 %v1110, 1.0
      %v1171 = vadd.f32 %v1112, 1.0
      %v1172 = vadd.f32 %v1114, 1.0
      %v1173 = vadd.f32 %v1116, 1.0
      %v1174 = vadd.f32 %v1118, 1.0
      %v1175 = vadd.f32 %v1120, 1.0
      %v1176 = vadd.f32 %v1122, 1.0
      %v1177 = vadd.f32 %v1124, 1.0
      %v1178 = vadd.f32 %v1126, 1.0
      %v1179 = vadd.f32 %v1128, 1.0
      %v1180 = vadd.f32 %v1130, 1.0
      %v1181 = vadd.f32 %v1132, 1.0
      %v1182 = vadd.f32 %v1134, 1.0
      %v1183 = vadd.f32 %v1136, 1.0
      %v1184 = vadd.f32 %v1138, 1.0
      %v1185 = vadd.f32 %v1140, 1.0
      %v1186 = vadd.f32 %v1142, 1.0
      %v1187 = vadd.f32 %v1144, 1.0
      %v1188 = vadd.f32 %v1146, 1.0
      %v1189 = vadd.f32 %v1148, 1.0
      %v1190 = vadd.f32 %v1150, 1.0
      %v1191 = vadd.f32 %v1152, 1.0
      %v1192 = vadd.f32 %v1154, 1.0
      %v1193 = vadd.f32 %v1156, 1.0
      %v1194 = vadd.f32 %v1158, 1.0
      %v1195 = vadd.f32 %v1160, 1.0
      %v1196 = vadd.f32 %v1162, 1.0
      %v1197 = vadd.f32 %v1164, 1.0
      %v1198 = vadd.f32 %v1166, 1.0
      %v1199 = vrcp.pop %v1167
      %v1200 = vmul.f32 1.0, %v1199
      %v1201 = vrcp.pop %v1168
      %v1202 = vmul.f32 1.0, %v1201
      %v1203 = vrcp.pop %v1169
      %v1204 = vmul.f32 1.0, %v1203
      %v1205 = vrcp.pop %v1170
      %v1206 = vmul.f32 1.0, %v1205
      %v1207 = vrcp.pop %v1171
      %v1208 = vmul.f32 1.0, %v1207
      %v1209 = vrcp.pop %v1172
      %v1210 = vmul.f32 1.0, %v1209
      %v1211 = vrcp.pop %v1173
      %v1212 = vmul.f32 1.0, %v1211
      %v1213 = vrcp.pop %v1174
      %v1214 = vmul.f32 1.0, %v1213
      %v1215 = vrcp.pop %v1175
      %v1216 = vmul.f32 1.0, %v1215
      %v1217 = vrcp.pop %v1176
      %v1218 = vmul.f32 1.0, %v1217
      %v1219 = vrcp.pop %v1177
      %v1220 = vmul.f32 1.0, %v1219
      %v1221 = vrcp.pop %v1178
      %v1222 = vmul.f32 1.0, %v1221
      %v1223 = vrcp.pop %v1179
      %v1224 = vmul.f32 1.0, %v1223
      %v1225 = vrcp.pop %v1180
      %v1226 = vmul.f32 1.0, %v1225
      %v1227 = vrcp.pop %v1181
      %v1228 = vmul.f32 1.0, %v1227
      %v1229 = vrcp.pop %v1182
      %v1230 = vmul.f32 1.0, %v1229
      %v1231 = vrcp.pop %v1183
      %v1232 = vmul.f32 1.0, %v1231
      %v1233 = vrcp.pop %v1184
      %v1234 = vmul.f32 1.0, %v1233
      %v1235 = vrcp.pop %v1185
      %v1236 = vmul.f32 1.0, %v1235
      %v1237 = vrcp.pop %v1186
      %v1238 = vmul.f32 1.0, %v1237
      %v1239 = vrcp.pop %v1187
      %v1240 = vmul.f32 1.0, %v1239
      %v1241 = vrcp.pop %v1188
      %v1242 = vmul.f32 1.0, %v1241
      %v1243 = vrcp.pop %v1189
      %v1244 = vmul.f32 1.0, %v1243
      %v1245 = vrcp.pop %v1190
      %v1246 = vmul.f32 1.0, %v1245
      %v1247 = vrcp.pop %v1191
      %v1248 = vmul.f32 1.0, %v1247
      %v1249 = vrcp.pop %v1192
      %v1250 = vmul.f32 1.0, %v1249
      %v1251 = vrcp.pop %v1193
      %v1252 = vmul.f32 1.0, %v1251
      %v1253 = vrcp.pop %v1194
      %v1254 = vmul.f32 1.0, %v1253
      %v1255 = vrcp.pop %v1195
      %v1256 = vmul.f32 1.0, %v1255
      %v1257 = vrcp.pop %v1196
      %v1258 = vmul.f32 1.0, %v1257
      %v1259 = vrcp.pop %v1197
      %v1260 = vmul.f32 1.0, %v1259
      %v1261 = vrcp.pop %v1198
      %v1262 = vmul.f32 1.0, %v1261
      %v1263 = vmul.f32 %v1039, %v1200
      %v1264 = vmul.f32 %v1040, %v1202
      %v1265 = vmul.f32 %v1041, %v1204
      %v1266 = vmul.f32 %v1042, %v1206
      %v1267 = vmul.f32 %v1043, %v1208
      %v1268 = vmul.f32 %v1044, %v1210
      %v1269 = vmul.f32 %v1045, %v1212
      %v1270 = vmul.f32 %v1046, %v1214
      %v1271 = vmul.f32 %v1047, %v1216
      %v1272 = vmul.f32 %v1048, %v1218
      %v1273 = vmul.f32 %v1049, %v1220
      %v1274 = vmul.f32 %v1050, %v1222
      %v1275 = vmul.f32 %v1051, %v1224
      %v1276 = vmul.f32 %v1052, %v1226
      %v1277 = vmul.f32 %v1053, %v1228
      %v1278 = vmul.f32 %v1054, %v1230
      %v1279 = vmul.f32 %v1055, %v1232
      %v1280 = vmul.f32 %v1056, %v1234
      %v1281 = vmul.f32 %v1057, %v1236
      %v1282 = vmul.f32 %v1058, %v1238
      %v1283 = vmul.f32 %v1059, %v1240
      %v1284 = vmul.f32 %v1060, %v1242
      %v1285 = vmul.f32 %v1061, %v1244
      %v1286 = vmul.f32 %v1062, %v1246
      %v1287 = vmul.f32 %v1063, %v1248
      %v1288 = vmul.f32 %v1064, %v1250
      %v1289 = vmul.f32 %v1065, %v1252
      %v1290 = vmul.f32 %v1066, %v1254
      %v1291 = vmul.f32 %v1067, %v1256
      %v1292 = vmul.f32 %v1068, %v1258
      %v1293 = vmul.f32 %v1069, %v1260
      %v1294 = vmul.f32 %v1070, %v1262
      %vm1295 = vcmask 64512
      %1296 = vst.msk [vmem:[%s275] sm:$0xff] %vm1295, %v1263
      %1297 = vst.msk [vmem:[%s275 + $0x8] sm:$0xff] %vm1295, %v1264
      %1298 = vst.msk [vmem:[%s275 + $0x10] sm:$0xff] %vm1295, %v1265
      %1299 = vst.msk [vmem:[%s275 + $0x18] sm:$0xff] %vm1295, %v1266
      %1300 = vst.msk [vmem:[%s275 + $0x20] sm:$0xff] %vm1295, %v1267
      %1301 = vst.msk [vmem:[%s275 + $0x28] sm:$0xff] %vm1295, %v1268
      %1302 = vst.msk [vmem:[%s275 + $0x30] sm:$0xff] %vm1295, %v1269
      %1303 = vst.msk [vmem:[%s275 + $0x38] sm:$0xff] %vm1295, %v1270
      %1304 = vst.msk [vmem:[%s275 + $0x40] sm:$0xff] %vm1295, %v1271
      %1305 = vst.msk [vmem:[%s275 + $0x48] sm:$0xff] %vm1295, %v1272
      %1306 = vst.msk [vmem:[%s275 + $0x50] sm:$0xff] %vm1295, %v1273
      %1307 = vst.msk [vmem:[%s275 + $0x58] sm:$0xff] %vm1295, %v1274
      %1308 = vst.msk [vmem:[%s275 + $0x60] sm:$0xff] %vm1295, %v1275
      %1309 = vst.msk [vmem:[%s275 + $0x68] sm:$0xff] %vm1295, %v1276
      %1310 = vst.msk [vmem:[%s275 + $0x70] sm:$0xff] %vm1295, %v1277
      %1311 = vst.msk [vmem:[%s275 + $0x78] sm:$0xff] %vm1295, %v1278
      %1312 = vst.msk [vmem:[%s275 + $0x80] sm:$0xff] %vm1295, %v1279
      %1313 = vst.msk [vmem:[%s275 + $0x88] sm:$0xff] %vm1295, %v1280
      %1314 = vst.msk [vmem:[%s275 + $0x90] sm:$0xff] %vm1295, %v1281
      %1315 = vst.msk [vmem:[%s275 + $0x98] sm:$0xff] %vm1295, %v1282
      %1316 = vst.msk [vmem:[%s275 + $0xa0] sm:$0xff] %vm1295, %v1283
      %1317 = vst.msk [vmem:[%s275 + $0xa8] sm:$0xff] %vm1295, %v1284
      %1318 = vst.msk [vmem:[%s275 + $0xb0] sm:$0xff] %vm1295, %v1285
      %1319 = vst.msk [vmem:[%s275 + $0xb8] sm:$0xff] %vm1295, %v1286
      %1320 = vst.msk [vmem:[%s275 + $0xc0] sm:$0xff] %vm1295, %v1287
      %1321 = vst.msk [vmem:[%s275 + $0xc8] sm:$0xff] %vm1295, %v1288
      %1322 = vst.msk [vmem:[%s275 + $0xd0] sm:$0xff] %vm1295, %v1289
      %1323 = vst.msk [vmem:[%s275 + $0xd8] sm:$0xff] %vm1295, %v1290
      %1324 = vst.msk [vmem:[%s275 + $0xe0] sm:$0xff] %vm1295, %v1291
      %1325 = vst.msk [vmem:[%s275 + $0xe8] sm:$0xff] %vm1295, %v1292
      %1326 = vst.msk [vmem:[%s275 + $0xf0] sm:$0xff] %vm1295, %v1293
      %1327 = vst.msk [vmem:[%s275 + $0xf8] sm:$0xff] %vm1295, %v1294
      %s1328 = smul.u32 32, %s17
      %p1329 = scmp.lt.s32.totalorder %s1328, 63
      %s1330 = scalar_select %p1329, %s1328, 63
      %s1331 = smul.addr %s1330, 8
      %s1332 = scalar_lea.vmem %s6, %s1331
      // Predicated region
      $region45: #{_lambda_.5} parent=43 // pred_check
        %p1333 = pneg %p171
      $region46: #{_lambda_.5} parent=43 // pred_check_branch
        %1335 = sbr.rel (%p1333) target = $region48
      $region47: #{_lambda_.5} parent=43 // pred_region
        %s1336 = smul.u32 32, %s17
      $region48: #{_lambda_.5} parent=43 // pred_fallthru
        _
    $region44: #{_lambda_.5} parent=5 // pred_fallthru
      _
    %p1337 = scmp.le.s32.totalorder 2, %s12
    // Predicated region
    $region49: #{_lambda_.5} parent=5 // pred_check
      %p1338 = pneg %p1337
    $region50: #{_lambda_.5} parent=5 // pred_check_branch
      %1340 = sbr.rel (%p1338) target = $region52
    $region51: #{_lambda_.5} parent=5 // pred_region
      %s1341 = ssub.s32 %s12, 2
      // Predicated region
      $region53: #{_lambda_.5} parent=51 // pred_check
        %p1342 = pneg %p177
      $region54: #{_lambda_.5} parent=51 // pred_check_branch
        %1344 = sbr.rel (%p1342) target = $region56
      $region55: #{_lambda_.5} parent=51 // pred_region
        %s1345 = smul.u32 32, %s18
        %p1346 = scmp.lt.s32.totalorder %s1345, 63
        %s1347 = scalar_select %p1346, %s1345, 63
        %s1348 = smul.addr %s1347, 8
        %s1349 = scalar_lea.vmem %s6, %s1348
      $region56: #{_lambda_.5} parent=51 // pred_fallthru
        _
    $region52: #{_lambda_.5} parent=5 // pred_fallthru
      _
  $region6: #{_lambda_.5} parent=0 // loop_footer
    %s16 = sadd.s32 1, %s12
  $region7: #{_lambda_.5} parent=0 // loop_footer_branch
    %11 = sbr.rel target = $region3
  $region8: #{_lambda_.5} parent=0 // loop_exit
    _

// kernel: _lambda_.4
$region0: #{_lambda_.4}
  #allocation0 [shape = 'u32[]', space=smem, size = 0x4, offset = 0x4, fixed_abs, tag = 'smem constant byte address 0x4 - core index']
  #allocation1 [shape = 'u32[144,128]{1,0:T(1,128)}', space=vmem, size = 0x12000, scoped, tag = 'internal scratch']
  #allocation2 [shape = 'f32[18,18,4]{2,1,0:T(8,128)}', space=vmem, size = 0x36000, scoped, tag = 'scratch operand']
  %s0 = inlined_call_operand.vmem [shape: f32[2,16,16,4], index: 0, kind: input, shape index: {}]
  %s1 = inlined_call_operand.vmem [shape: f32[4,4], index: 1, kind: input, shape index: {}]
  %s2 = inlined_call_operand.vmem [shape: f32[1,4], index: 2, kind: input, shape index: {}]
  %s3 = inlined_call_operand.vmem [shape: f32[1,4], index: 3, kind: input, shape index: {}]
  %s4 = inlined_call_operand.vmem [shape: f32[36,4], index: 4, kind: input, shape index: {}]
  %s5 = inlined_call_operand.vmem [shape: f32[1,4], index: 5, kind: input, shape index: {}]
  %s6 = inlined_call_operand.vmem [shape: f32[1,4], index: 6, kind: input, shape index: {}]
  %s7 = inlined_call_operand.vmem [shape: f32[2,16,16,4], index: 7, kind: output, shape index: {}]
  %s8 = sld [smem:[#allocation0]]
  $region61: #{_lambda_.4} parent=0
    _
  %s10 = ssub.s32 1, %s8
  %s11 = scalar_select 0, %s10, %s8
  loop: start=0, step=1, limit=4
  $region2: #{_lambda_.4} parent=0 // loop_pre_header
    _
  $region3: #{_lambda_.4} parent=0 // loop_header
    %s13 = sphi 0, %s17
    %p14 = scmp.ge.s32.totalorder %s13, 4
    %s23 = sphi 0, %s25
    %s26 = sphi 0, %s23
    %s27 = sphi 0, %s26
    %s43 = sphi 0, %s27
    %s47 = sphi 0, %s47
    %s49 = sphi 0, %s47
    %s50 = sphi 0, %s49
    %s64 = sphi 0, %s50
    %s68 = sphi 0, %s68
    %s70 = sphi 0, %s68
    %s71 = sphi 0, %s70
    %s85 = sphi 0, %s71
    %s89 = sphi 0, %s89
    %s91 = sphi 0, %s89
    %s92 = sphi 0, %s91
    %s106 = sphi 0, %s92
    %s110 = sphi 0, %s110
    %s112 = sphi 0, %s110
    %s113 = sphi 0, %s112
    %s127 = sphi 0, %s113
    %s131 = sphi 0, %s131
    %s133 = sphi 0, %s131
    %s134 = sphi 0, %s133
    %s148 = sphi 0, %s134
    %s152 = sphi 0, %s152
    %s154 = sphi 0, %s152
    %s155 = sphi 0, %s154
    %s169 = sphi 0, %s155
    %s175 = sphi 0, %s177
    %s178 = sphi 0, %s175
    %s179 = sphi 0, %s178
    %s195 = sphi 0, %s179
  $region4: #{_lambda_.4} parent=0 // loop_header_branch
    %16 = sbr.rel (%p14) target = $region8
  $region5: #{_lambda_.4} parent=0 // loop_body
    %s18 = ssub.s32 %s13, 1
    %s19 = ssub.s32 %s13, 2
    %s20 = sadd.s32 %s13, 1
    %s21 = ssub.s32 %s13, %s20
    %p22 = scmp.eq.s32.totalorder %s21, 0
    %s24 = sadd.s32 %s23, 1
    %s25 = scalar_select %p22, %s23, %s24
    %p28 = pneg %p22
    %p29 = scmp.eq.s32.totalorder %s13, 1
    %p30 = por %p28, %p29
    %p31 = scmp.ne.s32.totalorder %s23, %s26
    %p32 = scmp.eq.s32.totalorder %s13, 0
    %p33 = por %p31, %p32
    %p34 = scmp.ne.s32.totalorder %s23, %s26
    %p35 = scmp.eq.s32.totalorder %s18, 1
    %p36 = por %p34, %p35
    %p37 = scmp.ne.s32.totalorder %s26, %s27
    %p38 = scmp.eq.s32.totalorder %s18, 0
    %p39 = por %p37, %p38
    %p40 = scmp.ne.s32.totalorder %s26, %s27
    %p41 = scmp.eq.s32.totalorder %s19, 1
    %p42 = por %p40, %p41
    %p44 = scmp.ne.s32.totalorder %s27, %s43
    %p45 = scmp.eq.s32.totalorder %s19, 0
    %p46 = por %p44, %p45
    %s48 = sadd.s32 %s47, 1
    %p51 = scmp.eq.s32.totalorder %s13, 1
    %p52 = scmp.ne.s32.totalorder %s47, %s49
    %p53 = scmp.eq.s32.totalorder %s13, 0
    %p54 = por %p52, %p53
    %p55 = scmp.ne.s32.totalorder %s47, %s49
    %p56 = scmp.eq.s32.totalorder %s18, 1
    %p57 = por %p55, %p56
    %p58 = scmp.ne.s32.totalorder %s49, %s50
    %p59 = scmp.eq.s32.totalorder %s18, 0
    %p60 = por %p58, %p59
    %p61 = scmp.ne.s32.totalorder %s49, %s50
    %p62 = scmp.eq.s32.totalorder %s19, 1
    %p63 = por %p61, %p62
    %p65 = scmp.ne.s32.totalorder %s50, %s64
    %p66 = scmp.eq.s32.totalorder %s19, 0
    %p67 = por %p65, %p66
    %s69 = sadd.s32 %s68, 1
    %p72 = scmp.eq.s32.totalorder %s13, 1
    %p73 = scmp.ne.s32.totalorder %s68, %s70
    %p74 = scmp.eq.s32.totalorder %s13, 0
    %p75 = por %p73, %p74
    %p76 = scmp.ne.s32.totalorder %s68, %s70
    %p77 = scmp.eq.s32.totalorder %s18, 1
    %p78 = por %p76, %p77
    %p79 = scmp.ne.s32.totalorder %s70, %s71
    %p80 = scmp.eq.s32.totalorder %s18, 0
    %p81 = por %p79, %p80
    %p82 = scmp.ne.s32.totalorder %s70, %s71
    %p83 = scmp.eq.s32.totalorder %s19, 1
    %p84 = por %p82, %p83
    %p86 = scmp.ne.s32.totalorder %s71, %s85
    %p87 = scmp.eq.s32.totalorder %s19, 0
    %p88 = por %p86, %p87
    %s90 = sadd.s32 %s89, 1
    %p93 = scmp.eq.s32.totalorder %s13, 1
    %p94 = scmp.ne.s32.totalorder %s89, %s91
    %p95 = scmp.eq.s32.totalorder %s13, 0
    %p96 = por %p94, %p95
    %p97 = scmp.ne.s32.totalorder %s89, %s91
    %p98 = scmp.eq.s32.totalorder %s18, 1
    %p99 = por %p97, %p98
    %p100 = scmp.ne.s32.totalorder %s91, %s92
    %p101 = scmp.eq.s32.totalorder %s18, 0
    %p102 = por %p100, %p101
    %p103 = scmp.ne.s32.totalorder %s91, %s92
    %p104 = scmp.eq.s32.totalorder %s19, 1
    %p105 = por %p103, %p104
    %p107 = scmp.ne.s32.totalorder %s92, %s106
    %p108 = scmp.eq.s32.totalorder %s19, 0
    %p109 = por %p107, %p108
    %s111 = sadd.s32 %s110, 1
    %p114 = scmp.eq.s32.totalorder %s13, 1
    %p115 = scmp.ne.s32.totalorder %s110, %s112
    %p116 = scmp.eq.s32.totalorder %s13, 0
    %p117 = por %p115, %p116
    %p118 = scmp.ne.s32.totalorder %s110, %s112
    %p119 = scmp.eq.s32.totalorder %s18, 1
    %p120 = por %p118, %p119
    %p121 = scmp.ne.s32.totalorder %s112, %s113
    %p122 = scmp.eq.s32.totalorder %s18, 0
    %p123 = por %p121, %p122
    %p124 = scmp.ne.s32.totalorder %s112, %s113
    %p125 = scmp.eq.s32.totalorder %s19, 1
    %p126 = por %p124, %p125
    %p128 = scmp.ne.s32.totalorder %s113, %s127
    %p129 = scmp.eq.s32.totalorder %s19, 0
    %p130 = por %p128, %p129
    %s132 = sadd.s32 %s131, 1
    %p135 = scmp.eq.s32.totalorder %s13, 1
    %p136 = scmp.ne.s32.totalorder %s131, %s133
    %p137 = scmp.eq.s32.totalorder %s13, 0
    %p138 = por %p136, %p137
    %p139 = scmp.ne.s32.totalorder %s131, %s133
    %p140 = scmp.eq.s32.totalorder %s18, 1
    %p141 = por %p139, %p140
    %p142 = scmp.ne.s32.totalorder %s133, %s134
    %p143 = scmp.eq.s32.totalorder %s18, 0
    %p144 = por %p142, %p143
    %p145 = scmp.ne.s32.totalorder %s133, %s134
    %p146 = scmp.eq.s32.totalorder %s19, 1
    %p147 = por %p145, %p146
    %p149 = scmp.ne.s32.totalorder %s134, %s148
    %p150 = scmp.eq.s32.totalorder %s19, 0
    %p151 = por %p149, %p150
    %s153 = sadd.s32 %s152, 1
    %p156 = scmp.eq.s32.totalorder %s13, 1
    %p157 = scmp.ne.s32.totalorder %s152, %s154
    %p158 = scmp.eq.s32.totalorder %s13, 0
    %p159 = por %p157, %p158
    %p160 = scmp.ne.s32.totalorder %s152, %s154
    %p161 = scmp.eq.s32.totalorder %s18, 1
    %p162 = por %p160, %p161
    %p163 = scmp.ne.s32.totalorder %s154, %s155
    %p164 = scmp.eq.s32.totalorder %s18, 0
    %p165 = por %p163, %p164
    %p166 = scmp.ne.s32.totalorder %s154, %s155
    %p167 = scmp.eq.s32.totalorder %s19, 1
    %p168 = por %p166, %p167
    %p170 = scmp.ne.s32.totalorder %s155, %s169
    %p171 = scmp.eq.s32.totalorder %s19, 0
    %p172 = por %p170, %p171
    %s173 = ssub.s32 %s13, %s20
    %p174 = scmp.eq.s32.totalorder %s173, 0
    %s176 = sadd.s32 %s175, 1
    %s177 = scalar_select %p174, %s175, %s176
    %p180 = pneg %p174
    %p181 = scmp.eq.s32.totalorder %s13, 1
    %p182 = por %p180, %p181
    %p183 = scmp.ne.s32.totalorder %s175, %s178
    %p184 = scmp.eq.s32.totalorder %s13, 0
    %p185 = por %p183, %p184
    %p186 = scmp.ne.s32.totalorder %s175, %s178
    %p187 = scmp.eq.s32.totalorder %s18, 1
    %p188 = por %p186, %p187
    %p189 = scmp.ne.s32.totalorder %s178, %s179
    %p190 = scmp.eq.s32.totalorder %s18, 0
    %p191 = por %p189, %p190
    %p192 = scmp.ne.s32.totalorder %s178, %s179
    %p193 = scmp.eq.s32.totalorder %s19, 1
    %p194 = por %p192, %p193
    %p196 = scmp.ne.s32.totalorder %s179, %s195
    %p197 = scmp.eq.s32.totalorder %s19, 0
    %p198 = por %p196, %p197
    %p199 = scmp.le.s32.totalorder 1, %s13
    %p200 = scmp.lt.s32.totalorder %s13, 3
    %p201 = pnand %p199, %p200
    %p202 = pneg %p201
    // Predicated region
    $region9: #{_lambda_.4} parent=5 // pred_check
      _
    $region10: #{_lambda_.4} parent=5 // pred_check_branch
      %204 = sbr.rel (%p201) target = $region12
    $region11: #{_lambda_.4} parent=5 // pred_region
      %s205 = ssub.s32 %s13, 1
      // Predicated region
      $region13: #{_lambda_.4} parent=11 // pred_check
        %p206 = pneg %p60
      $region14: #{_lambda_.4} parent=11 // pred_check_branch
        %208 = sbr.rel (%p206) target = $region16
      $region15: #{_lambda_.4} parent=11 // pred_region
        _
      $region16: #{_lambda_.4} parent=11 // pred_fallthru
        _
      // Predicated region
      $region17: #{_lambda_.4} parent=11 // pred_check
        %p209 = pneg %p81
      $region18: #{_lambda_.4} parent=11 // pred_check_branch
        %211 = sbr.rel (%p209) target = $region20
      $region19: #{_lambda_.4} parent=11 // pred_region
        _
      $region20: #{_lambda_.4} parent=11 // pred_fallthru
        _
      // Predicated region
      $region21: #{_lambda_.4} parent=11 // pred_check
        %p212 = pneg %p102
      $region22: #{_lambda_.4} parent=11 // pred_check_branch
        %214 = sbr.rel (%p212) target = $region24
      $region23: #{_lambda_.4} parent=11 // pred_region
        _
      $region24: #{_lambda_.4} parent=11 // pred_fallthru
        _
      // Predicated region
      $region25: #{_lambda_.4} parent=11 // pred_check
        %p215 = pneg %p123
      $region26: #{_lambda_.4} parent=11 // pred_check_branch
        %217 = sbr.rel (%p215) target = $region28
      $region27: #{_lambda_.4} parent=11 // pred_region
        _
      $region28: #{_lambda_.4} parent=11 // pred_fallthru
        _
      // Predicated region
      $region29: #{_lambda_.4} parent=11 // pred_check
        %p218 = pneg %p144
      $region30: #{_lambda_.4} parent=11 // pred_check_branch
        %220 = sbr.rel (%p218) target = $region32
      $region31: #{_lambda_.4} parent=11 // pred_region
        _
      $region32: #{_lambda_.4} parent=11 // pred_fallthru
        _
      // Predicated region
      $region33: #{_lambda_.4} parent=11 // pred_check
        %p221 = pneg %p165
      $region34: #{_lambda_.4} parent=11 // pred_check_branch
        %223 = sbr.rel (%p221) target = $region36
      $region35: #{_lambda_.4} parent=11 // pred_region
        _
      $region36: #{_lambda_.4} parent=11 // pred_fallthru
        _
    $region12: #{_lambda_.4} parent=5 // pred_fallthru
      _
    %p224 = scmp.lt.s32.totalorder %s13, 2
    // Predicated region
    $region37: #{_lambda_.4} parent=5 // pred_check
      %p225 = pneg %p224
    $region38: #{_lambda_.4} parent=5 // pred_check_branch
      %227 = sbr.rel (%p225) target = $region40
    $region39: #{_lambda_.4} parent=5 // pred_region
      // Predicated region
      $region41: #{_lambda_.4} parent=39 // pred_check
        %p228 = pneg %p33
      $region42: #{_lambda_.4} parent=39 // pred_check_branch
        %230 = sbr.rel (%p228) target = $region44
      $region43: #{_lambda_.4} parent=39 // pred_region
        %p231 = scmp.lt.s32.totalorder %s13, 1
        %s232 = scalar_select %p231, %s13, 1
        %s233 = smul.addr %s232, 32
        %s234 = smul.addr %s233, 8
        %s235 = scalar_lea.vmem %s0, %s234
      $region44: #{_lambda_.4} parent=39 // pred_fallthru
        _
    $region40: #{_lambda_.4} parent=5 // pred_fallthru
      _
    %p236 = scmp.le.s32.totalorder 1, %s13
    %p237 = scmp.lt.s32.totalorder %s13, 3
    %p238 = pnand %p236, %p237
    %p239 = pneg %p238
    // Predicated region
    $region45: #{_lambda_.4} parent=5 // pred_check
      _
    $region46: #{_lambda_.4} parent=5 // pred_check_branch
      %241 = sbr.rel (%p238) target = $region48
    $region47: #{_lambda_.4} parent=5 // pred_region
      %s242 = ssub.s32 %s13, 1
      %p243 = scmp.lt.s32.totalorder %s18, 1
      %s244 = scalar_select %p243, %s18, 1
      %s245 = smul.addr %s244, 32
      %s246 = smul.addr %s245, 8
      %s247 = scalar_lea.vmem %s0, %s246
      %p248 = pneg %p39
      %p249 = pneg %p36
      %p250 = pneg %p60
      %p251 = pneg %p57
      %p252 = pneg %p81
      %p253 = pneg %p78
      %p254 = pneg %p102
      %p255 = pneg %p99
      %p256 = pneg %p123
      %p257 = pneg %p120
      %p258 = pneg %p144
      %p259 = pneg %p141
      %p260 = pneg %p165
      %p261 = pneg %p162
      %p262 = pneg %p191
      %p263 = pneg %p188
      %p264 = scmp.lt.s32.totalorder %s18, 1
      %s265 = scalar_select %p264, %s18, 1
      %s266 = smul.addr %s265, 32
      %s267 = smul.addr %s266, 8
      %s268 = scalar_lea.vmem %s7, %s267
      %p269 = scmp.lt.s32.totalorder %s18, 1
      %s270 = scalar_select %p269, %s18, 1
      %s271 = smul.addr %s270, 32
      %s272 = smul.addr %s271, 8
      %s273 = scalar_lea.vmem %s0, %s272
      %p274 = scmp.lt.s32.totalorder %s18, 1
      %s275 = scalar_select %p274, %s18, 1
      %s276 = smul.addr %s275, 32
      %s277 = smul.addr %s276, 8
      %s278 = scalar_lea.vmem %s7, %s277
      %v279 = vld [vmem:[%s273] sm:$0xff]
      %v280 = vld [vmem:[%s273 + $0x8] sm:$0xff]
      %v281 = vld [vmem:[%s273 + $0x10] sm:$0xff]
      %v282 = vld [vmem:[%s273 + $0x18] sm:$0xff]
      %v283 = vld [vmem:[%s273 + $0x20] sm:$0xff]
      %v284 = vld [vmem:[%s273 + $0x28] sm:$0xff]
      %v285 = vld [vmem:[%s273 + $0x30] sm:$0xff]
      %v286 = vld [vmem:[%s273 + $0x38] sm:$0xff]
      %v287 = vld [vmem:[%s273 + $0x40] sm:$0xff]
      %v288 = vld [vmem:[%s273 + $0x48] sm:$0xff]
      %v289 = vld [vmem:[%s273 + $0x50] sm:$0xff]
      %v290 = vld [vmem:[%s273 + $0x58] sm:$0xff]
      %v291 = vld [vmem:[%s273 + $0x60] sm:$0xff]
      %v292 = vld [vmem:[%s273 + $0x68] sm:$0xff]
      %v293 = vld [vmem:[%s273 + $0x70] sm:$0xff]
      %v294 = vld [vmem:[%s273 + $0x78] sm:$0xff]
      %v295 = vld [vmem:[%s273 + $0x80] sm:$0xff]
      %v296 = vld [vmem:[%s273 + $0x88] sm:$0xff]
      %v297 = vld [vmem:[%s273 + $0x90] sm:$0xff]
      %v298 = vld [vmem:[%s273 + $0x98] sm:$0xff]
      %v299 = vld [vmem:[%s273 + $0xa0] sm:$0xff]
      %v300 = vld [vmem:[%s273 + $0xa8] sm:$0xff]
      %v301 = vld [vmem:[%s273 + $0xb0] sm:$0xff]
      %v302 = vld [vmem:[%s273 + $0xb8] sm:$0xff]
      %v303 = vld [vmem:[%s273 + $0xc0] sm:$0xff]
      %v304 = vld [vmem:[%s273 + $0xc8] sm:$0xff]
      %v305 = vld [vmem:[%s273 + $0xd0] sm:$0xff]
      %v306 = vld [vmem:[%s273 + $0xd8] sm:$0xff]
      %v307 = vld [vmem:[%s273 + $0xe0] sm:$0xff]
      %v308 = vld [vmem:[%s273 + $0xe8] sm:$0xff]
      %v309 = vld [vmem:[%s273 + $0xf0] sm:$0xff]
      %v310 = vld [vmem:[%s273 + $0xf8] sm:$0xff]
      %v311 = vld [vmem:[%s1] sm:$0xf]
      %vm312 = vcmask 31744
      %v314 = vsel %vm312, %v279, 0
      %v317 = vsel %vm312, %v280, 0
      %v320 = vsel %vm312, %v281, 0
      %v323 = vsel %vm312, %v282, 0
      %v326 = vsel %vm312, %v283, 0
      %v329 = vsel %vm312, %v284, 0
      %v332 = vsel %vm312, %v285, 0
      %v335 = vsel %vm312, %v286, 0
      %v338 = vsel %vm312, %v287, 0
      %v341 = vsel %vm312, %v288, 0
      %v344 = vsel %vm312, %v289, 0
      %v347 = vsel %vm312, %v290, 0
      %v350 = vsel %vm312, %v291, 0
      %v353 = vsel %vm312, %v292, 0
      %v356 = vsel %vm312, %v293, 0
      %v359 = vsel %vm312, %v294, 0
      %v362 = vsel %vm312, %v295, 0
      %v365 = vsel %vm312, %v296, 0
      %v368 = vsel %vm312, %v297, 0
      %v371 = vsel %vm312, %v298, 0
      %v374 = vsel %vm312, %v299, 0
      %v377 = vsel %vm312, %v300, 0
      %v380 = vsel %vm312, %v301, 0
      %v383 = vsel %vm312, %v302, 0
      %v386 = vsel %vm312, %v303, 0
      %v389 = vsel %vm312, %v304, 0
      %v392 = vsel %vm312, %v305, 0
      %v395 = vsel %vm312, %v306, 0
      %v398 = vsel %vm312, %v307, 0
      %v401 = vsel %vm312, %v308, 0
      %v404 = vsel %vm312, %v309, 0
      %v407 = vsel %vm312, %v310, 0
      %vm409 = vcmask 1043456
      %v411 = vsel %vm409, %v311, 0
      %413 = vmatprep.subr.mxu0 0.0
      %414 = vmatpush1.msra.mxu0 %v411
      %415 = vmatprep.subr.mxu0 0.0
      %416 = vmatpush1.msra.mxu0 0.0
      %417 = vmatprep.subr.mxu0 0.0
      %418 = vmatpush1.msra.mxu0 0.0
      %419 = vmatprep.subr.mxu0 0.0
      %420 = vmatpush1.msra.mxu0 0.0
      %421 = vmatprep.subr.mxu0 0.0
      %422 = vmatpush1.msra.mxu0 0.0
      %423 = vmatprep.subr.mxu0 0.0
      %424 = vmatpush1.msra.mxu0 0.0
      %425 = vmatprep.subr.mxu0 0.0
      %426 = vmatpush1.msra.mxu0 0.0
      %427 = vmatprep.subr.mxu0 0.0
      %428 = vmatpush1.msra.mxu0 0.0
      %429 = vmatprep.subr.mxu0 0.0
      %430 = vmatpush1.msra.mxu0 0.0
      %431 = vmatprep.subr.mxu0 0.0
      %432 = vmatpush1.msra.mxu0 0.0
      %433 = vmatprep.subr.mxu0 0.0
      %434 = vmatpush1.msra.mxu0 0.0
      %435 = vmatprep.subr.mxu0 0.0
      %436 = vmatpush1.msra.mxu0 0.0
      %437 = vmatprep.subr.mxu0 0.0
      %438 = vmatpush1.msra.mxu0 0.0
      %439 = vmatprep.subr.mxu0 0.0
      %440 = vmatpush1.msra.mxu0 0.0
      %441 = vmatprep.subr.mxu0 0.0
      %442 = vmatpush1.msra.mxu0 0.0
      %443 = vmatprep.subr.mxu0 0.0
      %444 = vmatpush1.msra.mxu0 0.0
      %445 = vmatprep.subr.mxu0 0.0
      %446 = vmatpush1.msra.mxu0 0.0
      %447 = vmatprep.subr.mxu0 0.0
      %448 = vmatpush1.msra.mxu0 0.0
      %449 = vmatprep.subr.mxu0 0.0
      %450 = vmatpush1.msra.mxu0 0.0
      %451 = vmatprep.subr.mxu0 0.0
      %452 = vmatpush1.msra.mxu0 0.0
      %453 = vmatprep.subr.mxu0 0.0
      %454 = vmatpush1.msra.mxu0 0.0
      %455 = vmatprep.subr.mxu0 0.0
      %456 = vmatpush1.msra.mxu0 0.0
      %457 = vmatprep.subr.mxu0 0.0
      %458 = vmatpush1.msra.mxu0 0.0
      %459 = vmatprep.subr.mxu0 0.0
      %460 = vmatpush1.msra.mxu0 0.0
      %461 = vmatprep.subr.mxu0 0.0
      %462 = vmatpush1.msra.mxu0 0.0
      %463 = vmatprep.subr.mxu0 0.0
      %464 = vmatpush1.msra.mxu0 0.0
      %465 = vmatprep.subr.mxu0 0.0
      %466 = vmatpush1.msra.mxu0 0.0
      %467 = vmatprep.subr.mxu0 0.0
      %468 = vmatpush1.msra.mxu0 0.0
      %469 = vmatprep.subr.mxu0 0.0
      %470 = vmatpush1.msra.mxu0 0.0
      %471 = vmatprep.subr.mxu0 0.0
      %472 = vmatpush1.msra.mxu0 0.0
      %473 = vmatprep.subr.mxu0 0.0
      %474 = vmatpush1.msra.mxu0 0.0
      %475 = vmatprep.subr.mxu0 0.0
      %476 = vmatpush1.msra.mxu0 0.0
      %477 = vmatprep.mubr.f32.mxu0 0.0
      %478 = vmatmul.mubr.f32.gmra.mrb[0].mxu0 %v314
      %v479 = vpop.f32.mrb[0].mxu0
      %v480 = vadd.f32 0.0, %v479
      %v481 = vpop.f32.mrb[0].mxu0
      %482 = vmatprep.mubr.f32.mxu0 0.0
      %483 = vmatmul.mubr.f32.gmra.mrb[0].mxu0 %v317
      %v484 = vpop.f32.mrb[0].mxu0
      %v485 = vadd.f32 0.0, %v484
      %v486 = vpop.f32.mrb[0].mxu0
      %487 = vmatprep.mubr.f32.mxu0 0.0
      %488 = vmatmul.mubr.f32.gmra.mrb[0].mxu0 %v320
      %v489 = vpop.f32.mrb[0].mxu0
      %v490 = vadd.f32 0.0, %v489
      %v491 = vpop.f32.mrb[0].mxu0
      %492 = vmatprep.mubr.f32.mxu0 0.0
      %493 = vmatmul.mubr.f32.gmra.mrb[0].mxu0 %v323
      %v494 = vpop.f32.mrb[0].mxu0
      %v495 = vadd.f32 0.0, %v494
      %v496 = vpop.f32.mrb[0].mxu0
      %497 = vmatprep.mubr.f32.mxu0 0.0
      %498 = vmatmul.mubr.f32.gmra.mrb[0].mxu0 %v326
      %v499 = vpop.f32.mrb[0].mxu0
      %v500 = vadd.f32 0.0, %v499
      %v501 = vpop.f32.mrb[0].mxu0
      %502 = vmatprep.mubr.f32.mxu0 0.0
      %503 = vmatmul.mubr.f32.gmra.mrb[0].mxu0 %v329
      %v504 = vpop.f32.mrb[0].mxu0
      %v505 = vadd.f32 0.0, %v504
      %v506 = vpop.f32.mrb[0].mxu0
      %507 = vmatprep.mubr.f32.mxu0 0.0
      %508 = vmatmul.mubr.f32.gmra.mrb[0].mxu0 %v332
      %v509 = vpop.f32.mrb[0].mxu0
      %v510 = vadd.f32 0.0, %v509
      %v511 = vpop.f32.mrb[0].mxu0
      %512 = vmatprep.mubr.f32.mxu0 0.0
      %513 = vmatmul.mubr.f32.gmra.mrb[0].mxu0 %v335
      %v514 = vpop.f32.mrb[0].mxu0
      %v515 = vadd.f32 0.0, %v514
      %v516 = vpop.f32.mrb[0].mxu0
      %517 = vmatprep.mubr.f32.mxu0 0.0
      %518 = vmatmul.mubr.f32.gmra.mrb[0].mxu0 %v338
      %v519 = vpop.f32.mrb[0].mxu0
      %v520 = vadd.f32 0.0, %v519
      %v521 = vpop.f32.mrb[0].mxu0
      %522 = vmatprep.mubr.f32.mxu0 0.0
      %523 = vmatmul.mubr.f32.gmra.mrb[0].mxu0 %v341
      %v524 = vpop.f32.mrb[0].mxu0
      %v525 = vadd.f32 0.0, %v524
      %v526 = vpop.f32.mrb[0].mxu0
      %527 = vmatprep.mubr.f32.mxu0 0.0
      %528 = vmatmul.mubr.f32.gmra.mrb[0].mxu0 %v344
      %v529 = vpop.f32.mrb[0].mxu0
      %v530 = vadd.f32 0.0, %v529
      %v531 = vpop.f32.mrb[0].mxu0
      %532 = vmatprep.mubr.f32.mxu0 0.0
      %533 = vmatmul.mubr.f32.gmra.mrb[0].mxu0 %v347
      %v534 = vpop.f32.mrb[0].mxu0
      %v535 = vadd.f32 0.0, %v534
      %v536 = vpop.f32.mrb[0].mxu0
      %537 = vmatprep.mubr.f32.mxu0 0.0
      %538 = vmatmul.mubr.f32.gmra.mrb[0].mxu0 %v350
      %v539 = vpop.f32.mrb[0].mxu0
      %v540 = vadd.f32 0.0, %v539
      %v541 = vpop.f32.mrb[0].mxu0
      %542 = vmatprep.mubr.f32.mxu0 0.0
      %543 = vmatmul.mubr.f32.gmra.mrb[0].mxu0 %v353
      %v544 = vpop.f32.mrb[0].mxu0
      %v545 = vadd.f32 0.0, %v544
      %v546 = vpop.f32.mrb[0].mxu0
      %547 = vmatprep.mubr.f32.mxu0 0.0
      %548 = vmatmul.mubr.f32.gmra.mrb[0].mxu0 %v356
      %v549 = vpop.f32.mrb[0].mxu0
      %v550 = vadd.f32 0.0, %v549
      %v551 = vpop.f32.mrb[0].mxu0
      %552 = vmatprep.mubr.f32.mxu0 0.0
      %553 = vmatmul.mubr.f32.gmra.mrb[0].mxu0 %v359
      %v554 = vpop.f32.mrb[0].mxu0
      %v555 = vadd.f32 0.0, %v554
      %v556 = vpop.f32.mrb[0].mxu0
      %557 = vmatprep.mubr.f32.mxu0 0.0
      %558 = vmatmul.mubr.f32.gmra.mrb[0].mxu0 %v362
      %v559 = vpop.f32.mrb[0].mxu0
      %v560 = vadd.f32 0.0, %v559
      %v561 = vpop.f32.mrb[0].mxu0
      %562 = vmatprep.mubr.f32.mxu0 0.0
      %563 = vmatmul.mubr.f32.gmra.mrb[0].mxu0 %v365
      %v564 = vpop.f32.mrb[0].mxu0
      %v565 = vadd.f32 0.0, %v564
      %v566 = vpop.f32.mrb[0].mxu0
      %567 = vmatprep.mubr.f32.mxu0 0.0
      %568 = vmatmul.mubr.f32.gmra.mrb[0].mxu0 %v368
      %v569 = vpop.f32.mrb[0].mxu0
      %v570 = vadd.f32 0.0, %v569
      %v571 = vpop.f32.mrb[0].mxu0
      %572 = vmatprep.mubr.f32.mxu0 0.0
      %573 = vmatmul.mubr.f32.gmra.mrb[0].mxu0 %v371
      %v574 = vpop.f32.mrb[0].mxu0
      %v575 = vadd.f32 0.0, %v574
      %v576 = vpop.f32.mrb[0].mxu0
      %577 = vmatprep.mubr.f32.mxu0 0.0
      %578 = vmatmul.mubr.f32.gmra.mrb[0].mxu0 %v374
      %v579 = vpop.f32.mrb[0].mxu0
      %v580 = vadd.f32 0.0, %v579
      %v581 = vpop.f32.mrb[0].mxu0
      %582 = vmatprep.mubr.f32.mxu0 0.0
      %583 = vmatmul.mubr.f32.gmra.mrb[0].mxu0 %v377
      %v584 = vpop.f32.mrb[0].mxu0
      %v585 = vadd.f32 0.0, %v584
      %v586 = vpop.f32.mrb[0].mxu0
      %587 = vmatprep.mubr.f32.mxu0 0.0
      %588 = vmatmul.mubr.f32.gmra.mrb[0].mxu0 %v380
      %v589 = vpop.f32.mrb[0].mxu0
      %v590 = vadd.f32 0.0, %v589
      %v591 = vpop.f32.mrb[0].mxu0
      %592 = vmatprep.mubr.f32.mxu0 0.0
      %593 = vmatmul.mubr.f32.gmra.mrb[0].mxu0 %v383
      %v594 = vpop.f32.mrb[0].mxu0
      %v595 = vadd.f32 0.0, %v594
      %v596 = vpop.f32.mrb[0].mxu0
      %597 = vmatprep.mubr.f32.mxu0 0.0
      %598 = vmatmul.mubr.f32.gmra.mrb[0].mxu0 %v386
      %v599 = vpop.f32.mrb[0].mxu0
      %v600 = vadd.f32 0.0, %v599
      %v601 = vpop.f32.mrb[0].mxu0
      %602 = vmatprep.mubr.f32.mxu0 0.0
      %603 = vmatmul.mubr.f32.gmra.mrb[0].mxu0 %v389
      %v604 = vpop.f32.mrb[0].mxu0
      %v605 = vadd.f32 0.0, %v604
      %v606 = vpop.f32.mrb[0].mxu0
      %607 = vmatprep.mubr.f32.mxu0 0.0
      %608 = vmatmul.mubr.f32.gmra.mrb[0].mxu0 %v392
      %v609 = vpop.f32.mrb[0].mxu0
      %v610 = vadd.f32 0.0, %v609
      %v611 = vpop.f32.mrb[0].mxu0
      %612 = vmatprep.mubr.f32.mxu0 0.0
      %613 = vmatmul.mubr.f32.gmra.mrb[0].mxu0 %v395
      %v614 = vpop.f32.mrb[0].mxu0
      %v615 = vadd.f32 0.0, %v614
      %v616 = vpop.f32.mrb[0].mxu0
      %617 = vmatprep.mubr.f32.mxu0 0.0
      %618 = vmatmul.mubr.f32.gmra.mrb[0].mxu0 %v398
      %v619 = vpop.f32.mrb[0].mxu0
      %v620 = vadd.f32 0.0, %v619
      %v621 = vpop.f32.mrb[0].mxu0
      %622 = vmatprep.mubr.f32.mxu0 0.0
      %623 = vmatmul.mubr.f32.gmra.mrb[0].mxu0 %v401
      %v624 = vpop.f32.mrb[0].mxu0
      %v625 = vadd.f32 0.0, %v624
      %v626 = vpop.f32.mrb[0].mxu0
      %627 = vmatprep.mubr.f32.mxu0 0.0
      %628 = vmatmul.mubr.f32.gmra.mrb[0].mxu0 %v404
      %v629 = vpop.f32.mrb[0].mxu0
      %v630 = vadd.f32 0.0, %v629
      %v631 = vpop.f32.mrb[0].mxu0
      %632 = vmatprep.mubr.f32.mxu0 0.0
      %633 = vmatmul.mubr.f32.gmra.mrb[0].mxu0 %v407
      %v634 = vpop.f32.mrb[0].mxu0
      %v635 = vadd.f32 0.0, %v634
      %v636 = vpop.f32.mrb[0].mxu0
      %637 = vdwg.mxu0
      %v638 = vld [vmem:[%s2] sm:$0x1]
      %v640 = vlaneseq
      %v641 = vshrl.u32 %v640, 7
      %v642 = vsub.s32 0, %v641
      %v643 = vrot.slane %v638, %v642
      %v645 = vmul.f32 %v480, %v643
      %v646 = vmul.f32 %v485, %v643
      %v647 = vmul.f32 %v490, %v643
      %v648 = vmul.f32 %v495, %v643
      %v649 = vmul.f32 %v500, %v643
      %v650 = vmul.f32 %v505, %v643
      %v651 = vmul.f32 %v510, %v643
      %v652 = vmul.f32 %v515, %v643
      %v653 = vmul.f32 %v520, %v643
      %v654 = vmul.f32 %v525, %v643
      %v655 = vmul.f32 %v530, %v643
      %v656 = vmul.f32 %v535, %v643
      %v657 = vmul.f32 %v540, %v643
      %v658 = vmul.f32 %v545, %v643
      %v659 = vmul.f32 %v550, %v643
      %v660 = vmul.f32 %v555, %v643
      %v661 = vmul.f32 %v560, %v643
      %v662 = vmul.f32 %v565, %v643
      %v663 = vmul.f32 %v570, %v643
      %v664 = vmul.f32 %v575, %v643
      %v665 = vmul.f32 %v580, %v643
      %v666 = vmul.f32 %v585, %v643
      %v667 = vmul.f32 %v590, %v643
      %v668 = vmul.f32 %v595, %v643
      %v669 = vmul.f32 %v600, %v643
      %v670 = vmul.f32 %v605, %v643
      %v671 = vmul.f32 %v610, %v643
      %v672 = vmul.f32 %v615, %v643
      %v673 = vmul.f32 %v620, %v643
      %v674 = vmul.f32 %v625, %v643
      %v675 = vmul.f32 %v630, %v643
      %v676 = vmul.f32 %v635, %v643
      %v677 = vld [vmem:[%s3] sm:$0x1]
      %v679 = vlaneseq
      %v680 = vshrl.u32 %v679, 7
      %v681 = vsub.s32 0, %v680
      %v682 = vrot.slane %v677, %v681
      %v684 = vadd.f32 %v645, %v682
      %v685 = vadd.f32 %v646, %v682
      %v686 = vadd.f32 %v647, %v682
      %v687 = vadd.f32 %v648, %v682
      %v688 = vadd.f32 %v649, %v682
      %v689 = vadd.f32 %v650, %v682
      %v690 = vadd.f32 %v651, %v682
      %v691 = vadd.f32 %v652, %v682
      %v692 = vadd.f32 %v653, %v682
      %v693 = vadd.f32 %v654, %v682
      %v694 = vadd.f32 %v655, %v682
      %v695 = vadd.f32 %v656, %v682
      %v696 = vadd.f32 %v657, %v682
      %v697 = vadd.f32 %v658, %v682
      %v698 = vadd.f32 %v659, %v682
      %v699 = vadd.f32 %v660, %v682
      %v700 = vadd.f32 %v661, %v682
      %v701 = vadd.f32 %v662, %v682
      %v702 = vadd.f32 %v663, %v682
      %v703 = vadd.f32 %v664, %v682
      %v704 = vadd.f32 %v665, %v682
      %v705 = vadd.f32 %v666, %v682
      %v706 = vadd.f32 %v667, %v682
      %v707 = vadd.f32 %v668, %v682
      %v708 = vadd.f32 %v669, %v682
      %v709 = vadd.f32 %v670, %v682
      %v710 = vadd.f32 %v671, %v682
      %v711 = vadd.f32 %v672, %v682
      %v712 = vadd.f32 %v673, %v682
      %v713 = vadd.f32 %v674, %v682
      %v714 = vadd.f32 %v675, %v682
      %v715 = vadd.f32 %v676, %v682
      %v716 = vxor.u32 %v684, 2147483648
      %v717 = vxor.u32 %v685, 2147483648
      %v718 = vxor.u32 %v686, 2147483648
      %v719 = vxor.u32 %v687, 2147483648
      %v720 = vxor.u32 %v688, 2147483648
      %v721 = vxor.u32 %v689, 2147483648
      %v722 = vxor.u32 %v690, 2147483648
      %v723 = vxor.u32 %v691, 2147483648
      %v724 = vxor.u32 %v692, 2147483648
      %v725 = vxor.u32 %v693, 2147483648
      %v726 = vxor.u32 %v694, 2147483648
      %v727 = vxor.u32 %v695, 2147483648
      %v728 = vxor.u32 %v696, 2147483648
      %v729 = vxor.u32 %v697, 2147483648
      %v730 = vxor.u32 %v698, 2147483648
      %v731 = vxor.u32 %v699, 2147483648
      %v732 = vxor.u32 %v700, 2147483648
      %v733 = vxor.u32 %v701, 2147483648
      %v734 = vxor.u32 %v702, 2147483648
      %v735 = vxor.u32 %v703, 2147483648
      %v736 = vxor.u32 %v704, 2147483648
      %v737 = vxor.u32 %v705, 2147483648
      %v738 = vxor.u32 %v706, 2147483648
      %v739 = vxor.u32 %v707, 2147483648
      %v740 = vxor.u32 %v708, 2147483648
      %v741 = vxor.u32 %v709, 2147483648
      %v742 = vxor.u32 %v710, 2147483648
      %v743 = vxor.u32 %v711, 2147483648
      %v744 = vxor.u32 %v712, 2147483648
      %v745 = vxor.u32 %v713, 2147483648
      %v746 = vxor.u32 %v714, 2147483648
      %v747 = vxor.u32 %v715, 2147483648
      %v748 = vmul.f32 %v716, 1.442695
      %v749 = vpow.pop %v748
      %v750 = vmul.f32 %v717, 1.442695
      %v751 = vpow.pop %v750
      %v752 = vmul.f32 %v718, 1.442695
      %v753 = vpow.pop %v752
      %v754 = vmul.f32 %v719, 1.442695
      %v755 = vpow.pop %v754
      %v756 = vmul.f32 %v720, 1.442695
      %v757 = vpow.pop %v756
      %v758 = vmul.f32 %v721, 1.442695
      %v759 = vpow.pop %v758
      %v760 = vmul.f32 %v722, 1.442695
      %v761 = vpow.pop %v760
      %v762 = vmul.f32 %v723, 1.442695
      %v763 = vpow.pop %v762
      %v764 = vmul.f32 %v724, 1.442695
      %v765 = vpow.pop %v764
      %v766 = vmul.f32 %v725, 1.442695
      %v767 = vpow.pop %v766
      %v768 = vmul.f32 %v726, 1.442695
      %v769 = vpow.pop %v768
      %v770 = vmul.f32 %v727, 1.442695
      %v771 = vpow.pop %v770
      %v772 = vmul.f32 %v728, 1.442695
      %v773 = vpow.pop %v772
      %v774 = vmul.f32 %v729, 1.442695
      %v775 = vpow.pop %v774
      %v776 = vmul.f32 %v730, 1.442695
      %v777 = vpow.pop %v776
      %v778 = vmul.f32 %v731, 1.442695
      %v779 = vpow.pop %v778
      %v780 = vmul.f32 %v732, 1.442695
      %v781 = vpow.pop %v780
      %v782 = vmul.f32 %v733, 1.442695
      %v783 = vpow.pop %v782
      %v784 = vmul.f32 %v734, 1.442695
      %v785 = vpow.pop %v784
      %v786 = vmul.f32 %v735, 1.442695
      %v787 = vpow.pop %v786
      %v788 = vmul.f32 %v736, 1.442695
      %v789 = vpow.pop %v788
      %v790 = vmul.f32 %v737, 1.442695
      %v791 = vpow.pop %v790
      %v792 = vmul.f32 %v738, 1.442695
      %v793 = vpow.pop %v792
      %v794 = vmul.f32 %v739, 1.442695
      %v795 = vpow.pop %v794
      %v796 = vmul.f32 %v740, 1.442695
      %v797 = vpow.pop %v796
      %v798 = vmul.f32 %v741, 1.442695
      %v799 = vpow.pop %v798
      %v800 = vmul.f32 %v742, 1.442695
      %v801 = vpow.pop %v800
      %v802 = vmul.f32 %v743, 1.442695
      %v803 = vpow.pop %v802
      %v804 = vmul.f32 %v744, 1.442695
      %v805 = vpow.pop %v804
      %v806 = vmul.f32 %v745, 1.442695
      %v807 = vpow.pop %v806
      %v808 = vmul.f32 %v746, 1.442695
      %v809 = vpow.pop %v808
      %v810 = vmul.f32 %v747, 1.442695
      %v811 = vpow.pop %v810
      %v812 = vadd.f32 %v749, 1.0
      %v813 = vadd.f32 %v751, 1.0
      %v814 = vadd.f32 %v753, 1.0
      %v815 = vadd.f32 %v755, 1.0
      %v816 = vadd.f32 %v757, 1.0
      %v817 = vadd.f32 %v759, 1.0
      %v818 = vadd.f32 %v761, 1.0
      %v819 = vadd.f32 %v763, 1.0
      %v820 = vadd.f32 %v765, 1.0
      %v821 = vadd.f32 %v767, 1.0
      %v822 = vadd.f32 %v769, 1.0
      %v823 = vadd.f32 %v771, 1.0
      %v824 = vadd.f32 %v773, 1.0
      %v825 = vadd.f32 %v775, 1.0
      %v826 = vadd.f32 %v777, 1.0
      %v827 = vadd.f32 %v779, 1.0
      %v828 = vadd.f32 %v781, 1.0
      %v829 = vadd.f32 %v783, 1.0
      %v830 = vadd.f32 %v785, 1.0
      %v831 = vadd.f32 %v787, 1.0
      %v832 = vadd.f32 %v789, 1.0
      %v833 = vadd.f32 %v791, 1.0
      %v834 = vadd.f32 %v793, 1.0
      %v835 = vadd.f32 %v795, 1.0
      %v836 = vadd.f32 %v797, 1.0
      %v837 = vadd.f32 %v799, 1.0
      %v838 = vadd.f32 %v801, 1.0
      %v839 = vadd.f32 %v803, 1.0
      %v840 = vadd.f32 %v805, 1.0
      %v841 = vadd.f32 %v807, 1.0
      %v842 = vadd.f32 %v809, 1.0
      %v843 = vadd.f32 %v811, 1.0
      %v844 = vrcp.pop %v812
      %v845 = vmul.f32 1.0, %v844
      %v846 = vrcp.pop %v813
      %v847 = vmul.f32 1.0, %v846
      %v848 = vrcp.pop %v814
      %v849 = vmul.f32 1.0, %v848
      %v850 = vrcp.pop %v815
      %v851 = vmul.f32 1.0, %v850
      %v852 = vrcp.pop %v816
      %v853 = vmul.f32 1.0, %v852
      %v854 = vrcp.pop %v817
      %v855 = vmul.f32 1.0, %v854
      %v856 = vrcp.pop %v818
      %v857 = vmul.f32 1.0, %v856
      %v858 = vrcp.pop %v819
      %v859 = vmul.f32 1.0, %v858
      %v860 = vrcp.pop %v820
      %v861 = vmul.f32 1.0, %v860
      %v862 = vrcp.pop %v821
      %v863 = vmul.f32 1.0, %v862
      %v864 = vrcp.pop %v822
      %v865 = vmul.f32 1.0, %v864
      %v866 = vrcp.pop %v823
      %v867 = vmul.f32 1.0, %v866
      %v868 = vrcp.pop %v824
      %v869 = vmul.f32 1.0, %v868
      %v870 = vrcp.pop %v825
      %v871 = vmul.f32 1.0, %v870
      %v872 = vrcp.pop %v826
      %v873 = vmul.f32 1.0, %v872
      %v874 = vrcp.pop %v827
      %v875 = vmul.f32 1.0, %v874
      %v876 = vrcp.pop %v828
      %v877 = vmul.f32 1.0, %v876
      %v878 = vrcp.pop %v829
      %v879 = vmul.f32 1.0, %v878
      %v880 = vrcp.pop %v830
      %v881 = vmul.f32 1.0, %v880
      %v882 = vrcp.pop %v831
      %v883 = vmul.f32 1.0, %v882
      %v884 = vrcp.pop %v832
      %v885 = vmul.f32 1.0, %v884
      %v886 = vrcp.pop %v833
      %v887 = vmul.f32 1.0, %v886
      %v888 = vrcp.pop %v834
      %v889 = vmul.f32 1.0, %v888
      %v890 = vrcp.pop %v835
      %v891 = vmul.f32 1.0, %v890
      %v892 = vrcp.pop %v836
      %v893 = vmul.f32 1.0, %v892
      %v894 = vrcp.pop %v837
      %v895 = vmul.f32 1.0, %v894
      %v896 = vrcp.pop %v838
      %v897 = vmul.f32 1.0, %v896
      %v898 = vrcp.pop %v839
      %v899 = vmul.f32 1.0, %v898
      %v900 = vrcp.pop %v840
      %v901 = vmul.f32 1.0, %v900
      %v902 = vrcp.pop %v841
      %v903 = vmul.f32 1.0, %v902
      %v904 = vrcp.pop %v842
      %v905 = vmul.f32 1.0, %v904
      %v906 = vrcp.pop %v843
      %v907 = vmul.f32 1.0, %v906
      %v908 = vmul.f32 %v684, %v845
      %v909 = vmul.f32 %v685, %v847
      %v910 = vmul.f32 %v686, %v849
      %v911 = vmul.f32 %v687, %v851
      %v912 = vmul.f32 %v688, %v853
      %v913 = vmul.f32 %v689, %v855
      %v914 = vmul.f32 %v690, %v857
      %v915 = vmul.f32 %v691, %v859
      %v916 = vmul.f32 %v692, %v861
      %v917 = vmul.f32 %v693, %v863
      %v918 = vmul.f32 %v694, %v865
      %v919 = vmul.f32 %v695, %v867
      %v920 = vmul.f32 %v696, %v869
      %v921 = vmul.f32 %v697, %v871
      %v922 = vmul.f32 %v698, %v873
      %v923 = vmul.f32 %v699, %v875
      %v924 = vmul.f32 %v700, %v877
      %v925 = vmul.f32 %v701, %v879
      %v926 = vmul.f32 %v702, %v881
      %v927 = vmul.f32 %v703, %v883
      %v928 = vmul.f32 %v704, %v885
      %v929 = vmul.f32 %v705, %v887
      %v930 = vmul.f32 %v706, %v889
      %v931 = vmul.f32 %v707, %v891
      %v932 = vmul.f32 %v708, %v893
      %v933 = vmul.f32 %v709, %v895
      %v934 = vmul.f32 %v710, %v897
      %v935 = vmul.f32 %v711, %v899
      %v936 = vmul.f32 %v712, %v901
      %v937 = vmul.f32 %v713, %v903
      %v938 = vmul.f32 %v714, %v905
      %v939 = vmul.f32 %v715, %v907
      %940 = vst.msk [vmem:[#allocation2] sm:$0xff] %vm312, 0.0
      %941 = vst.msk [vmem:[#allocation2 + $0x8] sm:$0xff] %vm312, 0.0
      %vm942 = vcmask 25600
      %943 = vst.msk [vmem:[#allocation2 + $0x10] sm:$0x3] %vm942, 0.0
      %944 = vst.msk [vmem:[#allocation2 + $0x18] sm:$0xff] %vm312, 0.0
      %945 = vst.msk [vmem:[#allocation2 + $0x20] sm:$0xff] %vm312, 0.0
      %946 = vst.msk [vmem:[#allocation2 + $0x28] sm:$0x3] %vm942, 0.0
      %947 = vst.msk [vmem:[#allocation2 + $0x30] sm:$0xff] %vm312, 0.0
      %948 = vst.msk [vmem:[#allocation2 + $0x38] sm:$0xff] %vm312, 0.0
      %949 = vst.msk [vmem:[#allocation2 + $0x40] sm:$0x3] %vm942, 0.0
      %950 = vst.msk [vmem:[#allocation2 + $0x48] sm:$0xff] %vm312, 0.0
      %951 = vst.msk [vmem:[#allocation2 + $0x50] sm:$0xff] %vm312, 0.0
      %952 = vst.msk [vmem:[#allocation2 + $0x58] sm:$0x3] %vm942, 0.0
      %953 = vst.msk [vmem:[#allocation2 + $0x60] sm:$0xff] %vm312, 0.0
      %954 = vst.msk [vmem:[#allocation2 + $0x68] sm:$0xff] %vm312, 0.0
      %955 = vst.msk [vmem:[#allocation2 + $0x70] sm:$0x3] %vm942, 0.0
      %956 = vst.msk [vmem:[#allocation2 + $0x78] sm:$0xff] %vm312, 0.0
      %957 = vst.msk [vmem:[#allocation2 + $0x80] sm:$0xff] %vm312, 0.0
      %958 = vst.msk [vmem:[#allocation2 + $0x88] sm:$0x3] %vm942, 0.0
      %959 = vst.msk [vmem:[#allocation2 + $0x90] sm:$0xff] %vm312, 0.0
      %960 = vst.msk [vmem:[#allocation2 + $0x98] sm:$0xff] %vm312, 0.0
      %961 = vst.msk [vmem:[#allocation2 + $0xa0] sm:$0x3] %vm942, 0.0
      %962 = vst.msk [vmem:[#allocation2 + $0xa8] sm:$0xff] %vm312, 0.0
      %963 = vst.msk [vmem:[#allocation2 + $0xb0] sm:$0xff] %vm312, 0.0
      %964 = vst.msk [vmem:[#allocation2 + $0xb8] sm:$0x3] %vm942, 0.0
      %965 = vst.msk [vmem:[#allocation2 + $0xc0] sm:$0xff] %vm312, 0.0
      %966 = vst.msk [vmem:[#allocation2 + $0xc8] sm:$0xff] %vm312, 0.0
      %967 = vst.msk [vmem:[#allocation2 + $0xd0] sm:$0x3] %vm942, 0.0
      %968 = vst.msk [vmem:[#allocation2 + $0xd8] sm:$0xff] %vm312, 0.0
      %969 = vst.msk [vmem:[#allocation2 + $0xe0] sm:$0xff] %vm312, 0.0
      %970 = vst.msk [vmem:[#allocation2 + $0xe8] sm:$0x3] %vm942, 0.0
      %971 = vst.msk [vmem:[#allocation2 + $0xf0] sm:$0xff] %vm312, 0.0
      %972 = vst.msk [vmem:[#allocation2 + $0xf8] sm:$0xff] %vm312, 0.0
      %973 = vst.msk [vmem:[#allocation2 + $0x100] sm:$0x3] %vm942, 0.0
      %974 = vst.msk [vmem:[#allocation2 + $0x108] sm:$0xff] %vm312, 0.0
      %975 = vst.msk [vmem:[#allocation2 + $0x110] sm:$0xff] %vm312, 0.0
      %976 = vst.msk [vmem:[#allocation2 + $0x118] sm:$0x3] %vm942, 0.0
      %977 = vst.msk [vmem:[#allocation2 + $0x120] sm:$0xff] %vm312, 0.0
      %978 = vst.msk [vmem:[#allocation2 + $0x128] sm:$0xff] %vm312, 0.0
      %979 = vst.msk [vmem:[#allocation2 + $0x130] sm:$0x3] %vm942, 0.0
      %980 = vst.msk [vmem:[#allocation2 + $0x138] sm:$0xff] %vm312, 0.0
      %981 = vst.msk [vmem:[#allocation2 + $0x140] sm:$0xff] %vm312, 0.0
      %982 = vst.msk [vmem:[#allocation2 + $0x148] sm:$0x3] %vm942, 0.0
      %983 = vst.msk [vmem:[#allocation2 + $0x150] sm:$0xff] %vm312, 0.0
      %984 = vst.msk [vmem:[#allocation2 + $0x158] sm:$0xff] %vm312, 0.0
      %985 = vst.msk [vmem:[#allocation2 + $0x160] sm:$0x3] %vm942, 0.0
      %986 = vst.msk [vmem:[#allocation2 + $0x168] sm:$0xff] %vm312, 0.0
      %987 = vst.msk [vmem:[#allocation2 + $0x170] sm:$0xff] %vm312, 0.0
      %988 = vst.msk [vmem:[#allocation2 + $0x178] sm:$0x3] %vm942, 0.0
      %989 = vst.msk [vmem:[#allocation2 + $0x180] sm:$0xff] %vm312, 0.0
      %990 = vst.msk [vmem:[#allocation2 + $0x188] sm:$0xff] %vm312, 0.0
      %991 = vst.msk [vmem:[#allocation2 + $0x190] sm:$0x3] %vm942, 0.0
      %992 = vst.msk [vmem:[#allocation2 + $0x198] sm:$0xff] %vm312, 0.0
      %993 = vst.msk [vmem:[#allocation2 + $0x1a0] sm:$0xff] %vm312, 0.0
      %994 = vst.msk [vmem:[#allocation2 + $0x1a8] sm:$0x3] %vm942, 0.0
      %s995 = scalar_lea.vmem [#allocation2], 24
      %996 = vst.msk [vmem:[%s995 + $0x1] sm:$0xff] %vm312, %v908
      %997 = vst.msk [vmem:[%s995 + $0x9] sm:$0xff] %vm312, %v909
      %998 = vst.msk [vmem:[%s995 + $0x19] sm:$0xff] %vm312, %v910
      %999 = vst.msk [vmem:[%s995 + $0x21] sm:$0xff] %vm312, %v911
      %1000 = vst.msk [vmem:[%s995 + $0x31] sm:$0xff] %vm312, %v912
      %1001 = vst.msk [vmem:[%s995 + $0x39] sm:$0xff] %vm312, %v913
      %1002 = vst.msk [vmem:[%s995 + $0x49] sm:$0xff] %vm312, %v914
      %1003 = vst.msk [vmem:[%s995 + $0x51] sm:$0xff] %vm312, %v915
      %1004 = vst.msk [vmem:[%s995 + $0x61] sm:$0xff] %vm312, %v916
      %1005 = vst.msk [vmem:[%s995 + $0x69] sm:$0xff] %vm312, %v917
      %1006 = vst.msk [vmem:[%s995 + $0x79] sm:$0xff] %vm312, %v918
      %1007 = vst.msk [vmem:[%s995 + $0x81] sm:$0xff] %vm312, %v919
      %1008 = vst.msk [vmem:[%s995 + $0x91] sm:$0xff] %vm312, %v920
      %1009 = vst.msk [vmem:[%s995 + $0x99] sm:$0xff] %vm312, %v921
      %1010 = vst.msk [vmem:[%s995 + $0xa9] sm:$0xff] %vm312, %v922
      %1011 = vst.msk [vmem:[%s995 + $0xb1] sm:$0xff] %vm312, %v923
      %1012 = vst.msk [vmem:[%s995 + $0xc1] sm:$0xff] %vm312, %v924
      %1013 = vst.msk [vmem:[%s995 + $0xc9] sm:$0xff] %vm312, %v925
      %1014 = vst.msk [vmem:[%s995 + $0xd9] sm:$0xff] %vm312, %v926
      %1015 = vst.msk [vmem:[%s995 + $0xe1] sm:$0xff] %vm312, %v927
      %1016 = vst.msk [vmem:[%s995 + $0xf1] sm:$0xff] %vm312, %v928
      %1017 = vst.msk [vmem:[%s995 + $0xf9] sm:$0xff] %vm312, %v929
      %1018 = vst.msk [vmem:[%s995 + $0x109] sm:$0xff] %vm312, %v930
      %1019 = vst.msk [vmem:[%s995 + $0x111] sm:$0xff] %vm312, %v931
      %1020 = vst.msk [vmem:[%s995 + $0x121] sm:$0xff] %vm312, %v932
      %1021 = vst.msk [vmem:[%s995 + $0x129] sm:$0xff] %vm312, %v933
      %1022 = vst.msk [vmem:[%s995 + $0x139] sm:$0xff] %vm312, %v934
      %1023 = vst.msk [vmem:[%s995 + $0x141] sm:$0xff] %vm312, %v935
      %1024 = vst.msk [vmem:[%s995 + $0x151] sm:$0xff] %vm312, %v936
      %1025 = vst.msk [vmem:[%s995 + $0x159] sm:$0xff] %vm312, %v937
      %1026 = vst.msk [vmem:[%s995 + $0x169] sm:$0xff] %vm312, %v938
      %1027 = vst.msk [vmem:[%s995 + $0x171] sm:$0xff] %vm312, %v939
      %v1028 = vld [vmem:[#allocation2] sm:$0xff]
      %v1029 = vld [vmem:[#allocation2 + $0x8] sm:$0xff]
      %v1030 = vld [vmem:[#allocation2 + $0x18] sm:$0xff]
      %v1031 = vld [vmem:[#allocation2 + $0x20] sm:$0xff]
      %v1032 = vld [vmem:[#allocation2 + $0x30] sm:$0xff]
      %v1033 = vld [vmem:[#allocation2 + $0x38] sm:$0xff]
      %v1034 = vld [vmem:[#allocation2 + $0x48] sm:$0xff]
      %v1035 = vld [vmem:[#allocation2 + $0x50] sm:$0xff]
      %v1036 = vld [vmem:[#allocation2 + $0x60] sm:$0xff]
      %v1037 = vld [vmem:[#allocation2 + $0x68] sm:$0xff]
      %v1038 = vld [vmem:[#allocation2 + $0x78] sm:$0xff]
      %v1039 = vld [vmem:[#allocation2 + $0x80] sm:$0xff]
      %v1040 = vld [vmem:[#allocation2 + $0x90] sm:$0xff]
      %v1041 = vld [vmem:[#allocation2 + $0x98] sm:$0xff]
      %v1042 = vld [vmem:[#allocation2 + $0xa8] sm:$0xff]
      %v1043 = vld [vmem:[#allocation2 + $0xb0] sm:$0xff]
      %v1044 = vld [vmem:[#allocation2 + $0xc0] sm:$0xff]
      %v1045 = vld [vmem:[#allocation2 + $0xc8] sm:$0xff]
      %v1046 = vld [vmem:[#allocation2 + $0xd8] sm:$0xff]
      %v1047 = vld [vmem:[#allocation2 + $0xe0] sm:$0xff]
      %v1048 = vld [vmem:[#allocation2 + $0xf0] sm:$0xff]
      %v1049 = vld [vmem:[#allocation2 + $0xf8] sm:$0xff]
      %v1050 = vld [vmem:[#allocation2 + $0x108] sm:$0xff]
      %v1051 = vld [vmem:[#allocation2 + $0x110] sm:$0xff]
      %v1052 = vld [vmem:[#allocation2 + $0x120] sm:$0xff]
      %v1053 = vld [vmem:[#allocation2 + $0x128] sm:$0xff]
      %v1054 = vld [vmem:[#allocation2 + $0x138] sm:$0xff]
      %v1055 = vld [vmem:[#allocation2 + $0x140] sm:$0xff]
      %v1056 = vld [vmem:[#allocation2 + $0x150] sm:$0xff]
      %v1057 = vld [vmem:[#allocation2 + $0x158] sm:$0xff]
      %v1058 = vld [vmem:[#allocation2 + $0x168] sm:$0xff]
      %v1059 = vld [vmem:[#allocation2 + $0x170] sm:$0xff]
      %v1060 = vld [vmem:[#allocation2 + $0x1] sm:$0xff]
      %v1061 = vld [vmem:[#allocation2 + $0x9] sm:$0xff]
      %v1062 = vld [vmem:[#allocation2 + $0x19] sm:$0xff]
      %v1063 = vld [vmem:[#allocation2 + $0x21] sm:$0xff]
      %v1064 = vld [vmem:[#allocation2 + $0x31] sm:$0xff]
      %v1065 = vld [vmem:[#allocation2 + $0x39] sm:$0xff]
      %v1066 = vld [vmem:[#allocation2 + $0x49] sm:$0xff]
      %v1067 = vld [vmem:[#allocation2 + $0x51] sm:$0xff]
      %v1068 = vld [vmem:[#allocation2 + $0x61] sm:$0xff]
      %v1069 = vld [vmem:[#allocation2 + $0x69] sm:$0xff]
      %v1070 = vld [vmem:[#allocation2 + $0x79] sm:$0xff]
      %v1071 = vld [vmem:[#allocation2 + $0x81] sm:$0xff]
      %v1072 = vld [vmem:[#allocation2 + $0x91] sm:$0xff]
      %v1073 = vld [vmem:[#allocation2 + $0x99] sm:$0xff]
      %v1074 = vld [vmem:[#allocation2 + $0xa9] sm:$0xff]
      %v1075 = vld [vmem:[#allocation2 + $0xb1] sm:$0xff]
      %v1076 = vld [vmem:[#allocation2 + $0xc1] sm:$0xff]
      %v1077 = vld [vmem:[#allocation2 + $0xc9] sm:$0xff]
      %v1078 = vld [vmem:[#allocation2 + $0xd9] sm:$0xff]
      %v1079 = vld [vmem:[#allocation2 + $0xe1] sm:$0xff]
      %v1080 = vld [vmem:[#allocation2 + $0xf1] sm:$0xff]
      %v1081 = vld [vmem:[#allocation2 + $0xf9] sm:$0xff]
      %v1082 = vld [vmem:[#allocation2 + $0x109] sm:$0xff]
      %v1083 = vld [vmem:[#allocation2 + $0x111] sm:$0xff]
      %v1084 = vld [vmem:[#allocation2 + $0x121] sm:$0xff]
      %v1085 = vld [vmem:[#allocation2 + $0x129] sm:$0xff]
      %v1086 = vld [vmem:[#allocation2 + $0x139] sm:$0xff]
      %v1087 = vld [vmem:[#allocation2 + $0x141] sm:$0xff]
      %v1088 = vld [vmem:[#allocation2 + $0x151] sm:$0xff]
      %v1089 = vld [vmem:[#allocation2 + $0x159] sm:$0xff]
      %v1090 = vld [vmem:[#allocation2 + $0x169] sm:$0xff]
      %v1091 = vld [vmem:[#allocation2 + $0x171] sm:$0xff]
      %v1092 = vld [vmem:[#allocation2 + $0x2] sm:$0xff]
      %v1093 = vld [vmem:[#allocation2 + $0xa] sm:$0xff]
      %v1094 = vld [vmem:[#allocation2 + $0x1a] sm:$0xff]
      %v1095 = vld [vmem:[#allocation2 + $0x22] sm:$0xff]
      %v1096 = vld [vmem:[#allocation2 + $0x32] sm:$0xff]
      %v1097 = vld [vmem:[#allocation2 + $0x3a] sm:$0xff]
      %v1098 = vld [vmem:[#allocation2 + $0x4a] sm:$0xff]
      %v1099 = vld [vmem:[#allocation2 + $0x52] sm:$0xff]
      %v1100 = vld [vmem:[#allocation2 + $0x62] sm:$0xff]
      %v1101 = vld [vmem:[#allocation2 + $0x6a] sm:$0xff]
      %v1102 = vld [vmem:[#allocation2 + $0x7a] sm:$0xff]
      %v1103 = vld [vmem:[#allocation2 + $0x82] sm:$0xff]
      %v1104 = vld [vmem:[#allocation2 + $0x92] sm:$0xff]
      %v1105 = vld [vmem:[#allocation2 + $0x9a] sm:$0xff]
      %v1106 = vld [vmem:[#allocation2 + $0xaa] sm:$0xff]
      %v1107 = vld [vmem:[#allocation2 + $0xb2] sm:$0xff]
      %v1108 = vld [vmem:[#allocation2 + $0xc2] sm:$0xff]
      %v1109 = vld [vmem:[#allocation2 + $0xca] sm:$0xff]
      %v1110 = vld [vmem:[#allocation2 + $0xda] sm:$0xff]
      %v1111 = vld [vmem:[#allocation2 + $0xe2] sm:$0xff]
      %v1112 = vld [vmem:[#allocation2 + $0xf2] sm:$0xff]
      %v1113 = vld [vmem:[#allocation2 + $0xfa] sm:$0xff]
      %v1114 = vld [vmem:[#allocation2 + $0x10a] sm:$0xff]
      %v1115 = vld [vmem:[#allocation2 + $0x112] sm:$0xff]
      %v1116 = vld [vmem:[#allocation2 + $0x122] sm:$0xff]
      %v1117 = vld [vmem:[#allocation2 + $0x12a] sm:$0xff]
      %v1118 = vld [vmem:[#allocation2 + $0x13a] sm:$0xff]
      %v1119 = vld [vmem:[#allocation2 + $0x142] sm:$0xff]
      %v1120 = vld [vmem:[#allocation2 + $0x152] sm:$0xff]
      %v1121 = vld [vmem:[#allocation2 + $0x15a] sm:$0xff]
      %v1122 = vld [vmem:[#allocation2 + $0x16a] sm:$0xff]
      %v1123 = vld [vmem:[#allocation2 + $0x172] sm:$0xff]
      %v1124 = vld [vmem:[%s995] sm:$0xff]
      %v1125 = vld [vmem:[%s995 + $0x8] sm:$0xff]
      %v1126 = vld [vmem:[%s995 + $0x18] sm:$0xff]
      %v1127 = vld [vmem:[%s995 + $0x20] sm:$0xff]
      %v1128 = vld [vmem:[%s995 + $0x30] sm:$0xff]
      %v1129 = vld [vmem:[%s995 + $0x38] sm:$0xff]
      %v1130 = vld [vmem:[%s995 + $0x48] sm:$0xff]
      %v1131 = vld [vmem:[%s995 + $0x50] sm:$0xff]
      %v1132 = vld [vmem:[%s995 + $0x60] sm:$0xff]
      %v1133 = vld [vmem:[%s995 + $0x68] sm:$0xff]
      %v1134 = vld [vmem:[%s995 + $0x78] sm:$0xff]
      %v1135 = vld [vmem:[%s995 + $0x80] sm:$0xff]
      %v1136 = vld [vmem:[%s995 + $0x90] sm:$0xff]
      %v1137 = vld [vmem:[%s995 + $0x98] sm:$0xff]
      %v1138 = vld [vmem:[%s995 + $0xa8] sm:$0xff]
      %v1139 = vld [vmem:[%s995 + $0xb0] sm:$0xff]
      %v1140 = vld [vmem:[%s995 + $0xc0] sm:$0xff]
      %v1141 = vld [vmem:[%s995 + $0xc8] sm:$0xff]
      %v1142 = vld [vmem:[%s995 + $0xd8] sm:$0xff]
      %v1143 = vld [vmem:[%s995 + $0xe0] sm:$0xff]
      %v1144 = vld [vmem:[%s995 + $0xf0] sm:$0xff]
      %v1145 = vld [vmem:[%s995 + $0xf8] sm:$0xff]
      %v1146 = vld [vmem:[%s995 + $0x108] sm:$0xff]
      %v1147 = vld [vmem:[%s995 + $0x110] sm:$0xff]
      %v1148 = vld [vmem:[%s995 + $0x120] sm:$0xff]
      %v1149 = vld [vmem:[%s995 + $0x128] sm:$0xff]
      %v1150 = vld [vmem:[%s995 + $0x138] sm:$0xff]
      %v1151 = vld [vmem:[%s995 + $0x140] sm:$0xff]
      %v1152 = vld [vmem:[%s995 + $0x150] sm:$0xff]
      %v1153 = vld [vmem:[%s995 + $0x158] sm:$0xff]
      %v1154 = vld [vmem:[%s995 + $0x168] sm:$0xff]
      %v1155 = vld [vmem:[%s995 + $0x170] sm:$0xff]
      %v1156 = vld [vmem:[%s995 + $0x1] sm:$0xff]
      %v1157 = vld [vmem:[%s995 + $0x9] sm:$0xff]
      %v1158 = vld [vmem:[%s995 + $0x19] sm:$0xff]
      %v1159 = vld [vmem:[%s995 + $0x21] sm:$0xff]
      %v1160 = vld [vmem:[%s995 + $0x31] sm:$0xff]
      %v1161 = vld [vmem:[%s995 + $0x39] sm:$0xff]
      %v1162 = vld [vmem:[%s995 + $0x49] sm:$0xff]
      %v1163 = vld [vmem:[%s995 + $0x51] sm:$0xff]
      %v1164 = vld [vmem:[%s995 + $0x61] sm:$0xff]
      %v1165 = vld [vmem:[%s995 + $0x69] sm:$0xff]
      %v1166 = vld [vmem:[%s995 + $0x79] sm:$0xff]
      %v1167 = vld [vmem:[%s995 + $0x81] sm:$0xff]
      %v1168 = vld [vmem:[%s995 + $0x91] sm:$0xff]
      %v1169 = vld [vmem:[%s995 + $0x99] sm:$0xff]
      %v1170 = vld [vmem:[%s995 + $0xa9] sm:$0xff]
      %v1171 = vld [vmem:[%s995 + $0xb1] sm:$0xff]
      %v1172 = vld [vmem:[%s995 + $0xc1] sm:$0xff]
      %v1173 = vld [vmem:[%s995 + $0xc9] sm:$0xff]
      %v1174 = vld [vmem:[%s995 + $0xd9] sm:$0xff]
      %v1175 = vld [vmem:[%s995 + $0xe1] sm:$0xff]
      %v1176 = vld [vmem:[%s995 + $0xf1] sm:$0xff]
      %v1177 = vld [vmem:[%s995 + $0xf9] sm:$0xff]
      %v1178 = vld [vmem:[%s995 + $0x109] sm:$0xff]
      %v1179 = vld [vmem:[%s995 + $0x111] sm:$0xff]
      %v1180 = vld [vmem:[%s995 + $0x121] sm:$0xff]
      %v1181 = vld [vmem:[%s995 + $0x129] sm:$0xff]
      %v1182 = vld [vmem:[%s995 + $0x139] sm:$0xff]
      %v1183 = vld [vmem:[%s995 + $0x141] sm:$0xff]
      %v1184 = vld [vmem:[%s995 + $0x151] sm:$0xff]
      %v1185 = vld [vmem:[%s995 + $0x159] sm:$0xff]
      %v1186 = vld [vmem:[%s995 + $0x169] sm:$0xff]
      %v1187 = vld [vmem:[%s995 + $0x171] sm:$0xff]
      %v1188 = vld [vmem:[%s995 + $0x2] sm:$0xff]
      %v1189 = vld [vmem:[%s995 + $0xa] sm:$0xff]
      %v1190 = vld [vmem:[%s995 + $0x1a] sm:$0xff]
      %v1191 = vld [vmem:[%s995 + $0x22] sm:$0xff]
      %v1192 = vld [vmem:[%s995 + $0x32] sm:$0xff]
      %v1193 = vld [vmem:[%s995 + $0x3a] sm:$0xff]
      %v1194 = vld [vmem:[%s995 + $0x4a] sm:$0xff]
      %v1195 = vld [vmem:[%s995 + $0x52] sm:$0xff]
      %v1196 = vld [vmem:[%s995 + $0x62] sm:$0xff]
      %v1197 = vld [vmem:[%s995 + $0x6a] sm:$0xff]
      %v1198 = vld [vmem:[%s995 + $0x7a] sm:$0xff]
      %v1199 = vld [vmem:[%s995 + $0x82] sm:$0xff]
      %v1200 = vld [vmem:[%s995 + $0x92] sm:$0xff]
      %v1201 = vld [vmem:[%s995 + $0x9a] sm:$0xff]
      %v1202 = vld [vmem:[%s995 + $0xaa] sm:$0xff]
      %v1203 = vld [vmem:[%s995 + $0xb2] sm:$0xff]
      %v1204 = vld [vmem:[%s995 + $0xc2] sm:$0xff]
      %v1205 = vld [vmem:[%s995 + $0xca] sm:$0xff]
      %v1206 = vld [vmem:[%s995 + $0xda] sm:$0xff]
      %v1207 = vld [vmem:[%s995 + $0xe2] sm:$0xff]
      %v1208 = vld [vmem:[%s995 + $0xf2] sm:$0xff]
      %v1209 = vld [vmem:[%s995 + $0xfa] sm:$0xff]
      %v1210 = vld [vmem:[%s995 + $0x10a] sm:$0xff]
      %v1211 = vld [vmem:[%s995 + $0x112] sm:$0xff]
      %v1212 = vld [vmem:[%s995 + $0x122] sm:$0xff]
      %v1213 = vld [vmem:[%s995 + $0x12a] sm:$0xff]
      %v1214 = vld [vmem:[%s995 + $0x13a] sm:$0xff]
      %v1215 = vld [vmem:[%s995 + $0x142] sm:$0xff]
      %v1216 = vld [vmem:[%s995 + $0x152] sm:$0xff]
      %v1217 = vld [vmem:[%s995 + $0x15a] sm:$0xff]
      %v1218 = vld [vmem:[%s995 + $0x16a] sm:$0xff]
      %v1219 = vld [vmem:[%s995 + $0x172] sm:$0xff]
      %s1220 = scalar_lea.vmem [#allocation2], 48
      %v1221 = vld [vmem:[%s1220] sm:$0xff]
      %v1222 = vld [vmem:[%s1220 + $0x8] sm:$0xff]
      %v1223 = vld [vmem:[%s1220 + $0x18] sm:$0xff]
      %v1224 = vld [vmem:[%s1220 + $0x20] sm:$0xff]
      %v1225 = vld [vmem:[%s1220 + $0x30] sm:$0xff]
      %v1226 = vld [vmem:[%s1220 + $0x38] sm:$0xff]
      %v1227 = vld [vmem:[%s1220 + $0x48] sm:$0xff]
      %v1228 = vld [vmem:[%s1220 + $0x50] sm:$0xff]
      %v1229 = vld [vmem:[%s1220 + $0x60] sm:$0xff]
      %v1230 = vld [vmem:[%s1220 + $0x68] sm:$0xff]
      %v1231 = vld [vmem:[%s1220 + $0x78] sm:$0xff]
      %v1232 = vld [vmem:[%s1220 + $0x80] sm:$0xff]
      %v1233 = vld [vmem:[%s1220 + $0x90] sm:$0xff]
      %v1234 = vld [vmem:[%s1220 + $0x98] sm:$0xff]
      %v1235 = vld [vmem:[%s1220 + $0xa8] sm:$0xff]
      %v1236 = vld [vmem:[%s1220 + $0xb0] sm:$0xff]
      %v1237 = vld [vmem:[%s1220 + $0xc0] sm:$0xff]
      %v1238 = vld [vmem:[%s1220 + $0xc8] sm:$0xff]
      %v1239 = vld [vmem:[%s1220 + $0xd8] sm:$0xff]
      %v1240 = vld [vmem:[%s1220 + $0xe0] sm:$0xff]
      %v1241 = vld [vmem:[%s1220 + $0xf0] sm:$0xff]
      %v1242 = vld [vmem:[%s1220 + $0xf8] sm:$0xff]
      %v1243 = vld [vmem:[%s1220 + $0x108] sm:$0xff]
      %v1244 = vld [vmem:[%s1220 + $0x110] sm:$0xff]
      %v1245 = vld [vmem:[%s1220 + $0x120] sm:$0xff]
      %v1246 = vld [vmem:[%s1220 + $0x128] sm:$0xff]
      %v1247 = vld [vmem:[%s1220 + $0x138] sm:$0xff]
      %v1248 = vld [vmem:[%s1220 + $0x140] sm:$0xff]
      %v1249 = vld [vmem:[%s1220 + $0x150] sm:$0xff]
      %v1250 = vld [vmem:[%s1220 + $0x158] sm:$0xff]
      %v1251 = vld [vmem:[%s1220 + $0x168] sm:$0xff]
      %v1252 = vld [vmem:[%s1220 + $0x170] sm:$0xff]
      %v1253 = vld [vmem:[%s1220 + $0x1] sm:$0xff]
      %v1254 = vld [vmem:[%s1220 + $0x9] sm:$0xff]
      %v1255 = vld [vmem:[%s1220 + $0x19] sm:$0xff]
      %v1256 = vld [vmem:[%s1220 + $0x21] sm:$0xff]
      %v1257 = vld [vmem:[%s1220 + $0x31] sm:$0xff]
      %v1258 = vld [vmem:[%s1220 + $0x39] sm:$0xff]
      %v1259 = vld [vmem:[%s1220 + $0x49] sm:$0xff]
      %v1260 = vld [vmem:[%s1220 + $0x51] sm:$0xff]
      %v1261 = vld [vmem:[%s1220 + $0x61] sm:$0xff]
      %v1262 = vld [vmem:[%s1220 + $0x69] sm:$0xff]
      %v1263 = vld [vmem:[%s1220 + $0x79] sm:$0xff]
      %v1264 = vld [vmem:[%s1220 + $0x81] sm:$0xff]
      %v1265 = vld [vmem:[%s1220 + $0x91] sm:$0xff]
      %v1266 = vld [vmem:[%s1220 + $0x99] sm:$0xff]
      %v1267 = vld [vmem:[%s1220 + $0xa9] sm:$0xff]
      %v1268 = vld [vmem:[%s1220 + $0xb1] sm:$0xff]
      %v1269 = vld [vmem:[%s1220 + $0xc1] sm:$0xff]
      %v1270 = vld [vmem:[%s1220 + $0xc9] sm:$0xff]
      %v1271 = vld [vmem:[%s1220 + $0xd9] sm:$0xff]
      %v1272 = vld [vmem:[%s1220 + $0xe1] sm:$0xff]
      %v1273 = vld [vmem:[%s1220 + $0xf1] sm:$0xff]
      %v1274 = vld [vmem:[%s1220 + $0xf9] sm:$0xff]
      %v1275 = vld [vmem:[%s1220 + $0x109] sm:$0xff]
      %v1276 = vld [vmem:[%s1220 + $0x111] sm:$0xff]
      %v1277 = vld [vmem:[%s1220 + $0x121] sm:$0xff]
      %v1278 = vld [vmem:[%s1220 + $0x129] sm:$0xff]
      %v1279 = vld [vmem:[%s1220 + $0x139] sm:$0xff]
      %v1280 = vld [vmem:[%s1220 + $0x141] sm:$0xff]
      %v1281 = vld [vmem:[%s1220 + $0x151] sm:$0xff]
      %v1282 = vld [vmem:[%s1220 + $0x159] sm:$0xff]
      %v1283 = vld [vmem:[%s1220 + $0x169] sm:$0xff]
      %v1284 = vld [vmem:[%s1220 + $0x171] sm:$0xff]
      %v1285 = vld [vmem:[%s1220 + $0x2] sm:$0xff]
      %v1286 = vld [vmem:[%s1220 + $0xa] sm:$0xff]
      %v1287 = vld [vmem:[%s1220 + $0x1a] sm:$0xff]
      %v1288 = vld [vmem:[%s1220 + $0x22] sm:$0xff]
      %v1289 = vld [vmem:[%s1220 + $0x32] sm:$0xff]
      %v1290 = vld [vmem:[%s1220 + $0x3a] sm:$0xff]
      %v1291 = vld [vmem:[%s1220 + $0x4a] sm:$0xff]
      %v1292 = vld [vmem:[%s1220 + $0x52] sm:$0xff]
      %v1293 = vld [vmem:[%s1220 + $0x62] sm:$0xff]
      %v1294 = vld [vmem:[%s1220 + $0x6a] sm:$0xff]
      %v1295 = vld [vmem:[%s1220 + $0x7a] sm:$0xff]
      %v1296 = vld [vmem:[%s1220 + $0x82] sm:$0xff]
      %v1297 = vld [vmem:[%s1220 + $0x92] sm:$0xff]
      %v1298 = vld [vmem:[%s1220 + $0x9a] sm:$0xff]
      %v1299 = vld [vmem:[%s1220 + $0xaa] sm:$0xff]
      %v1300 = vld [vmem:[%s1220 + $0xb2] sm:$0xff]
      %v1301 = vld [vmem:[%s1220 + $0xc2] sm:$0xff]
      %v1302 = vld [vmem:[%s1220 + $0xca] sm:$0xff]
      %v1303 = vld [vmem:[%s1220 + $0xda] sm:$0xff]
      %v1304 = vld [vmem:[%s1220 + $0xe2] sm:$0xff]
      %v1305 = vld [vmem:[%s1220 + $0xf2] sm:$0xff]
      %v1306 = vld [vmem:[%s1220 + $0xfa] sm:$0xff]
      %v1307 = vld [vmem:[%s1220 + $0x10a] sm:$0xff]
      %v1308 = vld [vmem:[%s1220 + $0x112] sm:$0xff]
      %v1309 = vld [vmem:[%s1220 + $0x122] sm:$0xff]
      %v1310 = vld [vmem:[%s1220 + $0x12a] sm:$0xff]
      %v1311 = vld [vmem:[%s1220 + $0x13a] sm:$0xff]
      %v1312 = vld [vmem:[%s1220 + $0x142] sm:$0xff]
      %v1313 = vld [vmem:[%s1220 + $0x152] sm:$0xff]
      %v1314 = vld [vmem:[%s1220 + $0x15a] sm:$0xff]
      %v1315 = vld [vmem:[%s1220 + $0x16a] sm:$0xff]
      %v1316 = vld [vmem:[%s1220 + $0x172] sm:$0xff]
      %1349 = vrot.lane.b32.xlu0 %v1060, 4
      %v1350 = vpop.permute.xlu0 %1349
      %1351 = vrot.lane.b32.xlu0 %v1061, 4
      %v1352 = vpop.permute.xlu0 %1351
      %1353 = vrot.lane.b32.xlu0 %v1062, 4
      %v1354 = vpop.permute.xlu0 %1353
      %1355 = vrot.lane.b32.xlu0 %v1063, 4
      %v1356 = vpop.permute.xlu0 %1355
      %1357 = vrot.lane.b32.xlu0 %v1064, 4
      %v1358 = vpop.permute.xlu0 %1357
      %1359 = vrot.lane.b32.xlu0 %v1065, 4
      %v1360 = vpop.permute.xlu0 %1359
      %1361 = vrot.lane.b32.xlu0 %v1066, 4
      %v1362 = vpop.permute.xlu0 %1361
      %1363 = vrot.lane.b32.xlu0 %v1067, 4
      %v1364 = vpop.permute.xlu0 %1363
      %1365 = vrot.lane.b32.xlu0 %v1068, 4
      %v1366 = vpop.permute.xlu0 %1365
      %1367 = vrot.lane.b32.xlu0 %v1069, 4
      %v1368 = vpop.permute.xlu0 %1367
      %1369 = vrot.lane.b32.xlu0 %v1070, 4
      %v1370 = vpop.permute.xlu0 %1369
      %1371 = vrot.lane.b32.xlu0 %v1071, 4
      %v1372 = vpop.permute.xlu0 %1371
      %1373 = vrot.lane.b32.xlu0 %v1072, 4
      %v1374 = vpop.permute.xlu0 %1373
      %1375 = vrot.lane.b32.xlu0 %v1073, 4
      %v1376 = vpop.permute.xlu0 %1375
      %1377 = vrot.lane.b32.xlu0 %v1074, 4
      %v1378 = vpop.permute.xlu0 %1377
      %1379 = vrot.lane.b32.xlu0 %v1075, 4
      %v1380 = vpop.permute.xlu0 %1379
      %1381 = vrot.lane.b32.xlu0 %v1076, 4
      %v1382 = vpop.permute.xlu0 %1381
      %1383 = vrot.lane.b32.xlu0 %v1077, 4
      %v1384 = vpop.permute.xlu0 %1383
      %1385 = vrot.lane.b32.xlu0 %v1078, 4
      %v1386 = vpop.permute.xlu0 %1385
      %1387 = vrot.lane.b32.xlu0 %v1079, 4
      %v1388 = vpop.permute.xlu0 %1387
      %1389 = vrot.lane.b32.xlu0 %v1080, 4
      %v1390 = vpop.permute.xlu0 %1389
      %1391 = vrot.lane.b32.xlu0 %v1081, 4
      %v1392 = vpop.permute.xlu0 %1391
      %1393 = vrot.lane.b32.xlu0 %v1082, 4
      %v1394 = vpop.permute.xlu0 %1393
      %1395 = vrot.lane.b32.xlu0 %v1083, 4
      %v1396 = vpop.permute.xlu0 %1395
      %1397 = vrot.lane.b32.xlu0 %v1084, 4
      %v1398 = vpop.permute.xlu0 %1397
      %1399 = vrot.lane.b32.xlu0 %v1085, 4
      %v1400 = vpop.permute.xlu0 %1399
      %1401 = vrot.lane.b32.xlu0 %v1086, 4
      %v1402 = vpop.permute.xlu0 %1401
      %1403 = vrot.lane.b32.xlu0 %v1087, 4
      %v1404 = vpop.permute.xlu0 %1403
      %1405 = vrot.lane.b32.xlu0 %v1088, 4
      %v1406 = vpop.permute.xlu0 %1405
      %1407 = vrot.lane.b32.xlu0 %v1089, 4
      %v1408 = vpop.permute.xlu0 %1407
      %1409 = vrot.lane.b32.xlu0 %v1090, 4
      %v1410 = vpop.permute.xlu0 %1409
      %1411 = vrot.lane.b32.xlu0 %v1091, 4
      %v1412 = vpop.permute.xlu0 %1411
      %1477 = vrot.lane.b32.xlu0 %v1092, 8
      %v1478 = vpop.permute.xlu0 %1477
      %1479 = vrot.lane.b32.xlu0 %v1093, 8
      %v1480 = vpop.permute.xlu0 %1479
      %1481 = vrot.lane.b32.xlu0 %v1094, 8
      %v1482 = vpop.permute.xlu0 %1481
      %1483 = vrot.lane.b32.xlu0 %v1095, 8
      %v1484 = vpop.permute.xlu0 %1483
      %1485 = vrot.lane.b32.xlu0 %v1096, 8
      %v1486 = vpop.permute.xlu0 %1485
      %1487 = vrot.lane.b32.xlu0 %v1097, 8
      %v1488 = vpop.permute.xlu0 %1487
      %1489 = vrot.lane.b32.xlu0 %v1098, 8
      %v1490 = vpop.permute.xlu0 %1489
      %1491 = vrot.lane.b32.xlu0 %v1099, 8
      %v1492 = vpop.permute.xlu0 %1491
      %1493 = vrot.lane.b32.xlu0 %v1100, 8
      %v1494 = vpop.permute.xlu0 %1493
      %1495 = vrot.lane.b32.xlu0 %v1101, 8
      %v1496 = vpop.permute.xlu0 %1495
      %1497 = vrot.lane.b32.xlu0 %v1102, 8
      %v1498 = vpop.permute.xlu0 %1497
      %1499 = vrot.lane.b32.xlu0 %v1103, 8
      %v1500 = vpop.permute.xlu0 %1499
      %1501 = vrot.lane.b32.xlu0 %v1104, 8
      %v1502 = vpop.permute.xlu0 %1501
      %1503 = vrot.lane.b32.xlu0 %v1105, 8
      %v1504 = vpop.permute.xlu0 %1503
      %1505 = vrot.lane.b32.xlu0 %v1106, 8
      %v1506 = vpop.permute.xlu0 %1505
      %1507 = vrot.lane.b32.xlu0 %v1107, 8
      %v1508 = vpop.permute.xlu0 %1507
      %1509 = vrot.lane.b32.xlu0 %v1108, 8
      %v1510 = vpop.permute.xlu0 %1509
      %1511 = vrot.lane.b32.xlu0 %v1109, 8
      %v1512 = vpop.permute.xlu0 %1511
      %1513 = vrot.lane.b32.xlu0 %v1110, 8
      %v1514 = vpop.permute.xlu0 %1513
      %1515 = vrot.lane.b32.xlu0 %v1111, 8
      %v1516 = vpop.permute.xlu0 %1515
      %1517 = vrot.lane.b32.xlu0 %v1112, 8
      %v1518 = vpop.permute.xlu0 %1517
      %1519 = vrot.lane.b32.xlu0 %v1113, 8
      %v1520 = vpop.permute.xlu0 %1519
      %1521 = vrot.lane.b32.xlu0 %v1114, 8
      %v1522 = vpop.permute.xlu0 %1521
      %1523 = vrot.lane.b32.xlu0 %v1115, 8
      %v1524 = vpop.permute.xlu0 %1523
      %1525 = vrot.lane.b32.xlu0 %v1116, 8
      %v1526 = vpop.permute.xlu0 %1525
      %1527 = vrot.lane.b32.xlu0 %v1117, 8
      %v1528 = vpop.permute.xlu0 %1527
      %1529 = vrot.lane.b32.xlu0 %v1118, 8
      %v1530 = vpop.permute.xlu0 %1529
      %1531 = vrot.lane.b32.xlu0 %v1119, 8
      %v1532 = vpop.permute.xlu0 %1531
      %1533 = vrot.lane.b32.xlu0 %v1120, 8
      %v1534 = vpop.permute.xlu0 %1533
      %1535 = vrot.lane.b32.xlu0 %v1121, 8
      %v1536 = vpop.permute.xlu0 %1535
      %1537 = vrot.lane.b32.xlu0 %v1122, 8
      %v1538 = vpop.permute.xlu0 %1537
      %1539 = vrot.lane.b32.xlu0 %v1123, 8
      %v1540 = vpop.permute.xlu0 %1539
      %1605 = vrot.lane.b32.xlu0 %v1124, 12
      %v1606 = vpop.permute.xlu0 %1605
      %1607 = vrot.lane.b32.xlu0 %v1125, 12
      %v1608 = vpop.permute.xlu0 %1607
      %1609 = vrot.lane.b32.xlu0 %v1126, 12
      %v1610 = vpop.permute.xlu0 %1609
      %1611 = vrot.lane.b32.xlu0 %v1127, 12
      %v1612 = vpop.permute.xlu0 %1611
      %1613 = vrot.lane.b32.xlu0 %v1128, 12
      %v1614 = vpop.permute.xlu0 %1613
      %1615 = vrot.lane.b32.xlu0 %v1129, 12
      %v1616 = vpop.permute.xlu0 %1615
      %1617 = vrot.lane.b32.xlu0 %v1130, 12
      %v1618 = vpop.permute.xlu0 %1617
      %1619 = vrot.lane.b32.xlu0 %v1131, 12
      %v1620 = vpop.permute.xlu0 %1619
      %1621 = vrot.lane.b32.xlu0 %v1132, 12
      %v1622 = vpop.permute.xlu0 %1621
      %1623 = vrot.lane.b32.xlu0 %v1133, 12
      %v1624 = vpop.permute.xlu0 %1623
      %1625 = vrot.lane.b32.xlu0 %v1134, 12
      %v1626 = vpop.permute.xlu0 %1625
      %1627 = vrot.lane.b32.xlu0 %v1135, 12
      %v1628 = vpop.permute.xlu0 %1627
      %1629 = vrot.lane.b32.xlu0 %v1136, 12
      %v1630 = vpop.permute.xlu0 %1629
      %1631 = vrot.lane.b32.xlu0 %v1137, 12
      %v1632 = vpop.permute.xlu0 %1631
      %1633 = vrot.lane.b32.xlu0 %v1138, 12
      %v1634 = vpop.permute.xlu0 %1633
      %1635 = vrot.lane.b32.xlu0 %v1139, 12
      %v1636 = vpop.permute.xlu0 %1635
      %1637 = vrot.lane.b32.xlu0 %v1140, 12
      %v1638 = vpop.permute.xlu0 %1637
      %1639 = vrot.lane.b32.xlu0 %v1141, 12
      %v1640 = vpop.permute.xlu0 %1639
      %1641 = vrot.lane.b32.xlu0 %v1142, 12
      %v1642 = vpop.permute.xlu0 %1641
      %1643 = vrot.lane.b32.xlu0 %v1143, 12
      %v1644 = vpop.permute.xlu0 %1643
      %1645 = vrot.lane.b32.xlu0 %v1144, 12
      %v1646 = vpop.permute.xlu0 %1645
      %1647 = vrot.lane.b32.xlu0 %v1145, 12
      %v1648 = vpop.permute.xlu0 %1647
      %1649 = vrot.lane.b32.xlu0 %v1146, 12
      %v1650 = vpop.permute.xlu0 %1649
      %1651 = vrot.lane.b32.xlu0 %v1147, 12
      %v1652 = vpop.permute.xlu0 %1651
      %1653 = vrot.lane.b32.xlu0 %v1148, 12
      %v1654 = vpop.permute.xlu0 %1653
      %1655 = vrot.lane.b32.xlu0 %v1149, 12
      %v1656 = vpop.permute.xlu0 %1655
      %1657 = vrot.lane.b32.xlu0 %v1150, 12
      %v1658 = vpop.permute.xlu0 %1657
      %1659 = vrot.lane.b32.xlu0 %v1151, 12
      %v1660 = vpop.permute.xlu0 %1659
      %1661 = vrot.lane.b32.xlu0 %v1152, 12
      %v1662 = vpop.permute.xlu0 %1661
      %1663 = vrot.lane.b32.xlu0 %v1153, 12
      %v1664 = vpop.permute.xlu0 %1663
      %1665 = vrot.lane.b32.xlu0 %v1154, 12
      %v1666 = vpop.permute.xlu0 %1665
      %1667 = vrot.lane.b32.xlu0 %v1155, 12
      %v1668 = vpop.permute.xlu0 %1667
      %1733 = vrot.lane.b32.xlu0 %v1156, 16
      %v1734 = vpop.permute.xlu0 %1733
      %1735 = vrot.lane.b32.xlu0 %v1157, 16
      %v1736 = vpop.permute.xlu0 %1735
      %1737 = vrot.lane.b32.xlu0 %v1158, 16
      %v1738 = vpop.permute.xlu0 %1737
      %1739 = vrot.lane.b32.xlu0 %v1159, 16
      %v1740 = vpop.permute.xlu0 %1739
      %1741 = vrot.lane.b32.xlu0 %v1160, 16
      %v1742 = vpop.permute.xlu0 %1741
      %1743 = vrot.lane.b32.xlu0 %v1161, 16
      %v1744 = vpop.permute.xlu0 %1743
      %1745 = vrot.lane.b32.xlu0 %v1162, 16
      %v1746 = vpop.permute.xlu0 %1745
      %1747 = vrot.lane.b32.xlu0 %v1163, 16
      %v1748 = vpop.permute.xlu0 %1747
      %1749 = vrot.lane.b32.xlu0 %v1164, 16
      %v1750 = vpop.permute.xlu0 %1749
      %1751 = vrot.lane.b32.xlu0 %v1165, 16
      %v1752 = vpop.permute.xlu0 %1751
      %1753 = vrot.lane.b32.xlu0 %v1166, 16
      %v1754 = vpop.permute.xlu0 %1753
      %1755 = vrot.lane.b32.xlu0 %v1167, 16
      %v1756 = vpop.permute.xlu0 %1755
      %1757 = vrot.lane.b32.xlu0 %v1168, 16
      %v1758 = vpop.permute.xlu0 %1757
      %1759 = vrot.lane.b32.xlu0 %v1169, 16
      %v1760 = vpop.permute.xlu0 %1759
      %1761 = vrot.lane.b32.xlu0 %v1170, 16
      %v1762 = vpop.permute.xlu0 %1761
      %1763 = vrot.lane.b32.xlu0 %v1171, 16
      %v1764 = vpop.permute.xlu0 %1763
      %1765 = vrot.lane.b32.xlu0 %v1172, 16
      %v1766 = vpop.permute.xlu0 %1765
      %1767 = vrot.lane.b32.xlu0 %v1173, 16
      %v1768 = vpop.permute.xlu0 %1767
      %1769 = vrot.lane.b32.xlu0 %v1174, 16
      %v1770 = vpop.permute.xlu0 %1769
      %1771 = vrot.lane.b32.xlu0 %v1175, 16
      %v1772 = vpop.permute.xlu0 %1771
      %1773 = vrot.lane.b32.xlu0 %v1176, 16
      %v1774 = vpop.permute.xlu0 %1773
      %1775 = vrot.lane.b32.xlu0 %v1177, 16
      %v1776 = vpop.permute.xlu0 %1775
      %1777 = vrot.lane.b32.xlu0 %v1178, 16
      %v1778 = vpop.permute.xlu0 %1777
      %1779 = vrot.lane.b32.xlu0 %v1179, 16
      %v1780 = vpop.permute.xlu0 %1779
      %1781 = vrot.lane.b32.xlu0 %v1180, 16
      %v1782 = vpop.permute.xlu0 %1781
      %1783 = vrot.lane.b32.xlu0 %v1181, 16
      %v1784 = vpop.permute.xlu0 %1783
      %1785 = vrot.lane.b32.xlu0 %v1182, 16
      %v1786 = vpop.permute.xlu0 %1785
      %1787 = vrot.lane.b32.xlu0 %v1183, 16
      %v1788 = vpop.permute.xlu0 %1787
      %1789 = vrot.lane.b32.xlu0 %v1184, 16
      %v1790 = vpop.permute.xlu0 %1789
      %1791 = vrot.lane.b32.xlu0 %v1185, 16
      %v1792 = vpop.permute.xlu0 %1791
      %1793 = vrot.lane.b32.xlu0 %v1186, 16
      %v1794 = vpop.permute.xlu0 %1793
      %1795 = vrot.lane.b32.xlu0 %v1187, 16
      %v1796 = vpop.permute.xlu0 %1795
      %1861 = vrot.lane.b32.xlu0 %v1188, 20
      %v1862 = vpop.permute.xlu0 %1861
      %1863 = vrot.lane.b32.xlu0 %v1189, 20
      %v1864 = vpop.permute.xlu0 %1863
      %1865 = vrot.lane.b32.xlu0 %v1190, 20
      %v1866 = vpop.permute.xlu0 %1865
      %1867 = vrot.lane.b32.xlu0 %v1191, 20
      %v1868 = vpop.permute.xlu0 %1867
      %1869 = vrot.lane.b32.xlu0 %v1192, 20
      %v1870 = vpop.permute.xlu0 %1869
      %1871 = vrot.lane.b32.xlu0 %v1193, 20
      %v1872 = vpop.permute.xlu0 %1871
      %1873 = vrot.lane.b32.xlu0 %v1194, 20
      %v1874 = vpop.permute.xlu0 %1873
      %1875 = vrot.lane.b32.xlu0 %v1195, 20
      %v1876 = vpop.permute.xlu0 %1875
      %1877 = vrot.lane.b32.xlu0 %v1196, 20
      %v1878 = vpop.permute.xlu0 %1877
      %1879 = vrot.lane.b32.xlu0 %v1197, 20
      %v1880 = vpop.permute.xlu0 %1879
      %1881 = vrot.lane.b32.xlu0 %v1198, 20
      %v1882 = vpop.permute.xlu0 %1881
      %1883 = vrot.lane.b32.xlu0 %v1199, 20
      %v1884 = vpop.permute.xlu0 %1883
      %1885 = vrot.lane.b32.xlu0 %v1200, 20
      %v1886 = vpop.permute.xlu0 %1885
      %1887 = vrot.lane.b32.xlu0 %v1201, 20
      %v1888 = vpop.permute.xlu0 %1887
      %1889 = vrot.lane.b32.xlu0 %v1202, 20
      %v1890 = vpop.permute.xlu0 %1889
      %1891 = vrot.lane.b32.xlu0 %v1203, 20
      %v1892 = vpop.permute.xlu0 %1891
      %1893 = vrot.lane.b32.xlu0 %v1204, 20
      %v1894 = vpop.permute.xlu0 %1893
      %1895 = vrot.lane.b32.xlu0 %v1205, 20
      %v1896 = vpop.permute.xlu0 %1895
      %1897 = vrot.lane.b32.xlu0 %v1206, 20
      %v1898 = vpop.permute.xlu0 %1897
      %1899 = vrot.lane.b32.xlu0 %v1207, 20
      %v1900 = vpop.permute.xlu0 %1899
      %1901 = vrot.lane.b32.xlu0 %v1208, 20
      %v1902 = vpop.permute.xlu0 %1901
      %1903 = vrot.lane.b32.xlu0 %v1209, 20
      %v1904 = vpop.permute.xlu0 %1903
      %1905 = vrot.lane.b32.xlu0 %v1210, 20
      %v1906 = vpop.permute.xlu0 %1905
      %1907 = vrot.lane.b32.xlu0 %v1211, 20
      %v1908 = vpop.permute.xlu0 %1907
      %1909 = vrot.lane.b32.xlu0 %v1212, 20
      %v1910 = vpop.permute.xlu0 %1909
      %1911 = vrot.lane.b32.xlu0 %v1213, 20
      %v1912 = vpop.permute.xlu0 %1911
      %1913 = vrot.lane.b32.xlu0 %v1214, 20
      %v1914 = vpop.permute.xlu0 %1913
      %1915 = vrot.lane.b32.xlu0 %v1215, 20
      %v1916 = vpop.permute.xlu0 %1915
      %1917 = vrot.lane.b32.xlu0 %v1216, 20
      %v1918 = vpop.permute.xlu0 %1917
      %1919 = vrot.lane.b32.xlu0 %v1217, 20
      %v1920 = vpop.permute.xlu0 %1919
      %1921 = vrot.lane.b32.xlu0 %v1218, 20
      %v1922 = vpop.permute.xlu0 %1921
      %1923 = vrot.lane.b32.xlu0 %v1219, 20
      %v1924 = vpop.permute.xlu0 %1923
      %1989 = vrot.lane.b32.xlu0 %v1221, 24
      %v1990 = vpop.permute.xlu0 %1989
      %1991 = vrot.lane.b32.xlu0 %v1222, 24
      %v1992 = vpop.permute.xlu0 %1991
      %1993 = vrot.lane.b32.xlu0 %v1223, 24
      %v1994 = vpop.permute.xlu0 %1993
      %1995 = vrot.lane.b32.xlu0 %v1224, 24
      %v1996 = vpop.permute.xlu0 %1995
      %1997 = vrot.lane.b32.xlu0 %v1225, 24
      %v1998 = vpop.permute.xlu0 %1997
      %1999 = vrot.lane.b32.xlu0 %v1226, 24
      %v2000 = vpop.permute.xlu0 %1999
      %2001 = vrot.lane.b32.xlu0 %v1227, 24
      %v2002 = vpop.permute.xlu0 %2001
      %2003 = vrot.lane.b32.xlu0 %v1228, 24
      %v2004 = vpop.permute.xlu0 %2003
      %2005 = vrot.lane.b32.xlu0 %v1229, 24
      %v2006 = vpop.permute.xlu0 %2005
      %2007 = vrot.lane.b32.xlu0 %v1230, 24
      %v2008 = vpop.permute.xlu0 %2007
      %2009 = vrot.lane.b32.xlu0 %v1231, 24
      %v2010 = vpop.permute.xlu0 %2009
      %2011 = vrot.lane.b32.xlu0 %v1232, 24
      %v2012 = vpop.permute.xlu0 %2011
      %2013 = vrot.lane.b32.xlu0 %v1233, 24
      %v2014 = vpop.permute.xlu0 %2013
      %2015 = vrot.lane.b32.xlu0 %v1234, 24
      %v2016 = vpop.permute.xlu0 %2015
      %2017 = vrot.lane.b32.xlu0 %v1235, 24
      %v2018 = vpop.permute.xlu0 %2017
      %2019 = vrot.lane.b32.xlu0 %v1236, 24
      %v2020 = vpop.permute.xlu0 %2019
      %2021 = vrot.lane.b32.xlu0 %v1237, 24
      %v2022 = vpop.permute.xlu0 %2021
      %2023 = vrot.lane.b32.xlu0 %v1238, 24
      %v2024 = vpop.permute.xlu0 %2023
      %2025 = vrot.lane.b32.xlu0 %v1239, 24
      %v2026 = vpop.permute.xlu0 %2025
      %2027 = vrot.lane.b32.xlu0 %v1240, 24
      %v2028 = vpop.permute.xlu0 %2027
      %2029 = vrot.lane.b32.xlu0 %v1241, 24
      %v2030 = vpop.permute.xlu0 %2029
      %2031 = vrot.lane.b32.xlu0 %v1242, 24
      %v2032 = vpop.permute.xlu0 %2031
      %2033 = vrot.lane.b32.xlu0 %v1243, 24
      %v2034 = vpop.permute.xlu0 %2033
      %2035 = vrot.lane.b32.xlu0 %v1244, 24
      %v2036 = vpop.permute.xlu0 %2035
      %2037 = vrot.lane.b32.xlu0 %v1245, 24
      %v2038 = vpop.permute.xlu0 %2037
      %2039 = vrot.lane.b32.xlu0 %v1246, 24
      %v2040 = vpop.permute.xlu0 %2039
      %2041 = vrot.lane.b32.xlu0 %v1247, 24
      %v2042 = vpop.permute.xlu0 %2041
      %2043 = vrot.lane.b32.xlu0 %v1248, 24
      %v2044 = vpop.permute.xlu0 %2043
      %2045 = vrot.lane.b32.xlu0 %v1249, 24
      %v2046 = vpop.permute.xlu0 %2045
      %2047 = vrot.lane.b32.xlu0 %v1250, 24
      %v2048 = vpop.permute.xlu0 %2047
      %2049 = vrot.lane.b32.xlu0 %v1251, 24
      %v2050 = vpop.permute.xlu0 %2049
      %2051 = vrot.lane.b32.xlu0 %v1252, 24
      %v2052 = vpop.permute.xlu0 %2051
      %2117 = vrot.lane.b32.xlu0 %v1253, 28
      %v2118 = vpop.permute.xlu0 %2117
      %2119 = vrot.lane.b32.xlu0 %v1254, 28
      %v2120 = vpop.permute.xlu0 %2119
      %2121 = vrot.lane.b32.xlu0 %v1255, 28
      %v2122 = vpop.permute.xlu0 %2121
      %2123 = vrot.lane.b32.xlu0 %v1256, 28
      %v2124 = vpop.permute.xlu0 %2123
      %2125 = vrot.lane.b32.xlu0 %v1257, 28
      %v2126 = vpop.permute.xlu0 %2125
      %2127 = vrot.lane.b32.xlu0 %v1258, 28
      %v2128 = vpop.permute.xlu0 %2127
      %2129 = vrot.lane.b32.xlu0 %v1259, 28
      %v2130 = vpop.permute.xlu0 %2129
      %2131 = vrot.lane.b32.xlu0 %v1260, 28
      %v2132 = vpop.permute.xlu0 %2131
      %2133 = vrot.lane.b32.xlu0 %v1261, 28
      %v2134 = vpop.permute.xlu0 %2133
      %2135 = vrot.lane.b32.xlu0 %v1262, 28
      %v2136 = vpop.permute.xlu0 %2135
      %2137 = vrot.lane.b32.xlu0 %v1263, 28
      %v2138 = vpop.permute.xlu0 %2137
      %2139 = vrot.lane.b32.xlu0 %v1264, 28
      %v2140 = vpop.permute.xlu0 %2139
      %2141 = vrot.lane.b32.xlu0 %v1265, 28
      %v2142 = vpop.permute.xlu0 %2141
      %2143 = vrot.lane.b32.xlu0 %v1266, 28
      %v2144 = vpop.permute.xlu0 %2143
      %2145 = vrot.lane.b32.xlu0 %v1267, 28
      %v2146 = vpop.permute.xlu0 %2145
      %2147 = vrot.lane.b32.xlu0 %v1268, 28
      %v2148 = vpop.permute.xlu0 %2147
      %2149 = vrot.lane.b32.xlu0 %v1269, 28
      %v2150 = vpop.permute.xlu0 %2149
      %2151 = vrot.lane.b32.xlu0 %v1270, 28
      %v2152 = vpop.permute.xlu0 %2151
      %2153 = vrot.lane.b32.xlu0 %v1271, 28
      %v2154 = vpop.permute.xlu0 %2153
      %2155 = vrot.lane.b32.xlu0 %v1272, 28
      %v2156 = vpop.permute.xlu0 %2155
      %2157 = vrot.lane.b32.xlu0 %v1273, 28
      %v2158 = vpop.permute.xlu0 %2157
      %2159 = vrot.lane.b32.xlu0 %v1274, 28
      %v2160 = vpop.permute.xlu0 %2159
      %2161 = vrot.lane.b32.xlu0 %v1275, 28
      %v2162 = vpop.permute.xlu0 %2161
      %2163 = vrot.lane.b32.xlu0 %v1276, 28
      %v2164 = vpop.permute.xlu0 %2163
      %2165 = vrot.lane.b32.xlu0 %v1277, 28
      %v2166 = vpop.permute.xlu0 %2165
      %2167 = vrot.lane.b32.xlu0 %v1278, 28
      %v2168 = vpop.permute.xlu0 %2167
      %2169 = vrot.lane.b32.xlu0 %v1279, 28
      %v2170 = vpop.permute.xlu0 %2169
      %2171 = vrot.lane.b32.xlu0 %v1280, 28
      %v2172 = vpop.permute.xlu0 %2171
      %2173 = vrot.lane.b32.xlu0 %v1281, 28
      %v2174 = vpop.permute.xlu0 %2173
      %2175 = vrot.lane.b32.xlu0 %v1282, 28
      %v2176 = vpop.permute.xlu0 %2175
      %2177 = vrot.lane.b32.xlu0 %v1283, 28
      %v2178 = vpop.permute.xlu0 %2177
      %2179 = vrot.lane.b32.xlu0 %v1284, 28
      %v2180 = vpop.permute.xlu0 %2179
      %2245 = vrot.lane.b32.xlu0 %v1285, 32
      %v2246 = vpop.permute.xlu0 %2245
      %2247 = vrot.lane.b32.xlu0 %v1286, 32
      %v2248 = vpop.permute.xlu0 %2247
      %2249 = vrot.lane.b32.xlu0 %v1287, 32
      %v2250 = vpop.permute.xlu0 %2249
      %2251 = vrot.lane.b32.xlu0 %v1288, 32
      %v2252 = vpop.permute.xlu0 %2251
      %2253 = vrot.lane.b32.xlu0 %v1289, 32
      %v2254 = vpop.permute.xlu0 %2253
      %2255 = vrot.lane.b32.xlu0 %v1290, 32
      %v2256 = vpop.permute.xlu0 %2255
      %2257 = vrot.lane.b32.xlu0 %v1291, 32
      %v2258 = vpop.permute.xlu0 %2257
      %2259 = vrot.lane.b32.xlu0 %v1292, 32
      %v2260 = vpop.permute.xlu0 %2259
      %2261 = vrot.lane.b32.xlu0 %v1293, 32
      %v2262 = vpop.permute.xlu0 %2261
      %2263 = vrot.lane.b32.xlu0 %v1294, 32
      %v2264 = vpop.permute.xlu0 %2263
      %2265 = vrot.lane.b32.xlu0 %v1295, 32
      %v2266 = vpop.permute.xlu0 %2265
      %2267 = vrot.lane.b32.xlu0 %v1296, 32
      %v2268 = vpop.permute.xlu0 %2267
      %2269 = vrot.lane.b32.xlu0 %v1297, 32
      %v2270 = vpop.permute.xlu0 %2269
      %2271 = vrot.lane.b32.xlu0 %v1298, 32
      %v2272 = vpop.permute.xlu0 %2271
      %2273 = vrot.lane.b32.xlu0 %v1299, 32
      %v2274 = vpop.permute.xlu0 %2273
      %2275 = vrot.lane.b32.xlu0 %v1300, 32
      %v2276 = vpop.permute.xlu0 %2275
      %2277 = vrot.lane.b32.xlu0 %v1301, 32
      %v2278 = vpop.permute.xlu0 %2277
      %2279 = vrot.lane.b32.xlu0 %v1302, 32
      %v2280 = vpop.permute.xlu0 %2279
      %2281 = vrot.lane.b32.xlu0 %v1303, 32
      %v2282 = vpop.permute.xlu0 %2281
      %2283 = vrot.lane.b32.xlu0 %v1304, 32
      %v2284 = vpop.permute.xlu0 %2283
      %2285 = vrot.lane.b32.xlu0 %v1305, 32
      %v2286 = vpop.permute.xlu0 %2285
      %2287 = vrot.lane.b32.xlu0 %v1306, 32
      %v2288 = vpop.permute.xlu0 %2287
      %2289 = vrot.lane.b32.xlu0 %v1307, 32
      %v2290 = vpop.permute.xlu0 %2289
      %2291 = vrot.lane.b32.xlu0 %v1308, 32
      %v2292 = vpop.permute.xlu0 %2291
      %2293 = vrot.lane.b32.xlu0 %v1309, 32
      %v2294 = vpop.permute.xlu0 %2293
      %2295 = vrot.lane.b32.xlu0 %v1310, 32
      %v2296 = vpop.permute.xlu0 %2295
      %2297 = vrot.lane.b32.xlu0 %v1311, 32
      %v2298 = vpop.permute.xlu0 %2297
      %2299 = vrot.lane.b32.xlu0 %v1312, 32
      %v2300 = vpop.permute.xlu0 %2299
      %2301 = vrot.lane.b32.xlu0 %v1313, 32
      %v2302 = vpop.permute.xlu0 %2301
      %2303 = vrot.lane.b32.xlu0 %v1314, 32
      %v2304 = vpop.permute.xlu0 %2303
      %2305 = vrot.lane.b32.xlu0 %v1315, 32
      %v2306 = vpop.permute.xlu0 %2305
      %2307 = vrot.lane.b32.xlu0 %v1316, 32
      %v2308 = vpop.permute.xlu0 %2307
      %v2341 = vsel %vm312, %v1028, %v1350
      %v2342 = vsel %vm312, %v1029, %v1352
      %v2343 = vsel %vm312, %v1030, %v1354
      %v2344 = vsel %vm312, %v1031, %v1356
      %v2345 = vsel %vm312, %v1032, %v1358
      %v2346 = vsel %vm312, %v1033, %v1360
      %v2347 = vsel %vm312, %v1034, %v1362
      %v2348 = vsel %vm312, %v1035, %v1364
      %v2349 = vsel %vm312, %v1036, %v1366
      %v2350 = vsel %vm312, %v1037, %v1368
      %v2351 = vsel %vm312, %v1038, %v1370
      %v2352 = vsel %vm312, %v1039, %v1372
      %v2353 = vsel %vm312, %v1040, %v1374
      %v2354 = vsel %vm312, %v1041, %v1376
      %v2355 = vsel %vm312, %v1042, %v1378
      %v2356 = vsel %vm312, %v1043, %v1380
      %v2357 = vsel %vm312, %v1044, %v1382
      %v2358 = vsel %vm312, %v1045, %v1384
      %v2359 = vsel %vm312, %v1046, %v1386
      %v2360 = vsel %vm312, %v1047, %v1388
      %v2361 = vsel %vm312, %v1048, %v1390
      %v2362 = vsel %vm312, %v1049, %v1392
      %v2363 = vsel %vm312, %v1050, %v1394
      %v2364 = vsel %vm312, %v1051, %v1396
      %v2365 = vsel %vm312, %v1052, %v1398
      %v2366 = vsel %vm312, %v1053, %v1400
      %v2367 = vsel %vm312, %v1054, %v1402
      %v2368 = vsel %vm312, %v1055, %v1404
      %v2369 = vsel %vm312, %v1056, %v1406
      %v2370 = vsel %vm312, %v1057, %v1408
      %v2371 = vsel %vm312, %v1058, %v1410
      %v2372 = vsel %vm312, %v1059, %v1412
      %vm2373 = vcmask 64512
      %v2374 = vsel %vm2373, %v2341, %v1478
      %v2375 = vsel %vm2373, %v2342, %v1480
      %v2376 = vsel %vm2373, %v2343, %v1482
      %v2377 = vsel %vm2373, %v2344, %v1484
      %v2378 = vsel %vm2373, %v2345, %v1486
      %v2379 = vsel %vm2373, %v2346, %v1488
      %v2380 = vsel %vm2373, %v2347, %v1490
      %v2381 = vsel %vm2373, %v2348, %v1492
      %v2382 = vsel %vm2373, %v2349, %v1494
      %v2383 = vsel %vm2373, %v2350, %v1496
      %v2384 = vsel %vm2373, %v2351, %v1498
      %v2385 = vsel %vm2373, %v2352, %v1500
      %v2386 = vsel %vm2373, %v2353, %v1502
      %v2387 = vsel %vm2373, %v2354, %v1504
      %v2388 = vsel %vm2373, %v2355, %v1506
      %v2389 = vsel %vm2373, %v2356, %v1508
      %v2390 = vsel %vm2373, %v2357, %v1510
      %v2391 = vsel %vm2373, %v2358, %v1512
      %v2392 = vsel %vm2373, %v2359, %v1514
      %v2393 = vsel %vm2373, %v2360, %v1516
      %v2394 = vsel %vm2373, %v2361, %v1518
      %v2395 = vsel %vm2373, %v2362, %v1520
      %v2396 = vsel %vm2373, %v2363, %v1522
      %v2397 = vsel %vm2373, %v2364, %v1524
      %v2398 = vsel %vm2373, %v2365, %v1526
      %v2399 = vsel %vm2373, %v2366, %v1528
      %v2400 = vsel %vm2373, %v2367, %v1530
      %v2401 = vsel %vm2373, %v2368, %v1532
      %v2402 = vsel %vm2373, %v2369, %v1534
      %v2403 = vsel %vm2373, %v2370, %v1536
      %v2404 = vsel %vm2373, %v2371, %v1538
      %v2405 = vsel %vm2373, %v2372, %v1540
      %vm2406 = vcmask 97280
      %v2407 = vsel %vm2406, %v2374, %v1606
      %v2408 = vsel %vm2406, %v2375, %v1608
      %v2409 = vsel %vm2406, %v2376, %v1610
      %v2410 = vsel %vm2406, %v2377, %v1612
      %v2411 = vsel %vm2406, %v2378, %v1614
      %v2412 = vsel %vm2406, %v2379, %v1616
      %v2413 = vsel %vm2406, %v2380, %v1618
      %v2414 = vsel %vm2406, %v2381, %v1620
      %v2415 = vsel %vm2406, %v2382, %v1622
      %v2416 = vsel %vm2406, %v2383, %v1624
      %v2417 = vsel %vm2406, %v2384, %v1626
      %v2418 = vsel %vm2406, %v2385, %v1628
      %v2419 = vsel %vm2406, %v2386, %v1630
      %v2420 = vsel %vm2406, %v2387, %v1632
      %v2421 = vsel %vm2406, %v2388, %v1634
      %v2422 = vsel %vm2406, %v2389, %v1636
      %v2423 = vsel %vm2406, %v2390, %v1638
      %v2424 = vsel %vm2406, %v2391, %v1640
      %v2425 = vsel %vm2406, %v2392, %v1642
      %v2426 = vsel %vm2406, %v2393, %v1644
      %v2427 = vsel %vm2406, %v2394, %v1646
      %v2428 = vsel %vm2406, %v2395, %v1648
      %v2429 = vsel %vm2406, %v2396, %v1650
      %v2430 = vsel %vm2406, %v2397, %v1652
      %v2431 = vsel %vm2406, %v2398, %v1654
      %v2432 = vsel %vm2406, %v2399, %v1656
      %v2433 = vsel %vm2406, %v2400, %v1658
      %v2434 = vsel %vm2406, %v2401, %v1660
      %v2435 = vsel %vm2406, %v2402, %v1662
      %v2436 = vsel %vm2406, %v2403, %v1664
      %v2437 = vsel %vm2406, %v2404, %v1666
      %v2438 = vsel %vm2406, %v2405, %v1668
      %vm2439 = vcmask 130048
      %v2440 = vsel %vm2439, %v2407, %v1734
      %v2441 = vsel %vm2439, %v2408, %v1736
      %v2442 = vsel %vm2439, %v2409, %v1738
      %v2443 = vsel %vm2439, %v2410, %v1740
      %v2444 = vsel %vm2439, %v2411, %v1742
      %v2445 = vsel %vm2439, %v2412, %v1744
      %v2446 = vsel %vm2439, %v2413, %v1746
      %v2447 = vsel %vm2439, %v2414, %v1748
      %v2448 = vsel %vm2439, %v2415, %v1750
      %v2449 = vsel %vm2439, %v2416, %v1752
      %v2450 = vsel %vm2439, %v2417, %v1754
      %v2451 = vsel %vm2439, %v2418, %v1756
      %v2452 = vsel %vm2439, %v2419, %v1758
      %v2453 = vsel %vm2439, %v2420, %v1760
      %v2454 = vsel %vm2439, %v2421, %v1762
      %v2455 = vsel %vm2439, %v2422, %v1764
      %v2456 = vsel %vm2439, %v2423, %v1766
      %v2457 = vsel %vm2439, %v2424, %v1768
      %v2458 = vsel %vm2439, %v2425, %v1770
      %v2459 = vsel %vm2439, %v2426, %v1772
      %v2460 = vsel %vm2439, %v2427, %v1774
      %v2461 = vsel %vm2439, %v2428, %v1776
      %v2462 = vsel %vm2439, %v2429, %v1778
      %v2463 = vsel %vm2439, %v2430, %v1780
      %v2464 = vsel %vm2439, %v2431, %v1782
      %v2465 = vsel %vm2439, %v2432, %v1784
      %v2466 = vsel %vm2439, %v2433, %v1786
      %v2467 = vsel %vm2439, %v2434, %v1788
      %v2468 = vsel %vm2439, %v2435, %v1790
      %v2469 = vsel %vm2439, %v2436, %v1792
      %v2470 = vsel %vm2439, %v2437, %v1794
      %v2471 = vsel %vm2439, %v2438, %v1796
      %vm2472 = vcmask 162816
      %v2473 = vsel %vm2472, %v2440, %v1862
      %v2474 = vsel %vm2472, %v2441, %v1864
      %v2475 = vsel %vm2472, %v2442, %v1866
      %v2476 = vsel %vm2472, %v2443, %v1868
      %v2477 = vsel %vm2472, %v2444, %v1870
      %v2478 = vsel %vm2472, %v2445, %v1872
      %v2479 = vsel %vm2472, %v2446, %v1874
      %v2480 = vsel %vm2472, %v2447, %v1876
      %v2481 = vsel %vm2472, %v2448, %v1878
      %v2482 = vsel %vm2472, %v2449, %v1880
      %v2483 = vsel %vm2472, %v2450, %v1882
      %v2484 = vsel %vm2472, %v2451, %v1884
      %v2485 = vsel %vm2472, %v2452, %v1886
      %v2486 = vsel %vm2472, %v2453, %v1888
      %v2487 = vsel %vm2472, %v2454, %v1890
      %v2488 = vsel %vm2472, %v2455, %v1892
      %v2489 = vsel %vm2472, %v2456, %v1894
      %v2490 = vsel %vm2472, %v2457, %v1896
      %v2491 = vsel %vm2472, %v2458, %v1898
      %v2492 = vsel %vm2472, %v2459, %v1900
      %v2493 = vsel %vm2472, %v2460, %v1902
      %v2494 = vsel %vm2472, %v2461, %v1904
      %v2495 = vsel %vm2472, %v2462, %v1906
      %v2496 = vsel %vm2472, %v2463, %v1908
      %v2497 = vsel %vm2472, %v2464, %v1910
      %v2498 = vsel %vm2472, %v2465, %v1912
      %v2499 = vsel %vm2472, %v2466, %v1914
      %v2500 = vsel %vm2472, %v2467, %v1916
      %v2501 = vsel %vm2472, %v2468, %v1918
      %v2502 = vsel %vm2472, %v2469, %v1920
      %v2503 = vsel %vm2472, %v2470, %v1922
      %v2504 = vsel %vm2472, %v2471, %v1924
      %vm2505 = vcmask 195584
      %v2506 = vsel %vm2505, %v2473, %v1990
      %v2507 = vsel %vm2505, %v2474, %v1992
      %v2508 = vsel %vm2505, %v2475, %v1994
      %v2509 = vsel %vm2505, %v2476, %v1996
      %v2510 = vsel %vm2505, %v2477, %v1998
      %v2511 = vsel %vm2505, %v2478, %v2000
      %v2512 = vsel %vm2505, %v2479, %v2002
      %v2513 = vsel %vm2505, %v2480, %v2004
      %v2514 = vsel %vm2505, %v2481, %v2006
      %v2515 = vsel %vm2505, %v2482, %v2008
      %v2516 = vsel %vm2505, %v2483, %v2010
      %v2517 = vsel %vm2505, %v2484, %v2012
      %v2518 = vsel %vm2505, %v2485, %v2014
      %v2519 = vsel %vm2505, %v2486, %v2016
      %v2520 = vsel %vm2505, %v2487, %v2018
      %v2521 = vsel %vm2505, %v2488, %v2020
      %v2522 = vsel %vm2505, %v2489, %v2022
      %v2523 = vsel %vm2505, %v2490, %v2024
      %v2524 = vsel %vm2505, %v2491, %v2026
      %v2525 = vsel %vm2505, %v2492, %v2028
      %v2526 = vsel %vm2505, %v2493, %v2030
      %v2527 = vsel %vm2505, %v2494, %v2032
      %v2528 = vsel %vm2505, %v2495, %v2034
      %v2529 = vsel %vm2505, %v2496, %v2036
      %v2530 = vsel %vm2505, %v2497, %v2038
      %v2531 = vsel %vm2505, %v2498, %v2040
      %v2532 = vsel %vm2505, %v2499, %v2042
      %v2533 = vsel %vm2505, %v2500, %v2044
      %v2534 = vsel %vm2505, %v2501, %v2046
      %v2535 = vsel %vm2505, %v2502, %v2048
      %v2536 = vsel %vm2505, %v2503, %v2050
      %v2537 = vsel %vm2505, %v2504, %v2052
      %vm2538 = vcmask 228352
      %v2539 = vsel %vm2538, %v2506, %v2118
      %v2540 = vsel %vm2538, %v2507, %v2120
      %v2541 = vsel %vm2538, %v2508, %v2122
      %v2542 = vsel %vm2538, %v2509, %v2124
      %v2543 = vsel %vm2538, %v2510, %v2126
      %v2544 = vsel %vm2538, %v2511, %v2128
      %v2545 = vsel %vm2538, %v2512, %v2130
      %v2546 = vsel %vm2538, %v2513, %v2132
      %v2547 = vsel %vm2538, %v2514, %v2134
      %v2548 = vsel %vm2538, %v2515, %v2136
      %v2549 = vsel %vm2538, %v2516, %v2138
      %v2550 = vsel %vm2538, %v2517, %v2140
      %v2551 = vsel %vm2538, %v2518, %v2142
      %v2552 = vsel %vm2538, %v2519, %v2144
      %v2553 = vsel %vm2538, %v2520, %v2146
      %v2554 = vsel %vm2538, %v2521, %v2148
      %v2555 = vsel %vm2538, %v2522, %v2150
      %v2556 = vsel %vm2538, %v2523, %v2152
      %v2557 = vsel %vm2538, %v2524, %v2154
      %v2558 = vsel %vm2538, %v2525, %v2156
      %v2559 = vsel %vm2538, %v2526, %v2158
      %v2560 = vsel %vm2538, %v2527, %v2160
      %v2561 = vsel %vm2538, %v2528, %v2162
      %v2562 = vsel %vm2538, %v2529, %v2164
      %v2563 = vsel %vm2538, %v2530, %v2166
      %v2564 = vsel %vm2538, %v2531, %v2168
      %v2565 = vsel %vm2538, %v2532, %v2170
      %v2566 = vsel %vm2538, %v2533, %v2172
      %v2567 = vsel %vm2538, %v2534, %v2174
      %v2568 = vsel %vm2538, %v2535, %v2176
      %v2569 = vsel %vm2538, %v2536, %v2178
      %v2570 = vsel %vm2538, %v2537, %v2180
      %vm2571 = vcmask 261120
      %v2572 = vsel %vm2571, %v2539, %v2246
      %v2573 = vsel %vm2571, %v2540, %v2248
      %v2574 = vsel %vm2571, %v2541, %v2250
      %v2575 = vsel %vm2571, %v2542, %v2252
      %v2576 = vsel %vm2571, %v2543, %v2254
      %v2577 = vsel %vm2571, %v2544, %v2256
      %v2578 = vsel %vm2571, %v2545, %v2258
      %v2579 = vsel %vm2571, %v2546, %v2260
      %v2580 = vsel %vm2571, %v2547, %v2262
      %v2581 = vsel %vm2571, %v2548, %v2264
      %v2582 = vsel %vm2571, %v2549, %v2266
      %v2583 = vsel %vm2571, %v2550, %v2268
      %v2584 = vsel %vm2571, %v2551, %v2270
      %v2585 = vsel %vm2571, %v2552, %v2272
      %v2586 = vsel %vm2571, %v2553, %v2274
      %v2587 = vsel %vm2571, %v2554, %v2276
      %v2588 = vsel %vm2571, %v2555, %v2278
      %v2589 = vsel %vm2571, %v2556, %v2280
      %v2590 = vsel %vm2571, %v2557, %v2282
      %v2591 = vsel %vm2571, %v2558, %v2284
      %v2592 = vsel %vm2571, %v2559, %v2286
      %v2593 = vsel %vm2571, %v2560, %v2288
      %v2594 = vsel %vm2571, %v2561, %v2290
      %v2595 = vsel %vm2571, %v2562, %v2292
      %v2596 = vsel %vm2571, %v2563, %v2294
      %v2597 = vsel %vm2571, %v2564, %v2296
      %v2598 = vsel %vm2571, %v2565, %v2298
      %v2599 = vsel %vm2571, %v2566, %v2300
      %v2600 = vsel %vm2571, %v2567, %v2302
      %v2601 = vsel %vm2571, %v2568, %v2304
      %v2602 = vsel %vm2571, %v2569, %v2306
      %v2603 = vsel %vm2571, %v2570, %v2308
      %v2604 = vld [vmem:[%s4] sm:$0xff]
      %v2605 = vld [vmem:[%s4 + $0x8] sm:$0xff]
      %v2606 = vld [vmem:[%s4 + $0x10] sm:$0xff]
      %v2607 = vld [vmem:[%s4 + $0x18] sm:$0xff]
      %v2608 = vld [vmem:[%s4 + $0x20] sm:$0xf]
      %vm2609 = vcmask 293888
      %v2611 = vsel %vm2609, %v2572, 0
      %v2614 = vsel %vm2609, %v2573, 0
      %v2617 = vsel %vm2609, %v2574, 0
      %v2620 = vsel %vm2609, %v2575, 0
      %v2623 = vsel %vm2609, %v2576, 0
      %v2626 = vsel %vm2609, %v2577, 0
      %v2629 = vsel %vm2609, %v2578, 0
      %v2632 = vsel %vm2609, %v2579, 0
      %v2635 = vsel %vm2609, %v2580, 0
      %v2638 = vsel %vm2609, %v2581, 0
      %v2641 = vsel %vm2609, %v2582, 0
      %v2644 = vsel %vm2609, %v2583, 0
      %v2647 = vsel %vm2609, %v2584, 0
      %v2650 = vsel %vm2609, %v2585, 0
      %v2653 = vsel %vm2609, %v2586, 0
      %v2656 = vsel %vm2609, %v2587, 0
      %v2659 = vsel %vm2609, %v2588, 0
      %v2662 = vsel %vm2609, %v2589, 0
      %v2665 = vsel %vm2609, %v2590, 0
      %v2668 = vsel %vm2609, %v2591, 0
      %v2671 = vsel %vm2609, %v2592, 0
      %v2674 = vsel %vm2609, %v2593, 0
      %v2677 = vsel %vm2609, %v2594, 0
      %v2680 = vsel %vm2609, %v2595, 0
      %v2683 = vsel %vm2609, %v2596, 0
      %v2686 = vsel %vm2609, %v2597, 0
      %v2689 = vsel %vm2609, %v2598, 0
      %v2692 = vsel %vm2609, %v2599, 0
      %v2695 = vsel %vm2609, %v2600, 0
      %v2698 = vsel %vm2609, %v2601, 0
      %v2701 = vsel %vm2609, %v2602, 0
      %v2704 = vsel %vm2609, %v2603, 0
      %v2707 = vsel %vm409, %v2608, 0
      %2709 = vmatprep.subr.mxu0 0.0
      %2710 = vmatpush1.msra.mxu0 %v2604
      %2711 = vmatprep.subr.mxu0 0.0
      %2712 = vmatpush1.msra.mxu0 %v2605
      %2713 = vmatprep.subr.mxu0 0.0
      %2714 = vmatpush1.msra.mxu0 %v2606
      %2715 = vmatprep.subr.mxu0 0.0
      %2716 = vmatpush1.msra.mxu0 %v2607
      %2717 = vmatprep.subr.mxu0 0.0
      %2718 = vmatpush1.msra.mxu0 %v2707
      %2719 = vmatprep.subr.mxu0 0.0
      %2720 = vmatpush1.msra.mxu0 0.0
      %2721 = vmatprep.subr.mxu0 0.0
      %2722 = vmatpush1.msra.mxu0 0.0
      %2723 = vmatprep.subr.mxu0 0.0
      %2724 = vmatpush1.msra.mxu0 0.0
      %2725 = vmatprep.subr.mxu0 0.0
      %2726 = vmatpush1.msra.mxu0 0.0
      %2727 = vmatprep.subr.mxu0 0.0
      %2728 = vmatpush1.msra.mxu0 0.0
      %2729 = vmatprep.subr.mxu0 0.0
      %2730 = vmatpush1.msra.mxu0 0.0
      %2731 = vmatprep.subr.mxu0 0.0
      %2732 = vmatpush1.msra.mxu0 0.0
      %2733 = vmatprep.subr.mxu0 0.0
      %2734 = vmatpush1.msra.mxu0 0.0
      %2735 = vmatprep.subr.mxu0 0.0
      %2736 = vmatpush1.msra.mxu0 0.0
      %2737 = vmatprep.subr.mxu0 0.0
      %2738 = vmatpush1.msra.mxu0 0.0
      %2739 = vmatprep.subr.mxu0 0.0
      %2740 = vmatpush1.msra.mxu0 0.0
      %2741 = vmatprep.subr.mxu0 0.0
      %2742 = vmatpush1.msra.mxu0 0.0
      %2743 = vmatprep.subr.mxu0 0.0
      %2744 = vmatpush1.msra.mxu0 0.0
      %2745 = vmatprep.subr.mxu0 0.0
      %2746 = vmatpush1.msra.mxu0 0.0
      %2747 = vmatprep.subr.mxu0 0.0
      %2748 = vmatpush1.msra.mxu0 0.0
      %2749 = vmatprep.subr.mxu0 0.0
      %2750 = vmatpush1.msra.mxu0 0.0
      %2751 = vmatprep.subr.mxu0 0.0
      %2752 = vmatpush1.msra.mxu0 0.0
      %2753 = vmatprep.subr.mxu0 0.0
      %2754 = vmatpush1.msra.mxu0 0.0
      %2755 = vmatprep.subr.mxu0 0.0
      %2756 = vmatpush1.msra.mxu0 0.0
      %2757 = vmatprep.subr.mxu0 0.0
      %2758 = vmatpush1.msra.mxu0 0.0
      %2759 = vmatprep.subr.mxu0 0.0
      %2760 = vmatpush1.msra.mxu0 0.0
      %2761 = vmatprep.subr.mxu0 0.0
      %2762 = vmatpush1.msra.mxu0 0.0
      %2763 = vmatprep.subr.mxu0 0.0
      %2764 = vmatpush1.msra.mxu0 0.0
      %2765 = vmatprep.subr.mxu0 0.0
      %2766 = vmatpush1.msra.mxu0 0.0
      %2767 = vmatprep.subr.mxu0 0.0
      %2768 = vmatpush1.msra.mxu0 0.0
      %2769 = vmatprep.subr.mxu0 0.0
      %2770 = vmatpush1.msra.mxu0 0.0
      %2771 = vmatprep.subr.mxu0 0.0
      %2772 = vmatpush1.msra.mxu0 0.0
      %2773 = vmatprep.mubr.f32.mxu0 0.0
      %2774 = vmatmul.mubr.f32.gmra.mrb[0].mxu0 %v2611
      %v2775 = vpop.f32.mrb[0].mxu0
      %v2776 = vadd.f32 0.0, %v2775
      %v2777 = vpop.f32.mrb[0].mxu0
      %2778 = vmatprep.mubr.f32.mxu0 0.0
      %2779 = vmatmul.mubr.f32.gmra.mrb[0].mxu0 %v2614
      %v2780 = vpop.f32.mrb[0].mxu0
      %v2781 = vadd.f32 0.0, %v2780
      %v2782 = vpop.f32.mrb[0].mxu0
      %2783 = vmatprep.mubr.f32.mxu0 0.0
      %2784 = vmatmul.mubr.f32.gmra.mrb[0].mxu0 %v2617
      %v2785 = vpop.f32.mrb[0].mxu0
      %v2786 = vadd.f32 0.0, %v2785
      %v2787 = vpop.f32.mrb[0].mxu0
      %2788 = vmatprep.mubr.f32.mxu0 0.0
      %2789 = vmatmul.mubr.f32.gmra.mrb[0].mxu0 %v2620
      %v2790 = vpop.f32.mrb[0].mxu0
      %v2791 = vadd.f32 0.0, %v2790
      %v2792 = vpop.f32.mrb[0].mxu0
      %2793 = vmatprep.mubr.f32.mxu0 0.0
      %2794 = vmatmul.mubr.f32.gmra.mrb[0].mxu0 %v2623
      %v2795 = vpop.f32.mrb[0].mxu0
      %v2796 = vadd.f32 0.0, %v2795
      %v2797 = vpop.f32.mrb[0].mxu0
      %2798 = vmatprep.mubr.f32.mxu0 0.0
      %2799 = vmatmul.mubr.f32.gmra.mrb[0].mxu0 %v2626
      %v2800 = vpop.f32.mrb[0].mxu0
      %v2801 = vadd.f32 0.0, %v2800
      %v2802 = vpop.f32.mrb[0].mxu0
      %2803 = vmatprep.mubr.f32.mxu0 0.0
      %2804 = vmatmul.mubr.f32.gmra.mrb[0].mxu0 %v2629
      %v2805 = vpop.f32.mrb[0].mxu0
      %v2806 = vadd.f32 0.0, %v2805
      %v2807 = vpop.f32.mrb[0].mxu0
      %2808 = vmatprep.mubr.f32.mxu0 0.0
      %2809 = vmatmul.mubr.f32.gmra.mrb[0].mxu0 %v2632
      %v2810 = vpop.f32.mrb[0].mxu0
      %v2811 = vadd.f32 0.0, %v2810
      %v2812 = vpop.f32.mrb[0].mxu0
      %2813 = vmatprep.mubr.f32.mxu0 0.0
      %2814 = vmatmul.mubr.f32.gmra.mrb[0].mxu0 %v2635
      %v2815 = vpop.f32.mrb[0].mxu0
      %v2816 = vadd.f32 0.0, %v2815
      %v2817 = vpop.f32.mrb[0].mxu0
      %2818 = vmatprep.mubr.f32.mxu0 0.0
      %2819 = vmatmul.mubr.f32.gmra.mrb[0].mxu0 %v2638
      %v2820 = vpop.f32.mrb[0].mxu0
      %v2821 = vadd.f32 0.0, %v2820
      %v2822 = vpop.f32.mrb[0].mxu0
      %2823 = vmatprep.mubr.f32.mxu0 0.0
      %2824 = vmatmul.mubr.f32.gmra.mrb[0].mxu0 %v2641
      %v2825 = vpop.f32.mrb[0].mxu0
      %v2826 = vadd.f32 0.0, %v2825
      %v2827 = vpop.f32.mrb[0].mxu0
      %2828 = vmatprep.mubr.f32.mxu0 0.0
      %2829 = vmatmul.mubr.f32.gmra.mrb[0].mxu0 %v2644
      %v2830 = vpop.f32.mrb[0].mxu0
      %v2831 = vadd.f32 0.0, %v2830
      %v2832 = vpop.f32.mrb[0].mxu0
      %2833 = vmatprep.mubr.f32.mxu0 0.0
      %2834 = vmatmul.mubr.f32.gmra.mrb[0].mxu0 %v2647
      %v2835 = vpop.f32.mrb[0].mxu0
      %v2836 = vadd.f32 0.0, %v2835
      %v2837 = vpop.f32.mrb[0].mxu0
      %2838 = vmatprep.mubr.f32.mxu0 0.0
      %2839 = vmatmul.mubr.f32.gmra.mrb[0].mxu0 %v2650
      %v2840 = vpop.f32.mrb[0].mxu0
      %v2841 = vadd.f32 0.0, %v2840
      %v2842 = vpop.f32.mrb[0].mxu0
      %2843 = vmatprep.mubr.f32.mxu0 0.0
      %2844 = vmatmul.mubr.f32.gmra.mrb[0].mxu0 %v2653
      %v2845 = vpop.f32.mrb[0].mxu0
      %v2846 = vadd.f32 0.0, %v2845
      %v2847 = vpop.f32.mrb[0].mxu0
      %2848 = vmatprep.mubr.f32.mxu0 0.0
      %2849 = vmatmul.mubr.f32.gmra.mrb[0].mxu0 %v2656
      %v2850 = vpop.f32.mrb[0].mxu0
      %v2851 = vadd.f32 0.0, %v2850
      %v2852 = vpop.f32.mrb[0].mxu0
      %2853 = vmatprep.mubr.f32.mxu0 0.0
      %2854 = vmatmul.mubr.f32.gmra.mrb[0].mxu0 %v2659
      %v2855 = vpop.f32.mrb[0].mxu0
      %v2856 = vadd.f32 0.0, %v2855
      %v2857 = vpop.f32.mrb[0].mxu0
      %2858 = vmatprep.mubr.f32.mxu0 0.0
      %2859 = vmatmul.mubr.f32.gmra.mrb[0].mxu0 %v2662
      %v2860 = vpop.f32.mrb[0].mxu0
      %v2861 = vadd.f32 0.0, %v2860
      %v2862 = vpop.f32.mrb[0].mxu0
      %2863 = vmatprep.mubr.f32.mxu0 0.0
      %2864 = vmatmul.mubr.f32.gmra.mrb[0].mxu0 %v2665
      %v2865 = vpop.f32.mrb[0].mxu0
      %v2866 = vadd.f32 0.0, %v2865
      %v2867 = vpop.f32.mrb[0].mxu0
      %2868 = vmatprep.mubr.f32.mxu0 0.0
      %2869 = vmatmul.mubr.f32.gmra.mrb[0].mxu0 %v2668
      %v2870 = vpop.f32.mrb[0].mxu0
      %v2871 = vadd.f32 0.0, %v2870
      %v2872 = vpop.f32.mrb[0].mxu0
      %2873 = vmatprep.mubr.f32.mxu0 0.0
      %2874 = vmatmul.mubr.f32.gmra.mrb[0].mxu0 %v2671
      %v2875 = vpop.f32.mrb[0].mxu0
      %v2876 = vadd.f32 0.0, %v2875
      %v2877 = vpop.f32.mrb[0].mxu0
      %2878 = vmatprep.mubr.f32.mxu0 0.0
      %2879 = vmatmul.mubr.f32.gmra.mrb[0].mxu0 %v2674
      %v2880 = vpop.f32.mrb[0].mxu0
      %v2881 = vadd.f32 0.0, %v2880
      %v2882 = vpop.f32.mrb[0].mxu0
      %2883 = vmatprep.mubr.f32.mxu0 0.0
      %2884 = vmatmul.mubr.f32.gmra.mrb[0].mxu0 %v2677
      %v2885 = vpop.f32.mrb[0].mxu0
      %v2886 = vadd.f32 0.0, %v2885
      %v2887 = vpop.f32.mrb[0].mxu0
      %2888 = vmatprep.mubr.f32.mxu0 0.0
      %2889 = vmatmul.mubr.f32.gmra.mrb[0].mxu0 %v2680
      %v2890 = vpop.f32.mrb[0].mxu0
      %v2891 = vadd.f32 0.0, %v2890
      %v2892 = vpop.f32.mrb[0].mxu0
      %2893 = vmatprep.mubr.f32.mxu0 0.0
      %2894 = vmatmul.mubr.f32.gmra.mrb[0].mxu0 %v2683
      %v2895 = vpop.f32.mrb[0].mxu0
      %v2896 = vadd.f32 0.0, %v2895
      %v2897 = vpop.f32.mrb[0].mxu0
      %2898 = vmatprep.mubr.f32.mxu0 0.0
      %2899 = vmatmul.mubr.f32.gmra.mrb[0].mxu0 %v2686
      %v2900 = vpop.f32.mrb[0].mxu0
      %v2901 = vadd.f32 0.0, %v2900
      %v2902 = vpop.f32.mrb[0].mxu0
      %2903 = vmatprep.mubr.f32.mxu0 0.0
      %2904 = vmatmul.mubr.f32.gmra.mrb[0].mxu0 %v2689
      %v2905 = vpop.f32.mrb[0].mxu0
      %v2906 = vadd.f32 0.0, %v2905
      %v2907 = vpop.f32.mrb[0].mxu0
      %2908 = vmatprep.mubr.f32.mxu0 0.0
      %2909 = vmatmul.mubr.f32.gmra.mrb[0].mxu0 %v2692
      %v2910 = vpop.f32.mrb[0].mxu0
      %v2911 = vadd.f32 0.0, %v2910
      %v2912 = vpop.f32.mrb[0].mxu0
      %2913 = vmatprep.mubr.f32.mxu0 0.0
      %2914 = vmatmul.mubr.f32.gmra.mrb[0].mxu0 %v2695
      %v2915 = vpop.f32.mrb[0].mxu0
      %v2916 = vadd.f32 0.0, %v2915
      %v2917 = vpop.f32.mrb[0].mxu0
      %2918 = vmatprep.mubr.f32.mxu0 0.0
      %2919 = vmatmul.mubr.f32.gmra.mrb[0].mxu0 %v2698
      %v2920 = vpop.f32.mrb[0].mxu0
      %v2921 = vadd.f32 0.0, %v2920
      %v2922 = vpop.f32.mrb[0].mxu0
      %2923 = vmatprep.mubr.f32.mxu0 0.0
      %2924 = vmatmul.mubr.f32.gmra.mrb[0].mxu0 %v2701
      %v2925 = vpop.f32.mrb[0].mxu0
      %v2926 = vadd.f32 0.0, %v2925
      %v2927 = vpop.f32.mrb[0].mxu0
      %2928 = vmatprep.mubr.f32.mxu0 0.0
      %2929 = vmatmul.mubr.f32.gmra.mrb[0].mxu0 %v2704
      %v2930 = vpop.f32.mrb[0].mxu0
      %v2931 = vadd.f32 0.0, %v2930
      %v2932 = vpop.f32.mrb[0].mxu0
      %2933 = vdwg.mxu0
      %v2934 = vld [vmem:[%s5] sm:$0x1]
      %v2936 = vlaneseq
      %v2937 = vshrl.u32 %v2936, 7
      %v2938 = vsub.s32 0, %v2937
      %v2939 = vrot.slane %v2934, %v2938
      %v2941 = vmul.f32 %v2776, %v2939
      %v2942 = vmul.f32 %v2781, %v2939
      %v2943 = vmul.f32 %v2786, %v2939
      %v2944 = vmul.f32 %v2791, %v2939
      %v2945 = vmul.f32 %v2796, %v2939
      %v2946 = vmul.f32 %v2801, %v2939
      %v2947 = vmul.f32 %v2806, %v2939
      %v2948 = vmul.f32 %v2811, %v2939
      %v2949 = vmul.f32 %v2816, %v2939
      %v2950 = vmul.f32 %v2821, %v2939
      %v2951 = vmul.f32 %v2826, %v2939
      %v2952 = vmul.f32 %v2831, %v2939
      %v2953 = vmul.f32 %v2836, %v2939
      %v2954 = vmul.f32 %v2841, %v2939
      %v2955 = vmul.f32 %v2846, %v2939
      %v2956 = vmul.f32 %v2851, %v2939
      %v2957 = vmul.f32 %v2856, %v2939
      %v2958 = vmul.f32 %v2861, %v2939
      %v2959 = vmul.f32 %v2866, %v2939
      %v2960 = vmul.f32 %v2871, %v2939
      %v2961 = vmul.f32 %v2876, %v2939
      %v2962 = vmul.f32 %v2881, %v2939
      %v2963 = vmul.f32 %v2886, %v2939
      %v2964 = vmul.f32 %v2891, %v2939
      %v2965 = vmul.f32 %v2896, %v2939
      %v2966 = vmul.f32 %v2901, %v2939
      %v2967 = vmul.f32 %v2906, %v2939
      %v2968 = vmul.f32 %v2911, %v2939
      %v2969 = vmul.f32 %v2916, %v2939
      %v2970 = vmul.f32 %v2921, %v2939
      %v2971 = vmul.f32 %v2926, %v2939
      %v2972 = vmul.f32 %v2931, %v2939
      %v2973 = vld [vmem:[%s6] sm:$0x1]
      %v2975 = vlaneseq
      %v2976 = vshrl.u32 %v2975, 7
      %v2977 = vsub.s32 0, %v2976
      %v2978 = vrot.slane %v2973, %v2977
      %v2980 = vadd.f32 %v2941, %v2978
      %v2981 = vadd.f32 %v2942, %v2978
      %v2982 = vadd.f32 %v2943, %v2978
      %v2983 = vadd.f32 %v2944, %v2978
      %v2984 = vadd.f32 %v2945, %v2978
      %v2985 = vadd.f32 %v2946, %v2978
      %v2986 = vadd.f32 %v2947, %v2978
      %v2987 = vadd.f32 %v2948, %v2978
      %v2988 = vadd.f32 %v2949, %v2978
      %v2989 = vadd.f32 %v2950, %v2978
      %v2990 = vadd.f32 %v2951, %v2978
      %v2991 = vadd.f32 %v2952, %v2978
      %v2992 = vadd.f32 %v2953, %v2978
      %v2993 = vadd.f32 %v2954, %v2978
      %v2994 = vadd.f32 %v2955, %v2978
      %v2995 = vadd.f32 %v2956, %v2978
      %v2996 = vadd.f32 %v2957, %v2978
      %v2997 = vadd.f32 %v2958, %v2978
      %v2998 = vadd.f32 %v2959, %v2978
      %v2999 = vadd.f32 %v2960, %v2978
      %v3000 = vadd.f32 %v2961, %v2978
      %v3001 = vadd.f32 %v2962, %v2978
      %v3002 = vadd.f32 %v2963, %v2978
      %v3003 = vadd.f32 %v2964, %v2978
      %v3004 = vadd.f32 %v2965, %v2978
      %v3005 = vadd.f32 %v2966, %v2978
      %v3006 = vadd.f32 %v2967, %v2978
      %v3007 = vadd.f32 %v2968, %v2978
      %v3008 = vadd.f32 %v2969, %v2978
      %v3009 = vadd.f32 %v2970, %v2978
      %v3010 = vadd.f32 %v2971, %v2978
      %v3011 = vadd.f32 %v2972, %v2978
      %v3012 = vxor.u32 %v2980, 2147483648
      %v3013 = vxor.u32 %v2981, 2147483648
      %v3014 = vxor.u32 %v2982, 2147483648
      %v3015 = vxor.u32 %v2983, 2147483648
      %v3016 = vxor.u32 %v2984, 2147483648
      %v3017 = vxor.u32 %v2985, 2147483648
      %v3018 = vxor.u32 %v2986, 2147483648
      %v3019 = vxor.u32 %v2987, 2147483648
      %v3020 = vxor.u32 %v2988, 2147483648
      %v3021 = vxor.u32 %v2989, 2147483648
      %v3022 = vxor.u32 %v2990, 2147483648
      %v3023 = vxor.u32 %v2991, 2147483648
      %v3024 = vxor.u32 %v2992, 2147483648
      %v3025 = vxor.u32 %v2993, 2147483648
      %v3026 = vxor.u32 %v2994, 2147483648
      %v3027 = vxor.u32 %v2995, 2147483648
      %v3028 = vxor.u32 %v2996, 2147483648
      %v3029 = vxor.u32 %v2997, 2147483648
      %v3030 = vxor.u32 %v2998, 2147483648
      %v3031 = vxor.u32 %v2999, 2147483648
      %v3032 = vxor.u32 %v3000, 2147483648
      %v3033 = vxor.u32 %v3001, 2147483648
      %v3034 = vxor.u32 %v3002, 2147483648
      %v3035 = vxor.u32 %v3003, 2147483648
      %v3036 = vxor.u32 %v3004, 2147483648
      %v3037 = vxor.u32 %v3005, 2147483648
      %v3038 = vxor.u32 %v3006, 2147483648
      %v3039 = vxor.u32 %v3007, 2147483648
      %v3040 = vxor.u32 %v3008, 2147483648
      %v3041 = vxor.u32 %v3009, 2147483648
      %v3042 = vxor.u32 %v3010, 2147483648
      %v3043 = vxor.u32 %v3011, 2147483648
      %v3044 = vmul.f32 %v3012, 1.442695
      %v3045 = vpow.pop %v3044
      %v3046 = vmul.f32 %v3013, 1.442695
      %v3047 = vpow.pop %v3046
      %v3048 = vmul.f32 %v3014, 1.442695
      %v3049 = vpow.pop %v3048
      %v3050 = vmul.f32 %v3015, 1.442695
      %v3051 = vpow.pop %v3050
      %v3052 = vmul.f32 %v3016, 1.442695
      %v3053 = vpow.pop %v3052
      %v3054 = vmul.f32 %v3017, 1.442695
      %v3055 = vpow.pop %v3054
      %v3056 = vmul.f32 %v3018, 1.442695
      %v3057 = vpow.pop %v3056
      %v3058 = vmul.f32 %v3019, 1.442695
      %v3059 = vpow.pop %v3058
      %v3060 = vmul.f32 %v3020, 1.442695
      %v3061 = vpow.pop %v3060
      %v3062 = vmul.f32 %v3021, 1.442695
      %v3063 = vpow.pop %v3062
      %v3064 = vmul.f32 %v3022, 1.442695
      %v3065 = vpow.pop %v3064
      %v3066 = vmul.f32 %v3023, 1.442695
      %v3067 = vpow.pop %v3066
      %v3068 = vmul.f32 %v3024, 1.442695
      %v3069 = vpow.pop %v3068
      %v3070 = vmul.f32 %v3025, 1.442695
      %v3071 = vpow.pop %v3070
      %v3072 = vmul.f32 %v3026, 1.442695
      %v3073 = vpow.pop %v3072
      %v3074 = vmul.f32 %v3027, 1.442695
      %v3075 = vpow.pop %v3074
      %v3076 = vmul.f32 %v3028, 1.442695
      %v3077 = vpow.pop %v3076
      %v3078 = vmul.f32 %v3029, 1.442695
      %v3079 = vpow.pop %v3078
      %v3080 = vmul.f32 %v3030, 1.442695
      %v3081 = vpow.pop %v3080
      %v3082 = vmul.f32 %v3031, 1.442695
      %v3083 = vpow.pop %v3082
      %v3084 = vmul.f32 %v3032, 1.442695
      %v3085 = vpow.pop %v3084
      %v3086 = vmul.f32 %v3033, 1.442695
      %v3087 = vpow.pop %v3086
      %v3088 = vmul.f32 %v3034, 1.442695
      %v3089 = vpow.pop %v3088
      %v3090 = vmul.f32 %v3035, 1.442695
      %v3091 = vpow.pop %v3090
      %v3092 = vmul.f32 %v3036, 1.442695
      %v3093 = vpow.pop %v3092
      %v3094 = vmul.f32 %v3037, 1.442695
      %v3095 = vpow.pop %v3094
      %v3096 = vmul.f32 %v3038, 1.442695
      %v3097 = vpow.pop %v3096
      %v3098 = vmul.f32 %v3039, 1.442695
      %v3099 = vpow.pop %v3098
      %v3100 = vmul.f32 %v3040, 1.442695
      %v3101 = vpow.pop %v3100
      %v3102 = vmul.f32 %v3041, 1.442695
      %v3103 = vpow.pop %v3102
      %v3104 = vmul.f32 %v3042, 1.442695
      %v3105 = vpow.pop %v3104
      %v3106 = vmul.f32 %v3043, 1.442695
      %v3107 = vpow.pop %v3106
      %v3108 = vadd.f32 %v3045, 1.0
      %v3109 = vadd.f32 %v3047, 1.0
      %v3110 = vadd.f32 %v3049, 1.0
      %v3111 = vadd.f32 %v3051, 1.0
      %v3112 = vadd.f32 %v3053, 1.0
      %v3113 = vadd.f32 %v3055, 1.0
      %v3114 = vadd.f32 %v3057, 1.0
      %v3115 = vadd.f32 %v3059, 1.0
      %v3116 = vadd.f32 %v3061, 1.0
      %v3117 = vadd.f32 %v3063, 1.0
      %v3118 = vadd.f32 %v3065, 1.0
      %v3119 = vadd.f32 %v3067, 1.0
      %v3120 = vadd.f32 %v3069, 1.0
      %v3121 = vadd.f32 %v3071, 1.0
      %v3122 = vadd.f32 %v3073, 1.0
      %v3123 = vadd.f32 %v3075, 1.0
      %v3124 = vadd.f32 %v3077, 1.0
      %v3125 = vadd.f32 %v3079, 1.0
      %v3126 = vadd.f32 %v3081, 1.0
      %v3127 = vadd.f32 %v3083, 1.0
      %v3128 = vadd.f32 %v3085, 1.0
      %v3129 = vadd.f32 %v3087, 1.0
      %v3130 = vadd.f32 %v3089, 1.0
      %v3131 = vadd.f32 %v3091, 1.0
      %v3132 = vadd.f32 %v3093, 1.0
      %v3133 = vadd.f32 %v3095, 1.0
      %v3134 = vadd.f32 %v3097, 1.0
      %v3135 = vadd.f32 %v3099, 1.0
      %v3136 = vadd.f32 %v3101, 1.0
      %v3137 = vadd.f32 %v3103, 1.0
      %v3138 = vadd.f32 %v3105, 1.0
      %v3139 = vadd.f32 %v3107, 1.0
      %v3140 = vrcp.pop %v3108
      %v3141 = vmul.f32 1.0, %v3140
      %v3142 = vrcp.pop %v3109
      %v3143 = vmul.f32 1.0, %v3142
      %v3144 = vrcp.pop %v3110
      %v3145 = vmul.f32 1.0, %v3144
      %v3146 = vrcp.pop %v3111
      %v3147 = vmul.f32 1.0, %v3146
      %v3148 = vrcp.pop %v3112
      %v3149 = vmul.f32 1.0, %v3148
      %v3150 = vrcp.pop %v3113
      %v3151 = vmul.f32 1.0, %v3150
      %v3152 = vrcp.pop %v3114
      %v3153 = vmul.f32 1.0, %v3152
      %v3154 = vrcp.pop %v3115
      %v3155 = vmul.f32 1.0, %v3154
      %v3156 = vrcp.pop %v3116
      %v3157 = vmul.f32 1.0, %v3156
      %v3158 = vrcp.pop %v3117
      %v3159 = vmul.f32 1.0, %v3158
      %v3160 = vrcp.pop %v3118
      %v3161 = vmul.f32 1.0, %v3160
      %v3162 = vrcp.pop %v3119
      %v3163 = vmul.f32 1.0, %v3162
      %v3164 = vrcp.pop %v3120
      %v3165 = vmul.f32 1.0, %v3164
      %v3166 = vrcp.pop %v3121
      %v3167 = vmul.f32 1.0, %v3166
      %v3168 = vrcp.pop %v3122
      %v3169 = vmul.f32 1.0, %v3168
      %v3170 = vrcp.pop %v3123
      %v3171 = vmul.f32 1.0, %v3170
      %v3172 = vrcp.pop %v3124
      %v3173 = vmul.f32 1.0, %v3172
      %v3174 = vrcp.pop %v3125
      %v3175 = vmul.f32 1.0, %v3174
      %v3176 = vrcp.pop %v3126
      %v3177 = vmul.f32 1.0, %v3176
      %v3178 = vrcp.pop %v3127
      %v3179 = vmul.f32 1.0, %v3178
      %v3180 = vrcp.pop %v3128
      %v3181 = vmul.f32 1.0, %v3180
      %v3182 = vrcp.pop %v3129
      %v3183 = vmul.f32 1.0, %v3182
      %v3184 = vrcp.pop %v3130
      %v3185 = vmul.f32 1.0, %v3184
      %v3186 = vrcp.pop %v3131
      %v3187 = vmul.f32 1.0, %v3186
      %v3188 = vrcp.pop %v3132
      %v3189 = vmul.f32 1.0, %v3188
      %v3190 = vrcp.pop %v3133
      %v3191 = vmul.f32 1.0, %v3190
      %v3192 = vrcp.pop %v3134
      %v3193 = vmul.f32 1.0, %v3192
      %v3194 = vrcp.pop %v3135
      %v3195 = vmul.f32 1.0, %v3194
      %v3196 = vrcp.pop %v3136
      %v3197 = vmul.f32 1.0, %v3196
      %v3198 = vrcp.pop %v3137
      %v3199 = vmul.f32 1.0, %v3198
      %v3200 = vrcp.pop %v3138
      %v3201 = vmul.f32 1.0, %v3200
      %v3202 = vrcp.pop %v3139
      %v3203 = vmul.f32 1.0, %v3202
      %v3204 = vmul.f32 %v2980, %v3141
      %v3205 = vmul.f32 %v2981, %v3143
      %v3206 = vmul.f32 %v2982, %v3145
      %v3207 = vmul.f32 %v2983, %v3147
      %v3208 = vmul.f32 %v2984, %v3149
      %v3209 = vmul.f32 %v2985, %v3151
      %v3210 = vmul.f32 %v2986, %v3153
      %v3211 = vmul.f32 %v2987, %v3155
      %v3212 = vmul.f32 %v2988, %v3157
      %v3213 = vmul.f32 %v2989, %v3159
      %v3214 = vmul.f32 %v2990, %v3161
      %v3215 = vmul.f32 %v2991, %v3163
      %v3216 = vmul.f32 %v2992, %v3165
      %v3217 = vmul.f32 %v2993, %v3167
      %v3218 = vmul.f32 %v2994, %v3169
      %v3219 = vmul.f32 %v2995, %v3171
      %v3220 = vmul.f32 %v2996, %v3173
      %v3221 = vmul.f32 %v2997, %v3175
      %v3222 = vmul.f32 %v2998, %v3177
      %v3223 = vmul.f32 %v2999, %v3179
      %v3224 = vmul.f32 %v3000, %v3181
      %v3225 = vmul.f32 %v3001, %v3183
      %v3226 = vmul.f32 %v3002, %v3185
      %v3227 = vmul.f32 %v3003, %v3187
      %v3228 = vmul.f32 %v3004, %v3189
      %v3229 = vmul.f32 %v3005, %v3191
      %v3230 = vmul.f32 %v3006, %v3193
      %v3231 = vmul.f32 %v3007, %v3195
      %v3232 = vmul.f32 %v3008, %v3197
      %v3233 = vmul.f32 %v3009, %v3199
      %v3234 = vmul.f32 %v3010, %v3201
      %v3235 = vmul.f32 %v3011, %v3203
      %v3236 = vadd.f32 %v3204, %v279
      %v3237 = vadd.f32 %v3205, %v280
      %v3238 = vadd.f32 %v3206, %v281
      %v3239 = vadd.f32 %v3207, %v282
      %v3240 = vadd.f32 %v3208, %v283
      %v3241 = vadd.f32 %v3209, %v284
      %v3242 = vadd.f32 %v3210, %v285
      %v3243 = vadd.f32 %v3211, %v286
      %v3244 = vadd.f32 %v3212, %v287
      %v3245 = vadd.f32 %v3213, %v288
      %v3246 = vadd.f32 %v3214, %v289
      %v3247 = vadd.f32 %v3215, %v290
      %v3248 = vadd.f32 %v3216, %v291
      %v3249 = vadd.f32 %v3217, %v292
      %v3250 = vadd.f32 %v3218, %v293
      %v3251 = vadd.f32 %v3219, %v294
      %v3252 = vadd.f32 %v3220, %v295
      %v3253 = vadd.f32 %v3221, %v296
      %v3254 = vadd.f32 %v3222, %v297
      %v3255 = vadd.f32 %v3223, %v298
      %v3256 = vadd.f32 %v3224, %v299
      %v3257 = vadd.f32 %v3225, %v300
      %v3258 = vadd.f32 %v3226, %v301
      %v3259 = vadd.f32 %v3227, %v302
      %v3260 = vadd.f32 %v3228, %v303
      %v3261 = vadd.f32 %v3229, %v304
      %v3262 = vadd.f32 %v3230, %v305
      %v3263 = vadd.f32 %v3231, %v306
      %v3264 = vadd.f32 %v3232, %v307
      %v3265 = vadd.f32 %v3233, %v308
      %v3266 = vadd.f32 %v3234, %v309
      %v3267 = vadd.f32 %v3235, %v310
      %3268 = vst.msk [vmem:[%s278] sm:$0xff] %vm312, %v3236
      %3269 = vst.msk [vmem:[%s278 + $0x8] sm:$0xff] %vm312, %v3237
      %3270 = vst.msk [vmem:[%s278 + $0x10] sm:$0xff] %vm312, %v3238
      %3271 = vst.msk [vmem:[%s278 + $0x18] sm:$0xff] %vm312, %v3239
      %3272 = vst.msk [vmem:[%s278 + $0x20] sm:$0xff] %vm312, %v3240
      %3273 = vst.msk [vmem:[%s278 + $0x28] sm:$0xff] %vm312, %v3241
      %3274 = vst.msk [vmem:[%s278 + $0x30] sm:$0xff] %vm312, %v3242
      %3275 = vst.msk [vmem:[%s278 + $0x38] sm:$0xff] %vm312, %v3243
      %3276 = vst.msk [vmem:[%s278 + $0x40] sm:$0xff] %vm312, %v3244
      %3277 = vst.msk [vmem:[%s278 + $0x48] sm:$0xff] %vm312, %v3245
      %3278 = vst.msk [vmem:[%s278 + $0x50] sm:$0xff] %vm312, %v3246
      %3279 = vst.msk [vmem:[%s278 + $0x58] sm:$0xff] %vm312, %v3247
      %3280 = vst.msk [vmem:[%s278 + $0x60] sm:$0xff] %vm312, %v3248
      %3281 = vst.msk [vmem:[%s278 + $0x68] sm:$0xff] %vm312, %v3249
      %3282 = vst.msk [vmem:[%s278 + $0x70] sm:$0xff] %vm312, %v3250
      %3283 = vst.msk [vmem:[%s278 + $0x78] sm:$0xff] %vm312, %v3251
      %3284 = vst.msk [vmem:[%s278 + $0x80] sm:$0xff] %vm312, %v3252
      %3285 = vst.msk [vmem:[%s278 + $0x88] sm:$0xff] %vm312, %v3253
      %3286 = vst.msk [vmem:[%s278 + $0x90] sm:$0xff] %vm312, %v3254
      %3287 = vst.msk [vmem:[%s278 + $0x98] sm:$0xff] %vm312, %v3255
      %3288 = vst.msk [vmem:[%s278 + $0xa0] sm:$0xff] %vm312, %v3256
      %3289 = vst.msk [vmem:[%s278 + $0xa8] sm:$0xff] %vm312, %v3257
      %3290 = vst.msk [vmem:[%s278 + $0xb0] sm:$0xff] %vm312, %v3258
      %3291 = vst.msk [vmem:[%s278 + $0xb8] sm:$0xff] %vm312, %v3259
      %3292 = vst.msk [vmem:[%s278 + $0xc0] sm:$0xff] %vm312, %v3260
      %3293 = vst.msk [vmem:[%s278 + $0xc8] sm:$0xff] %vm312, %v3261
      %3294 = vst.msk [vmem:[%s278 + $0xd0] sm:$0xff] %vm312, %v3262
      %3295 = vst.msk [vmem:[%s278 + $0xd8] sm:$0xff] %vm312, %v3263
      %3296 = vst.msk [vmem:[%s278 + $0xe0] sm:$0xff] %vm312, %v3264
      %3297 = vst.msk [vmem:[%s278 + $0xe8] sm:$0xff] %vm312, %v3265
      %3298 = vst.msk [vmem:[%s278 + $0xf0] sm:$0xff] %vm312, %v3266
      %3299 = vst.msk [vmem:[%s278 + $0xf8] sm:$0xff] %vm312, %v3267
      %p3300 = scmp.lt.s32.totalorder %s18, 1
      %s3301 = scalar_select %p3300, %s18, 1
      %s3302 = smul.addr %s3301, 32
      %s3303 = smul.addr %s3302, 8
      %s3304 = scalar_lea.vmem %s7, %s3303
      // Predicated region
      $region49: #{_lambda_.4} parent=47 // pred_check
        %p3305 = pneg %p188
      $region50: #{_lambda_.4} parent=47 // pred_check_branch
        %3307 = sbr.rel (%p3305) target = $region52
      $region51: #{_lambda_.4} parent=47 // pred_region
        _
      $region52: #{_lambda_.4} parent=47 // pred_fallthru
        _
    $region48: #{_lambda_.4} parent=5 // pred_fallthru
      _
    %p3308 = scmp.le.s32.totalorder 2, %s13
    // Predicated region
    $region53: #{_lambda_.4} parent=5 // pred_check
      %p3309 = pneg %p3308
    $region54: #{_lambda_.4} parent=5 // pred_check_branch
      %3311 = sbr.rel (%p3309) target = $region56
    $region55: #{_lambda_.4} parent=5 // pred_region
      %s3312 = ssub.s32 %s13, 2
      // Predicated region
      $region57: #{_lambda_.4} parent=55 // pred_check
        %p3313 = pneg %p194
      $region58: #{_lambda_.4} parent=55 // pred_check_branch
        %3315 = sbr.rel (%p3313) target = $region60
      $region59: #{_lambda_.4} parent=55 // pred_region
        %p3316 = scmp.lt.s32.totalorder %s19, 1
        %s3317 = scalar_select %p3316, %s19, 1
        %s3318 = smul.addr %s3317, 32
        %s3319 = smul.addr %s3318, 8
        %s3320 = scalar_lea.vmem %s7, %s3319
      $region60: #{_lambda_.4} parent=55 // pred_fallthru
        _
    $region56: #{_lambda_.4} parent=5 // pred_fallthru
      _
  $region6: #{_lambda_.4} parent=0 // loop_footer
    %s17 = sadd.s32 1, %s13
  $region7: #{_lambda_.4} parent=0 // loop_footer_branch
    %12 = sbr.rel target = $region3
  $region8: #{_lambda_.4} parent=0 // loop_exit
    _

</llo_original>
